<compile_context>
chip_gen: v7x
topology: tpu7x:2x2x1
jax: 0.10.0
libtpu: 0.0.40
codegen_flags: <defaults>
</compile_context>

<pallas_src>
import functools

import jax
import jax.numpy as jnp
from jax.experimental import pallas as pl
from jax.experimental.pallas import tpu as pltpu


_COMPILER_PARAMS = pltpu.CompilerParams(
    dimension_semantics=("parallel",),      # batch across megacore TCs (v7x)
    vmem_limit_bytes=32 * 1024 * 1024,      # headroom over v5e's 16 MiB default
)


# ----------------------------------------------------------------------------
# Pallas kernels
# ----------------------------------------------------------------------------
def _fused_sem_cat_offset_kernel(
        x_ref, upcat_ref, wm_ref, m3_ref,
        wsem_ref, gamma_ref, beta_ref, gavg_ref,
        wcat_ref, woff_ref, wom_ref, bom_ref,
        arm_ref, fu_ref, om_ref,
        *, H, W, cg, mask_lo, mask_hi):
    """SEM (stats + SA 7x7 + 1x1 + GN) + cat 1x1 + offset 1x1 + conv_offset_mask.

    All activations are [C, H*W]: channels on sublanes, H*W on lanes.
    Spatial convs use circular lane-rolls + zero-padding validity masks, so
    no im2col ever touches HBM.
    """
    # TODO(synk): whole-image HW blocks; very large resolutions need
    # halo-aware HW tiling (the lane axis) to fit v5e/v7x scoped VMEM.
    HW = H * W
    x = x_ref[0]                                               # [Cin, HW] f32

    # ---- SpatialAttention: channel mean/max + 7x7 conv on the VPU ----------
    avg = jnp.mean(x, axis=0, keepdims=True)                   # [1, HW]
    mx = jnp.max(x, axis=0, keepdims=True)                     # [1, HW]
    ridx = jax.lax.broadcasted_iota(jnp.int32, (2, HW), 0)
    stats = jnp.where(ridx == 0, avg, mx)                      # [2, HW]
    # horizontal taps: 7 lane-rolls of [2, HW], stacked along sublanes
    sh = [stats if dj == 0 else pltpu.roll(stats, (-dj) % HW, axis=1)
          for dj in range(-3, 4)]
    s14 = jnp.concatenate(sh, axis=0)                          # [14, HW]
    acc = jnp.zeros((14, HW), jnp.float32)
    for i in range(7):                                         # vertical taps
        s = (i - 3) * W
        r = s14 if s == 0 else pltpu.roll(s14, (-s) % HW, axis=1)
        # wm rows 14*i .. 14*i+13 = tap weight * zero-pad validity mask,
        # ordered (dj, {avg,max}) to match s14.
        acc = acc + r * wm_ref[14 * i:14 * i + 14, :]
    # eval-mode BN on the SA conv output is identity (folded)
    sa = jax.nn.sigmoid(jnp.sum(acc, axis=0, keepdims=True))   # [1, HW]

    # ---- SEM: x + x*sa -> 1x1 conv -> GroupNorm(32) -------------------------
    x2 = (x * (1.0 + sa)).astype(jnp.bfloat16)
    y = jnp.dot(wsem_ref[...], x2,
                preferred_element_type=jnp.float32)            # [Cout, HW]
    mean_c = jnp.mean(y, axis=1, keepdims=True)                # [Cout, 1]
    msq_c = jnp.mean(y * y, axis=1, keepdims=True)
    if cg > 1:
        # general GroupNorm: aggregate per-channel stats within groups
        mean_c = jnp.dot(gavg_ref[...], mean_c,
                         preferred_element_type=jnp.float32)
        msq_c = jnp.dot(gavg_ref[...], msq_c,
                        preferred_element_type=jnp.float32)
    var_c = jnp.maximum(msq_c - mean_c * mean_c, 0.0)          # clamp >= 0
    inv = jax.lax.rsqrt(var_c + 1e-5)
    arm = (y - mean_c) * inv * gamma_ref[...] + beta_ref[...]  # [Cout, HW]
    arm_ref[0] = arm

    # ---- cat 1x1 conv + ReLU ------------------------------------------------
    fu = jnp.maximum(
        jnp.dot(wcat_ref[...], upcat_ref[0],
                preferred_element_type=jnp.float32), 0.0)      # [Cout, HW]
    fu_ref[0] = fu

    # ---- offset 1x1 conv on cat([feat_arm, 2*feat_up]) ----------------------
    # (the 2x on feat_up is pre-folded into woff's second column block)
    xoff = jnp.concatenate([arm.astype(jnp.bfloat16),
                            fu.astype(jnp.bfloat16)], axis=0)
    off = jnp.dot(woff_ref[...], xoff,
                  preferred_element_type=jnp.float32)          # [Cout, HW]

    # ---- conv_offset_mask 3x3: 9 masked lane-rolls + one [216,9C] matmul ----
    taps = []
    for t in range(9):
        di, dj = t // 3 - 1, t % 3 - 1
        s = di * W + dj
        shifted = off if s == 0 else pltpu.roll(off, (-s) % HW, axis=1)
        taps.append((shifted * m3_ref[t:t + 1, :]).astype(jnp.bfloat16))
    cols9 = jnp.concatenate(taps, axis=0)                      # [9*Cout, HW]
    om = (jnp.dot(wom_ref[...], cols9,
                  preferred_element_type=jnp.float32) + bom_ref[...])
    # sigmoid only on the mask rows (EUP, fused here instead of an XLA pass)
    row = jax.lax.broadcasted_iota(jnp.int32, (om.shape[0], 1), 0)
    om_ref[0] = jnp.where((row >= mask_lo) & (row < mask_hi),
                          jax.nn.sigmoid(om), om)


def _dcn_out_kernel(cols_ref, arm_ref, w_ref, b_ref, o_ref):
    """Modulated-deformable-conv matmul + bias + ReLU + residual add."""
    y = jnp.dot(w_ref[...], cols_ref[0],
                preferred_element_type=jnp.float32) + b_ref[...]
    o_ref[0] = jnp.maximum(y, 0.0) + arm_ref[0]


# ----------------------------------------------------------------------------
# pallas_call wrappers
# ----------------------------------------------------------------------------
def _full(shape):
    return pl.BlockSpec(tuple(shape), lambda n: (0,) * len(shape))


def _batched(shape):
    return pl.BlockSpec((1,) + tuple(shape), lambda n: (n, 0, 0))


def fused_sem_cat_offset(x, up_cat, wm, m3, w_sem_t, gamma, beta, gavg,
                         w_cat_t, w_off_t, w_om_t, b_om, *, H, W, cg, dg):
    N, Cin, HW = x.shape
    Cout = w_sem_t.shape[0]
    Com = w_om_t.shape[0]
    kernel = functools.partial(_fused_sem_cat_offset_kernel,
                               H=H, W=W, cg=cg,
                               mask_lo=2 * dg * 9, mask_hi=3 * dg * 9)
    return pl.pallas_call(
        kernel,
        out_shape=(jax.ShapeDtypeStruct((N, Cout, HW), jnp.float32),
                   jax.ShapeDtypeStruct((N, Cout, HW), jnp.float32),
                   jax.ShapeDtypeStruct((N, Com, HW), jnp.float32)),
        grid=(N,),
        in_specs=[_batched((Cin, HW)),
                  _batched((3 * Cout, HW)),
                  _full(wm.shape), _full(m3.shape),
                  _full(w_sem_t.shape), _full(gamma.shape), _full(beta.shape),
                  _full(gavg.shape), _full(w_cat_t.shape), _full(w_off_t.shape),
                  _full(w_om_t.shape), _full(b_om.shape)],
        out_specs=(_batched((Cout, HW)), _batched((Cout, HW)),
                   _batched((Com, HW))),
        compiler_params=_COMPILER_PARAMS,
    )(x, up_cat, wm, m3, w_sem_t, gamma, beta, gavg,
      w_cat_t, w_off_t, w_om_t, b_om)


def dcn_out(cols, arm, w_dcn_t, b_dcn):
    N, KC, HW = cols.shape
    Cout = w_dcn_t.shape[0]
    return pl.pallas_call(
        _dcn_out_kernel,
        out_shape=jax.ShapeDtypeStruct((N, Cout, HW), jnp.float32),
        grid=(N,),
        in_specs=[_batched((KC, HW)), _batched((Cout, HW)),
                  _full(w_dcn_t.shape), _full(b_dcn.shape)],
        out_specs=_batched((Cout, HW)),
        compiler_params=_COMPILER_PARAMS,
    )(cols, arm, w_dcn_t, b_dcn)


# ----------------------------------------------------------------------------
# JAX glue (layout plumbing / data-dependent gather)
# ----------------------------------------------------------------------------
def _conv_valid_masks(H, W, k):
    """[k*k, H*W] {0,1} masks: is tap (ki,kj) inside the zero-padding at pixel."""
    pad = (k - 1) // 2
    r = jnp.arange(H * W, dtype=jnp.int32)
    h, w = r // W, r % W
    rows = []
    for ki in range(k):
        for kj in range(k):
            di, dj = ki - pad, kj - pad
            rows.append((h + di >= 0) & (h + di < H)
                        & (w + dj >= 0) & (w + dj < W))
    return jnp.stack(rows).astype(jnp.float32)


def dcn_sample(feat, dy, dx, mask):
    """Modulated deformable sampling (DCNv2, 3x3, pad=1, dil=1).

    feat: [N, C, H, W]; dy, dx, mask: [N, DG, 9, H, W]
    returns columns [N, 9*C, H*W], rows ordered (tap, channel).
    """
    # TODO(synk): the data-dependent bilinear gather stays in plain JAX (XLA
    # gather); an in-kernel VMEM gather would remove the [N, 9C, HW] HBM array.
    N, C, H, W = feat.shape
    DG = dy.shape[1]
    Cg = C // DG
    K = 9
    ki = jnp.repeat(jnp.arange(3, dtype=feat.dtype), 3)
    kj = jnp.tile(jnp.arange(3, dtype=feat.dtype), 3)
    hh = jnp.arange(H, dtype=feat.dtype)
    ww = jnp.arange(W, dtype=feat.dtype)
    py = (hh[None, None, None, :, None] - 1.0
          + ki[None, None, :, None, None] + dy)                # [N,DG,9,H,W]
    px = (ww[None, None, None, None, :] - 1.0
          + kj[None, None, :, None, None] + dx)
    img = feat.reshape(N, DG, Cg, H * W)                       # [N,DG,Cg,HW]

    y0 = jnp.floor(py)
    x0 = jnp.floor(px)
    wy1 = py - y0
    wy0 = 1.0 - wy1
    wx1 = px - x0
    wx0 = 1.0 - wx1

    def corner(yc, xc, wgt):
        valid = (yc >= 0) & (yc <= H - 1) & (xc >= 0) & (xc <= W - 1)
        yi = jnp.clip(yc, 0, H - 1).astype(jnp.int32)
        xi = jnp.clip(xc, 0, W - 1).astype(jnp.int32)
        idx = (yi * W + xi).reshape(N, DG, K * H * W)
        g = jnp.take_along_axis(img, idx[:, :, None, :], axis=3)
        g = g.reshape(N, DG, Cg, K, H * W)
        w = (wgt * valid.astype(feat.dtype)).reshape(N, DG, 1, K, H * W)
        return g * w

    s = (corner(y0, x0, wy0 * wx0) + corner(y0, x0 + 1.0, wy0 * wx1)
         + corner(y0 + 1.0, x0, wy1 * wx0) + corner(y0 + 1.0, x0 + 1.0, wy1 * wx1))
    s = s * mask.reshape(N, DG, 1, K, H * W)
    cols = s.transpose(0, 3, 1, 2, 4).reshape(N, K * C, H * W)
    return cols


# ----------------------------------------------------------------------------
# Parameters (deterministic synthetic init, eval-mode norms)
# ----------------------------------------------------------------------------
def init_params(key, in_nc, out_nc, dg=8, num_groups=32):
    ks = jax.random.split(key, 8)
    s = 0.05
    cg = max(out_nc // num_groups, 1)
    p = {}
    # SpatialAttention 7x7 conv (2->1, no bias); layout [49 taps, {avg,max}].
    # Eval-mode BN (identity running stats) folds to a no-op.
    p["w_sa"] = jax.random.normal(ks[0], (49, 2), jnp.float32) * s
    # SEM 1x1 conv (in_nc->out_nc, no bias), transposed / weight-stationary.
    p["w_sem_t"] = (jax.random.normal(ks[1], (out_nc, in_nc), jnp.float32)
                    * s).astype(jnp.bfloat16)
    p["gn_gamma"] = jnp.ones((out_nc, 1), jnp.float32)
    p["gn_beta"] = jnp.zeros((out_nc, 1), jnp.float32)
    # block-diagonal group-averaging matrix (identity / unused when cg == 1)
    gidx = jnp.arange(out_nc) // cg
    p["gavg"] = (gidx[:, None] == gidx[None, :]).astype(jnp.float32) / cg
    # cat 1x1 conv (3*out_nc -> out_nc, no bias, ReLU)
    p["w_cat_t"] = (jax.random.normal(ks[2], (out_nc, 3 * out_nc), jnp.float32)
                    * s).astype(jnp.bfloat16)
    # offset 1x1 conv (2*out_nc -> out_nc, no bias); columns [arm | feat_up]
    p["w_off_t"] = (jax.random.normal(ks[3], (out_nc, 2 * out_nc), jnp.float32)
                    * s).astype(jnp.bfloat16)
    # dcn_v2 conv_offset_mask 3x3: rows = [o1(dg*9) | o2(dg*9) | mask(dg*9)],
    # columns ordered (tap, cin).
    p["w_om_t"] = (jax.random.normal(ks[4], (3 * dg * 9, 9 * out_nc),
                                     jnp.float32) * s).astype(jnp.bfloat16)
    p["b_om"] = jax.random.normal(ks[5], (3 * dg * 9, 1), jnp.float32) * s
    # dcn_v2 main 3x3 conv weight (+bias); columns ordered (tap, cin)
    p["w_dcn_t"] = (jax.random.normal(ks[6], (out_nc, 9 * out_nc), jnp.float32)
                    * s).astype(jnp.bfloat16)
    p["b_dcn"] = jax.random.normal(ks[7], (out_nc, 1), jnp.float32) * s
    return p


# ----------------------------------------------------------------------------
# Forward pass
# ----------------------------------------------------------------------------
def feature_align_2(p, feat_l, feat_3, feat_4, feat_5):
    N, Cin, H, W = feat_l.shape
    Cout = p["w_sem_t"].shape[0]
    HW = H * W
    DG = 8
    cg = max(Cout // 32, 1)

    x = feat_l.reshape(N, Cin, HW)                             # [N, Cin, HW]

    # bilinear upsample (align_corners=False semantics) — JAX glue
    def up(f):
        return jax.image.resize(f, (f.shape[0], f.shape[1], H, W),
                                method="bilinear")
    up_cat = jnp.concatenate([up(feat_3), up(feat_4), up(feat_5)], axis=1)
    up_cat = up_cat.reshape(N, 3 * Cout, HW).astype(jnp.bfloat16)

    # static tap weights * zero-padding masks for the in-kernel convs;
    # wm rows ordered (di, dj, {avg,max}) -> blocks of 14 per vertical tap
    masks7 = _conv_valid_masks(H, W, 7)                        # [49, HW]
    masks3 = _conv_valid_masks(H, W, 3)                        # [9, HW]
    wm = (p["w_sa"][:, :, None] * masks7[:, None, :]).reshape(2 * 49, HW)

    # fold the `feat_up * 2` modulation into the offset-conv weight (one-time,
    # tiny op on the weight instead of an in-kernel [Cout, HW] multiply)
    off_scale = jnp.concatenate(
        [jnp.ones((Cout,), jnp.float32), jnp.full((Cout,), 2.0, jnp.float32)])
    w_off_t = (p["w_off_t"].astype(jnp.float32)
               * off_scale[None, :]).astype(jnp.bfloat16)

    # ---- fused SEM + cat + offset + conv_offset_mask (Pallas, 1 launch) ----
    feat_arm, feat_up, om = fused_sem_cat_offset(
        x, up_cat, wm, masks3,
        p["w_sem_t"], p["gn_gamma"], p["gn_beta"], p["gavg"],
        p["w_cat_t"], w_off_t, p["w_om_t"], p["b_om"],
        H=H, W=W, cg=cg, dg=DG)

    # ---- DCNv2 offset/mask unpack (exact (y,x) interleaving per group) ----
    om_map = om.reshape(N, 3 * DG * 9, H, W)
    o12 = om_map[:, :2 * DG * 9].reshape(N, DG, 9, 2, H, W)
    dy = o12[:, :, :, 0]
    dx = o12[:, :, :, 1]
    mask = om_map[:, 2 * DG * 9:].reshape(N, DG, 9, H, W)      # already sigmoid

    fu_map = feat_up.reshape(N, Cout, H, W)
    cols = dcn_sample(fu_map, dy, dx, mask).astype(jnp.bfloat16)  # [N,9C,HW]

    # ---- deformable conv matmul + bias + ReLU + residual (Pallas) ----------
    out = dcn_out(cols, feat_arm, p["w_dcn_t"], p["b_dcn"])    # [N, Cout, HW]
    return out.reshape(N, Cout, H, W)                          # NCHW, no transpose


# ----------------------------------------------------------------------------
if __name__ == "__main__":
    key = jax.random.PRNGKey(0)
    N, in_nc, out_nc = 2, 64, 32
    H = W = 16
    ks = jax.random.split(key, 5)
    feat_l = jax.random.normal(ks[0], (N, in_nc, H, W), jnp.float32)
    feat_3 = jax.random.normal(ks[1], (N, out_nc, H // 2, W // 2), jnp.float32)
    feat_4 = jax.random.normal(ks[2], (N, out_nc, H // 4, W // 4), jnp.float32)
    feat_5 = jax.random.normal(ks[3], (N, out_nc, H // 8, W // 8), jnp.float32)
    params = init_params(ks[4], in_nc, out_nc)

    fwd = jax.jit(feature_align_2)
    out = fwd(params, feat_l, feat_3, feat_4, feat_5)
    jax.block_until_ready(out)
    assert out.shape == (N, out_nc, H, W)
    print("KERNEL_OK")
</pallas_src>

<mosaic_0001>
module attributes {stable_mosaic.version = 11 : i64} {
  func.func @_fused_sem_cat_offset_kernel(%arg0: i32, %arg1: memref<1x64x256xf32, #tpu.memory_space<vmem>>, %arg2: memref<1x96x256xbf16, #tpu.memory_space<vmem>>, %arg3: memref<98x256xf32, #tpu.memory_space<vmem>>, %arg4: memref<9x256xf32, #tpu.memory_space<vmem>>, %arg5: memref<32x64xbf16, #tpu.memory_space<vmem>>, %arg6: memref<32x1xf32, #tpu.memory_space<vmem>>, %arg7: memref<32x1xf32, #tpu.memory_space<vmem>>, %arg8: memref<32x32xf32, #tpu.memory_space<vmem>>, %arg9: memref<32x96xbf16, #tpu.memory_space<vmem>>, %arg10: memref<32x64xbf16, #tpu.memory_space<vmem>>, %arg11: memref<216x288xbf16, #tpu.memory_space<vmem>>, %arg12: memref<216x1xf32, #tpu.memory_space<vmem>>, %arg13: memref<1x32x256xf32, #tpu.memory_space<vmem>>, %arg14: memref<1x32x256xf32, #tpu.memory_space<vmem>>, %arg15: memref<1x216x256xf32, #tpu.memory_space<vmem>>) attributes {dimension_semantics = [#tpu.dimension_semantics<parallel>], iteration_bounds = array<i64: 2>, scalar_prefetch = 0 : i64, scratch_operands = 0 : i64, tpu.core_type = #tpu.core_type<tc>, window_params = [{transform_indices = @transform_0, window_bounds = array<i64: 1, 64, 256>}, {transform_indices = @transform_1, window_bounds = array<i64: 1, 96, 256>}, {pipeline_mode = #tpu.pipeline_mode<synchronous>, transform_indices = @transform_2, window_bounds = array<i64: 98, 256>}, {pipeline_mode = #tpu.pipeline_mode<synchronous>, transform_indices = @transform_3, window_bounds = array<i64: 9, 256>}, {pipeline_mode = #tpu.pipeline_mode<synchronous>, transform_indices = @transform_4, window_bounds = array<i64: 32, 64>}, {pipeline_mode = #tpu.pipeline_mode<synchronous>, transform_indices = @transform_5, window_bounds = array<i64: 32, 1>}, {pipeline_mode = #tpu.pipeline_mode<synchronous>, transform_indices = @transform_6, window_bounds = array<i64: 32, 1>}, {pipeline_mode = #tpu.pipeline_mode<synchronous>, transform_indices = @transform_7, window_bounds = array<i64: 32, 32>}, {pipeline_mode = #tpu.pipeline_mode<synchronous>, transform_indices = @transform_8, window_bounds = array<i64: 32, 96>}, {pipeline_mode = #tpu.pipeline_mode<synchronous>, transform_indices = @transform_9, window_bounds = array<i64: 32, 64>}, {pipeline_mode = #tpu.pipeline_mode<synchronous>, transform_indices = @transform_10, window_bounds = array<i64: 216, 288>}, {pipeline_mode = #tpu.pipeline_mode<synchronous>, transform_indices = @transform_11, window_bounds = array<i64: 216, 1>}, {transform_indices = @transform_12, window_bounds = array<i64: 1, 32, 256>}, {transform_indices = @transform_13, window_bounds = array<i64: 1, 32, 256>}, {transform_indices = @transform_14, window_bounds = array<i64: 1, 216, 256>}]} {
    %c0 = arith.constant 0 : index
    %c0_0 = arith.constant 0 : index
    %c0_1 = arith.constant 0 : index
    %0 = vector.load %arg1[%c0, %c0_0, %c0_1] : memref<1x64x256xf32, #tpu.memory_space<vmem>>, vector<1x64x256xf32>
    %1 = vector.shape_cast %0 : vector<1x64x256xf32> to vector<64x256xf32>
    %cst = arith.constant dense<0.000000e+00> : vector<256xf32>
    %2 = vector.multi_reduction <add>, %1, %cst [0] : vector<64x256xf32> to vector<256xf32>
    %3 = vector.shape_cast %2 : vector<256xf32> to vector<1x256xf32>
    %cst_2 = arith.constant 6.400000e+01 : f32
    %4 = vector.broadcast %cst_2 : f32 to vector<1x256xf32>
    %5 = arith.divf %3, %4 : vector<1x256xf32>
    %cst_3 = arith.constant dense<0xFF800000> : vector<256xf32>
    %6 = vector.multi_reduction <maximumf>, %1, %cst_3 [0] : vector<64x256xf32> to vector<256xf32>
    %7 = vector.shape_cast %6 : vector<256xf32> to vector<1x256xf32>
    %8 = tpu.iota {dimensions = array<i32: 0>} : vector<2x256xi32>
    %c0_i32 = arith.constant 0 : i32
    %9 = vector.broadcast %c0_i32 : i32 to vector<2x256xi32>
    %10 = arith.cmpi eq, %8, %9 : vector<2x256xi32>
    %11 = vector.shape_cast %5 : vector<1x256xf32> to vector<1x256xf32>
    %12 = vector.broadcast %11 : vector<1x256xf32> to vector<2x256xf32>
    %13 = vector.shape_cast %7 : vector<1x256xf32> to vector<1x256xf32>
    %14 = vector.broadcast %13 : vector<1x256xf32> to vector<2x256xf32>
    %15 = arith.select %10, %12, %14 : vector<2x256xi1>, vector<2x256xf32>
    %c3_i32 = arith.constant 3 : i32
    %16 = tpu.dynamic_rotate %15 by %c3_i32 dim 1 : vector<2x256xf32>, i32 -> vector<2x256xf32>
    %c2_i32 = arith.constant 2 : i32
    %17 = tpu.dynamic_rotate %15 by %c2_i32 dim 1 : vector<2x256xf32>, i32 -> vector<2x256xf32>
    %c1_i32 = arith.constant 1 : i32
    %18 = tpu.dynamic_rotate %15 by %c1_i32 dim 1 : vector<2x256xf32>, i32 -> vector<2x256xf32>
    %c255_i32 = arith.constant 255 : i32
    %19 = tpu.dynamic_rotate %15 by %c255_i32 dim 1 : vector<2x256xf32>, i32 -> vector<2x256xf32>
    %c254_i32 = arith.constant 254 : i32
    %20 = tpu.dynamic_rotate %15 by %c254_i32 dim 1 : vector<2x256xf32>, i32 -> vector<2x256xf32>
    %c253_i32 = arith.constant 253 : i32
    %21 = tpu.dynamic_rotate %15 by %c253_i32 dim 1 : vector<2x256xf32>, i32 -> vector<2x256xf32>
    %22 = tpu.concatenate %16, %17, %18, %15, %19, %20, %21 in 0 : vector<2x256xf32>, vector<2x256xf32>, vector<2x256xf32>, vector<2x256xf32>, vector<2x256xf32>, vector<2x256xf32>, vector<2x256xf32> -> vector<14x256xf32>
    %cst_4 = arith.constant 0.000000e+00 : f32
    %23 = vector.broadcast %cst_4 : f32 to vector<14x256xf32>
    %c48_i32 = arith.constant 48 : i32
    %24 = tpu.dynamic_rotate %22 by %c48_i32 dim 1 : vector<14x256xf32>, i32 -> vector<14x256xf32>
    %c0_5 = arith.constant 0 : index
    %c0_6 = arith.constant 0 : index
    %25 = vector.load %arg3[%c0_5, %c0_6] : memref<98x256xf32, #tpu.memory_space<vmem>>, vector<14x256xf32>
    %26 = arith.mulf %24, %25 : vector<14x256xf32>
    %27 = arith.addf %23, %26 : vector<14x256xf32>
    %c32_i32 = arith.constant 32 : i32
    %28 = tpu.dynamic_rotate %22 by %c32_i32 dim 1 : vector<14x256xf32>, i32 -> vector<14x256xf32>
    %c14 = arith.constant 14 : index
    %c0_7 = arith.constant 0 : index
    %29 = vector.load %arg3[%c14, %c0_7] : memref<98x256xf32, #tpu.memory_space<vmem>>, vector<14x256xf32>
    %30 = arith.mulf %28, %29 : vector<14x256xf32>
    %31 = arith.addf %27, %30 : vector<14x256xf32>
    %c16_i32 = arith.constant 16 : i32
    %32 = tpu.dynamic_rotate %22 by %c16_i32 dim 1 : vector<14x256xf32>, i32 -> vector<14x256xf32>
    %c28 = arith.constant 28 : index
    %c0_8 = arith.constant 0 : index
    %33 = vector.load %arg3[%c28, %c0_8] : memref<98x256xf32, #tpu.memory_space<vmem>>, vector<14x256xf32>
    %34 = arith.mulf %32, %33 : vector<14x256xf32>
    %35 = arith.addf %31, %34 : vector<14x256xf32>
    %c42 = arith.constant 42 : index
    %c0_9 = arith.constant 0 : index
    %36 = vector.load %arg3[%c42, %c0_9] : memref<98x256xf32, #tpu.memory_space<vmem>>, vector<14x256xf32>
    %37 = arith.mulf %22, %36 : vector<14x256xf32>
    %38 = arith.addf %35, %37 : vector<14x256xf32>
    %c240_i32 = arith.constant 240 : i32
    %39 = tpu.dynamic_rotate %22 by %c240_i32 dim 1 : vector<14x256xf32>, i32 -> vector<14x256xf32>
    %c56 = arith.constant 56 : index
    %c0_10 = arith.constant 0 : index
    %40 = vector.load %arg3[%c56, %c0_10] : memref<98x256xf32, #tpu.memory_space<vmem>>, vector<14x256xf32>
    %41 = arith.mulf %39, %40 : vector<14x256xf32>
    %42 = arith.addf %38, %41 : vector<14x256xf32>
    %c224_i32 = arith.constant 224 : i32
    %43 = tpu.dynamic_rotate %22 by %c224_i32 dim 1 : vector<14x256xf32>, i32 -> vector<14x256xf32>
    %c70 = arith.constant 70 : index
    %c0_11 = arith.constant 0 : index
    %44 = vector.load %arg3[%c70, %c0_11] : memref<98x256xf32, #tpu.memory_space<vmem>>, vector<14x256xf32>
    %45 = arith.mulf %43, %44 : vector<14x256xf32>
    %46 = arith.addf %42, %45 : vector<14x256xf32>
    %c208_i32 = arith.constant 208 : i32
    %47 = tpu.dynamic_rotate %22 by %c208_i32 dim 1 : vector<14x256xf32>, i32 -> vector<14x256xf32>
    %c84 = arith.constant 84 : index
    %c0_12 = arith.constant 0 : index
    %48 = vector.load %arg3[%c84, %c0_12] : memref<98x256xf32, #tpu.memory_space<vmem>>, vector<14x256xf32>
    %49 = arith.mulf %47, %48 : vector<14x256xf32>
    %50 = arith.addf %46, %49 : vector<14x256xf32>
    %cst_13 = arith.constant dense<0.000000e+00> : vector<256xf32>
    %51 = vector.multi_reduction <add>, %50, %cst_13 [0] : vector<14x256xf32> to vector<256xf32>
    %52 = vector.shape_cast %51 : vector<256xf32> to vector<1x256xf32>
    %53 = arith.negf %52 : vector<1x256xf32>
    %54 = math.exp %53 : vector<1x256xf32>
    %cst_14 = arith.constant 1.000000e+00 : f32
    %55 = vector.broadcast %cst_14 : f32 to vector<1x256xf32>
    %56 = arith.addf %55, %54 : vector<1x256xf32>
    %57 = arith.divf %55, %56 : vector<1x256xf32>
    %cst_15 = arith.constant 1.000000e+00 : f32
    %58 = vector.broadcast %cst_15 : f32 to vector<1x256xf32>
    %59 = arith.addf %58, %57 : vector<1x256xf32>
    %60 = vector.broadcast %59 : vector<1x256xf32> to vector<64x256xf32>
    %61 = arith.mulf %1, %60 : vector<64x256xf32>
    %62 = arith.truncf %61 : vector<64x256xf32> to vector<64x256xbf16>
    %c0_16 = arith.constant 0 : index
    %c0_17 = arith.constant 0 : index
    %63 = vector.load %arg5[%c0_16, %c0_17] : memref<32x64xbf16, #tpu.memory_space<vmem>>, vector<32x64xbf16>
    %cst_18 = arith.constant dense<0.000000e+00> : vector<32x256xf32>
    %64 = tpu.matmul %63, %62, %cst_18 {dimension_numbers = #tpu.dot_dimension_numbers<[1], [0], [0], [1], [0, 0, 1, 1], [], []>} : vector<32x64xbf16>, vector<64x256xbf16>, vector<32x256xf32> -> vector<32x256xf32>
    %cst_19 = arith.constant dense<0.000000e+00> : vector<32xf32>
    %65 = vector.multi_reduction <add>, %64, %cst_19 [1] : vector<32x256xf32> to vector<32xf32>
    %66 = vector.shape_cast %65 : vector<32xf32> to vector<32x1xf32>
    %cst_20 = arith.constant 2.560000e+02 : f32
    %67 = vector.broadcast %cst_20 : f32 to vector<32x1xf32>
    %68 = arith.divf %66, %67 : vector<32x1xf32>
    %69 = arith.mulf %64, %64 : vector<32x256xf32>
    %cst_21 = arith.constant dense<0.000000e+00> : vector<32xf32>
    %70 = vector.multi_reduction <add>, %69, %cst_21 [1] : vector<32x256xf32> to vector<32xf32>
    %71 = vector.shape_cast %70 : vector<32xf32> to vector<32x1xf32>
    %cst_22 = arith.constant 2.560000e+02 : f32
    %72 = vector.broadcast %cst_22 : f32 to vector<32x1xf32>
    %73 = arith.divf %71, %72 : vector<32x1xf32>
    %74 = arith.mulf %68, %68 : vector<32x1xf32>
    %75 = arith.subf %73, %74 : vector<32x1xf32>
    %cst_23 = arith.constant 0.000000e+00 : f32
    %76 = vector.broadcast %cst_23 : f32 to vector<32x1xf32>
    %77 = arith.maximumf %75, %76 : vector<32x1xf32>
    %cst_24 = arith.constant 9.99999974E-6 : f32
    %78 = vector.broadcast %cst_24 : f32 to vector<32x1xf32>
    %79 = arith.addf %77, %78 : vector<32x1xf32>
    %80 = math.rsqrt %79 : vector<32x1xf32>
    %81 = vector.broadcast %68 : vector<32x1xf32> to vector<32x256xf32>
    %82 = arith.subf %64, %81 : vector<32x256xf32>
    %83 = vector.broadcast %80 : vector<32x1xf32> to vector<32x256xf32>
    %84 = arith.mulf %82, %83 : vector<32x256xf32>
    %c0_25 = arith.constant 0 : index
    %c0_26 = arith.constant 0 : index
    %85 = vector.load %arg6[%c0_25, %c0_26] : memref<32x1xf32, #tpu.memory_space<vmem>>, vector<32x1xf32>
    %86 = vector.broadcast %85 : vector<32x1xf32> to vector<32x256xf32>
    %87 = arith.mulf %84, %86 : vector<32x256xf32>
    %c0_27 = arith.constant 0 : index
    %c0_28 = arith.constant 0 : index
    %88 = vector.load %arg7[%c0_27, %c0_28] : memref<32x1xf32, #tpu.memory_space<vmem>>, vector<32x1xf32>
    %89 = vector.broadcast %88 : vector<32x1xf32> to vector<32x256xf32>
    %90 = arith.addf %87, %89 : vector<32x256xf32>
    %c0_29 = arith.constant 0 : index
    %c0_30 = arith.constant 0 : index
    %c0_31 = arith.constant 0 : index
    %91 = vector.load %arg13[%c0_29, %c0_30, %c0_31] : memref<1x32x256xf32, #tpu.memory_space<vmem>>, vector<1x32x256xf32>
    %92 = vector.shape_cast %91 : vector<1x32x256xf32> to vector<32x256xf32>
    %93 = vector.shape_cast %90 : vector<32x256xf32> to vector<1x32x256xf32>
    tpu.vector_store %arg13[%c0_29, %c0_30, %c0_31], %93 {strides = array<i32>} : memref<1x32x256xf32, #tpu.memory_space<vmem>>, vector<1x32x256xf32>,
    %c0_32 = arith.constant 0 : index
    %c0_33 = arith.constant 0 : index
    %94 = vector.load %arg9[%c0_32, %c0_33] : memref<32x96xbf16, #tpu.memory_space<vmem>>, vector<32x96xbf16>
    %c0_34 = arith.constant 0 : index
    %c0_35 = arith.constant 0 : index
    %c0_36 = arith.constant 0 : index
    %95 = vector.load %arg2[%c0_34, %c0_35, %c0_36] : memref<1x96x256xbf16, #tpu.memory_space<vmem>>, vector<1x96x256xbf16>
    %96 = vector.shape_cast %95 : vector<1x96x256xbf16> to vector<96x256xbf16>
    %cst_37 = arith.constant dense<0.000000e+00> : vector<32x256xf32>
    %97 = tpu.matmul %94, %96, %cst_37 {dimension_numbers = #tpu.dot_dimension_numbers<[1], [0], [0], [1], [0, 0, 1, 1], [], []>} : vector<32x96xbf16>, vector<96x256xbf16>, vector<32x256xf32> -> vector<32x256xf32>
    %cst_38 = arith.constant 0.000000e+00 : f32
    %98 = vector.broadcast %cst_38 : f32 to vector<32x256xf32>
    %99 = arith.maximumf %97, %98 : vector<32x256xf32>
    %c0_39 = arith.constant 0 : index
    %c0_40 = arith.constant 0 : index
    %c0_41 = arith.constant 0 : index
    %100 = vector.load %arg14[%c0_39, %c0_40, %c0_41] : memref<1x32x256xf32, #tpu.memory_space<vmem>>, vector<1x32x256xf32>
    %101 = vector.shape_cast %100 : vector<1x32x256xf32> to vector<32x256xf32>
    %102 = vector.shape_cast %99 : vector<32x256xf32> to vector<1x32x256xf32>
    tpu.vector_store %arg14[%c0_39, %c0_40, %c0_41], %102 {strides = array<i32>} : memref<1x32x256xf32, #tpu.memory_space<vmem>>, vector<1x32x256xf32>,
    %103 = arith.truncf %90 : vector<32x256xf32> to vector<32x256xbf16>
    %104 = arith.truncf %99 : vector<32x256xf32> to vector<32x256xbf16>
    %105 = tpu.concatenate %103, %104 in 0 : vector<32x256xbf16>, vector<32x256xbf16> -> vector<64x256xbf16>
    %c0_42 = arith.constant 0 : index
    %c0_43 = arith.constant 0 : index
    %106 = vector.load %arg10[%c0_42, %c0_43] : memref<32x64xbf16, #tpu.memory_space<vmem>>, vector<32x64xbf16>
    %cst_44 = arith.constant dense<0.000000e+00> : vector<32x256xf32>
    %107 = tpu.matmul %106, %105, %cst_44 {dimension_numbers = #tpu.dot_dimension_numbers<[1], [0], [0], [1], [0, 0, 1, 1], [], []>} : vector<32x64xbf16>, vector<64x256xbf16>, vector<32x256xf32> -> vector<32x256xf32>
    %c17_i32 = arith.constant 17 : i32
    %108 = tpu.dynamic_rotate %107 by %c17_i32 dim 1 : vector<32x256xf32>, i32 -> vector<32x256xf32>
    %c0_45 = arith.constant 0 : index
    %c0_46 = arith.constant 0 : index
    %109 = vector.load %arg4[%c0_45, %c0_46] : memref<9x256xf32, #tpu.memory_space<vmem>>, vector<1x256xf32>
    %110 = vector.broadcast %109 : vector<1x256xf32> to vector<32x256xf32>
    %111 = arith.mulf %108, %110 : vector<32x256xf32>
    %112 = arith.truncf %111 : vector<32x256xf32> to vector<32x256xbf16>
    %c16_i32_47 = arith.constant 16 : i32
    %113 = tpu.dynamic_rotate %107 by %c16_i32_47 dim 1 : vector<32x256xf32>, i32 -> vector<32x256xf32>
    %c1 = arith.constant 1 : index
    %c0_48 = arith.constant 0 : index
    %114 = vector.load %arg4[%c1, %c0_48] : memref<9x256xf32, #tpu.memory_space<vmem>>, vector<1x256xf32>
    %115 = vector.broadcast %114 : vector<1x256xf32> to vector<32x256xf32>
    %116 = arith.mulf %113, %115 : vector<32x256xf32>
    %117 = arith.truncf %116 : vector<32x256xf32> to vector<32x256xbf16>
    %c15_i32 = arith.constant 15 : i32
    %118 = tpu.dynamic_rotate %107 by %c15_i32 dim 1 : vector<32x256xf32>, i32 -> vector<32x256xf32>
    %c2 = arith.constant 2 : index
    %c0_49 = arith.constant 0 : index
    %119 = vector.load %arg4[%c2, %c0_49] : memref<9x256xf32, #tpu.memory_space<vmem>>, vector<1x256xf32>
    %120 = vector.broadcast %119 : vector<1x256xf32> to vector<32x256xf32>
    %121 = arith.mulf %118, %120 : vector<32x256xf32>
    %122 = arith.truncf %121 : vector<32x256xf32> to vector<32x256xbf16>
    %c1_i32_50 = arith.constant 1 : i32
    %123 = tpu.dynamic_rotate %107 by %c1_i32_50 dim 1 : vector<32x256xf32>, i32 -> vector<32x256xf32>
    %c3 = arith.constant 3 : index
    %c0_51 = arith.constant 0 : index
    %124 = vector.load %arg4[%c3, %c0_51] : memref<9x256xf32, #tpu.memory_space<vmem>>, vector<1x256xf32>
    %125 = vector.broadcast %124 : vector<1x256xf32> to vector<32x256xf32>
    %126 = arith.mulf %123, %125 : vector<32x256xf32>
    %127 = arith.truncf %126 : vector<32x256xf32> to vector<32x256xbf16>
    %c4 = arith.constant 4 : index
    %c0_52 = arith.constant 0 : index
    %128 = vector.load %arg4[%c4, %c0_52] : memref<9x256xf32, #tpu.memory_space<vmem>>, vector<1x256xf32>
    %129 = vector.broadcast %128 : vector<1x256xf32> to vector<32x256xf32>
    %130 = arith.mulf %107, %129 : vector<32x256xf32>
    %131 = arith.truncf %130 : vector<32x256xf32> to vector<32x256xbf16>
    %c255_i32_53 = arith.constant 255 : i32
    %132 = tpu.dynamic_rotate %107 by %c255_i32_53 dim 1 : vector<32x256xf32>, i32 -> vector<32x256xf32>
    %c5 = arith.constant 5 : index
    %c0_54 = arith.constant 0 : index
    %133 = vector.load %arg4[%c5, %c0_54] : memref<9x256xf32, #tpu.memory_space<vmem>>, vector<1x256xf32>
    %134 = vector.broadcast %133 : vector<1x256xf32> to vector<32x256xf32>
    %135 = arith.mulf %132, %134 : vector<32x256xf32>
    %136 = arith.truncf %135 : vector<32x256xf32> to vector<32x256xbf16>
    %c241_i32 = arith.constant 241 : i32
    %137 = tpu.dynamic_rotate %107 by %c241_i32 dim 1 : vector<32x256xf32>, i32 -> vector<32x256xf32>
    %c6 = arith.constant 6 : index
    %c0_55 = arith.constant 0 : index
    %138 = vector.load %arg4[%c6, %c0_55] : memref<9x256xf32, #tpu.memory_space<vmem>>, vector<1x256xf32>
    %139 = vector.broadcast %138 : vector<1x256xf32> to vector<32x256xf32>
    %140 = arith.mulf %137, %139 : vector<32x256xf32>
    %141 = arith.truncf %140 : vector<32x256xf32> to vector<32x256xbf16>
    %c240_i32_56 = arith.constant 240 : i32
    %142 = tpu.dynamic_rotate %107 by %c240_i32_56 dim 1 : vector<32x256xf32>, i32 -> vector<32x256xf32>
    %c7 = arith.constant 7 : index
    %c0_57 = arith.constant 0 : index
    %143 = vector.load %arg4[%c7, %c0_57] : memref<9x256xf32, #tpu.memory_space<vmem>>, vector<1x256xf32>
    %144 = vector.broadcast %143 : vector<1x256xf32> to vector<32x256xf32>
    %145 = arith.mulf %142, %144 : vector<32x256xf32>
    %146 = arith.truncf %145 : vector<32x256xf32> to vector<32x256xbf16>
    %c239_i32 = arith.constant 239 : i32
    %147 = tpu.dynamic_rotate %107 by %c239_i32 dim 1 : vector<32x256xf32>, i32 -> vector<32x256xf32>
    %c8 = arith.constant 8 : index
    %c0_58 = arith.constant 0 : index
    %148 = vector.load %arg4[%c8, %c0_58] : memref<9x256xf32, #tpu.memory_space<vmem>>, vector<1x256xf32>
    %149 = vector.broadcast %148 : vector<1x256xf32> to vector<32x256xf32>
    %150 = arith.mulf %147, %149 : vector<32x256xf32>
    %151 = arith.truncf %150 : vector<32x256xf32> to vector<32x256xbf16>
    %152 = tpu.concatenate %112, %117, %122, %127, %131, %136, %141, %146, %151 in 0 : vector<32x256xbf16>, vector<32x256xbf16>, vector<32x256xbf16>, vector<32x256xbf16>, vector<32x256xbf16>, vector<32x256xbf16>, vector<32x256xbf16>, vector<32x256xbf16>, vector<32x256xbf16> -> vector<288x256xbf16>
    %c0_59 = arith.constant 0 : index
    %c0_60 = arith.constant 0 : index
    %153 = vector.load %arg11[%c0_59, %c0_60] : memref<216x288xbf16, #tpu.memory_space<vmem>>, vector<216x288xbf16>
    %cst_61 = arith.constant dense<0.000000e+00> : vector<216x256xf32>
    %154 = tpu.matmul %153, %152, %cst_61 {dimension_numbers = #tpu.dot_dimension_numbers<[1], [0], [0], [1], [0, 0, 1, 1], [], []>} : vector<216x288xbf16>, vector<288x256xbf16>, vector<216x256xf32> -> vector<216x256xf32>
    %c0_62 = arith.constant 0 : index
    %c0_63 = arith.constant 0 : index
    %155 = vector.load %arg12[%c0_62, %c0_63] : memref<216x1xf32, #tpu.memory_space<vmem>>, vector<216x1xf32>
    %156 = vector.broadcast %155 : vector<216x1xf32> to vector<216x256xf32>
    %157 = arith.addf %154, %156 : vector<216x256xf32>
    %158 = tpu.iota {dimensions = array<i32: 0>} : vector<216x1xi32>
    %c144_i32 = arith.constant 144 : i32
    %159 = vector.broadcast %c144_i32 : i32 to vector<216x1xi32>
    %160 = arith.cmpi sge, %158, %159 : vector<216x1xi32>
    %c216_i32 = arith.constant 216 : i32
    %161 = vector.broadcast %c216_i32 : i32 to vector<216x1xi32>
    %162 = arith.cmpi slt, %158, %161 : vector<216x1xi32>
    %163 = arith.andi %160, %162 : vector<216x1xi1>
    %164 = arith.negf %157 : vector<216x256xf32>
    %165 = math.exp %164 : vector<216x256xf32>
    %cst_64 = arith.constant 1.000000e+00 : f32
    %166 = vector.broadcast %cst_64 : f32 to vector<216x256xf32>
    %167 = arith.addf %166, %165 : vector<216x256xf32>
    %168 = arith.divf %166, %167 : vector<216x256xf32>
    %169 = vector.shape_cast %163 : vector<216x1xi1> to vector<216x1xi1>
    %170 = vector.broadcast %169 : vector<216x1xi1> to vector<216x256xi1>
    %171 = arith.select %170, %168, %157 : vector<216x256xi1>, vector<216x256xf32>
    %c0_65 = arith.constant 0 : index
    %c0_66 = arith.constant 0 : index
    %c0_67 = arith.constant 0 : index
    %172 = vector.load %arg15[%c0_65, %c0_66, %c0_67] : memref<1x216x256xf32, #tpu.memory_space<vmem>>, vector<1x216x256xf32>
    %173 = vector.shape_cast %172 : vector<1x216x256xf32> to vector<216x256xf32>
    %174 = vector.shape_cast %171 : vector<216x256xf32> to vector<1x216x256xf32>
    tpu.vector_store %arg15[%c0_65, %c0_66, %c0_67], %174 {strides = array<i32>} : memref<1x216x256xf32, #tpu.memory_space<vmem>>, vector<1x216x256xf32>,
    return
  }
  func.func @transform_0(%arg0: i32) -> (i32, i32, i32) {
    %c0_i32 = arith.constant 0 : i32
    %c0_i32_0 = arith.constant 0 : i32
    %c0_i32_1 = arith.constant 0 : i32
    return %arg0, %c0_i32, %c0_i32_0 : i32, i32, i32
  }
  func.func @transform_1(%arg0: i32) -> (i32, i32, i32) {
    %c0_i32 = arith.constant 0 : i32
    %c0_i32_0 = arith.constant 0 : i32
    %c0_i32_1 = arith.constant 0 : i32
    return %arg0, %c0_i32, %c0_i32_0 : i32, i32, i32
  }
  func.func @transform_2(%arg0: i32) -> (i32, i32) {
    %c0_i32 = arith.constant 0 : i32
    %c0_i32_0 = arith.constant 0 : i32
    %c0_i32_1 = arith.constant 0 : i32
    return %c0_i32, %c0_i32_0 : i32, i32
  }
  func.func @transform_3(%arg0: i32) -> (i32, i32) {
    %c0_i32 = arith.constant 0 : i32
    %c0_i32_0 = arith.constant 0 : i32
    %c0_i32_1 = arith.constant 0 : i32
    return %c0_i32, %c0_i32_0 : i32, i32
  }
  func.func @transform_4(%arg0: i32) -> (i32, i32) {
    %c0_i32 = arith.constant 0 : i32
    %c0_i32_0 = arith.constant 0 : i32
    %c0_i32_1 = arith.constant 0 : i32
    return %c0_i32, %c0_i32_0 : i32, i32
  }
  func.func @transform_5(%arg0: i32) -> (i32, i32) {
    %c0_i32 = arith.constant 0 : i32
    %c0_i32_0 = arith.constant 0 : i32
    %c0_i32_1 = arith.constant 0 : i32
    return %c0_i32, %c0_i32_0 : i32, i32
  }
  func.func @transform_6(%arg0: i32) -> (i32, i32) {
    %c0_i32 = arith.constant 0 : i32
    %c0_i32_0 = arith.constant 0 : i32
    %c0_i32_1 = arith.constant 0 : i32
    return %c0_i32, %c0_i32_0 : i32, i32
  }
  func.func @transform_7(%arg0: i32) -> (i32, i32) {
    %c0_i32 = arith.constant 0 : i32
    %c0_i32_0 = arith.constant 0 : i32
    %c0_i32_1 = arith.constant 0 : i32
    return %c0_i32, %c0_i32_0 : i32, i32
  }
  func.func @transform_8(%arg0: i32) -> (i32, i32) {
    %c0_i32 = arith.constant 0 : i32
    %c0_i32_0 = arith.constant 0 : i32
    %c0_i32_1 = arith.constant 0 : i32
    return %c0_i32, %c0_i32_0 : i32, i32
  }
  func.func @transform_9(%arg0: i32) -> (i32, i32) {
    %c0_i32 = arith.constant 0 : i32
    %c0_i32_0 = arith.constant 0 : i32
    %c0_i32_1 = arith.constant 0 : i32
    return %c0_i32, %c0_i32_0 : i32, i32
  }
  func.func @transform_10(%arg0: i32) -> (i32, i32) {
    %c0_i32 = arith.constant 0 : i32
    %c0_i32_0 = arith.constant 0 : i32
    %c0_i32_1 = arith.constant 0 : i32
    return %c0_i32, %c0_i32_0 : i32, i32
  }
  func.func @transform_11(%arg0: i32) -> (i32, i32) {
    %c0_i32 = arith.constant 0 : i32
    %c0_i32_0 = arith.constant 0 : i32
    %c0_i32_1 = arith.constant 0 : i32
    return %c0_i32, %c0_i32_0 : i32, i32
  }
  func.func @transform_12(%arg0: i32) -> (i32, i32, i32) {
    %c0_i32 = arith.constant 0 : i32
    %c0_i32_0 = arith.constant 0 : i32
    %c0_i32_1 = arith.constant 0 : i32
    return %arg0, %c0_i32, %c0_i32_0 : i32, i32, i32
  }
  func.func @transform_13(%arg0: i32) -> (i32, i32, i32) {
    %c0_i32 = arith.constant 0 : i32
    %c0_i32_0 = arith.constant 0 : i32
    %c0_i32_1 = arith.constant 0 : i32
    return %arg0, %c0_i32, %c0_i32_0 : i32, i32, i32
  }
  func.func @transform_14(%arg0: i32) -> (i32, i32, i32) {
    %c0_i32 = arith.constant 0 : i32
    %c0_i32_0 = arith.constant 0 : i32
    %c0_i32_1 = arith.constant 0 : i32
    return %arg0, %c0_i32, %c0_i32_0 : i32, i32, i32
  }
}

module attributes {stable_mosaic.version = 11 : i64} {
  func.func @_dcn_out_kernel(%arg0: i32, %arg1: memref<1x288x256xbf16, #tpu.memory_space<vmem>>, %arg2: memref<1x32x256xf32, #tpu.memory_space<vmem>>, %arg3: memref<32x288xbf16, #tpu.memory_space<vmem>>, %arg4: memref<32x1xf32, #tpu.memory_space<vmem>>, %arg5: memref<1x32x256xf32, #tpu.memory_space<vmem>>) attributes {dimension_semantics = [#tpu.dimension_semantics<parallel>], iteration_bounds = array<i64: 2>, scalar_prefetch = 0 : i64, scratch_operands = 0 : i64, tpu.core_type = #tpu.core_type<tc>, window_params = [{transform_indices = @transform_0, window_bounds = array<i64: 1, 288, 256>}, {transform_indices = @transform_1, window_bounds = array<i64: 1, 32, 256>}, {pipeline_mode = #tpu.pipeline_mode<synchronous>, transform_indices = @transform_2, window_bounds = array<i64: 32, 288>}, {pipeline_mode = #tpu.pipeline_mode<synchronous>, transform_indices = @transform_3, window_bounds = array<i64: 32, 1>}, {transform_indices = @transform_4, window_bounds = array<i64: 1, 32, 256>}]} {
    %c0 = arith.constant 0 : index
    %c0_0 = arith.constant 0 : index
    %0 = vector.load %arg3[%c0, %c0_0] : memref<32x288xbf16, #tpu.memory_space<vmem>>, vector<32x288xbf16>
    %c0_1 = arith.constant 0 : index
    %c0_2 = arith.constant 0 : index
    %c0_3 = arith.constant 0 : index
    %1 = vector.load %arg1[%c0_1, %c0_2, %c0_3] : memref<1x288x256xbf16, #tpu.memory_space<vmem>>, vector<1x288x256xbf16>
    %2 = vector.shape_cast %1 : vector<1x288x256xbf16> to vector<288x256xbf16>
    %cst = arith.constant dense<0.000000e+00> : vector<32x256xf32>
    %3 = tpu.matmul %0, %2, %cst {dimension_numbers = #tpu.dot_dimension_numbers<[1], [0], [0], [1], [0, 0, 1, 1], [], []>} : vector<32x288xbf16>, vector<288x256xbf16>, vector<32x256xf32> -> vector<32x256xf32>
    %c0_4 = arith.constant 0 : index
    %c0_5 = arith.constant 0 : index
    %4 = vector.load %arg4[%c0_4, %c0_5] : memref<32x1xf32, #tpu.memory_space<vmem>>, vector<32x1xf32>
    %5 = vector.broadcast %4 : vector<32x1xf32> to vector<32x256xf32>
    %6 = arith.addf %3, %5 : vector<32x256xf32>
    %cst_6 = arith.constant 0.000000e+00 : f32
    %7 = vector.broadcast %cst_6 : f32 to vector<32x256xf32>
    %8 = arith.maximumf %6, %7 : vector<32x256xf32>
    %c0_7 = arith.constant 0 : index
    %c0_8 = arith.constant 0 : index
    %c0_9 = arith.constant 0 : index
    %9 = vector.load %arg2[%c0_7, %c0_8, %c0_9] : memref<1x32x256xf32, #tpu.memory_space<vmem>>, vector<1x32x256xf32>
    %10 = vector.shape_cast %9 : vector<1x32x256xf32> to vector<32x256xf32>
    %11 = arith.addf %8, %10 : vector<32x256xf32>
    %c0_10 = arith.constant 0 : index
    %c0_11 = arith.constant 0 : index
    %c0_12 = arith.constant 0 : index
    %12 = vector.load %arg5[%c0_10, %c0_11, %c0_12] : memref<1x32x256xf32, #tpu.memory_space<vmem>>, vector<1x32x256xf32>
    %13 = vector.shape_cast %12 : vector<1x32x256xf32> to vector<32x256xf32>
    %14 = vector.shape_cast %11 : vector<32x256xf32> to vector<1x32x256xf32>
    tpu.vector_store %arg5[%c0_10, %c0_11, %c0_12], %14 {strides = array<i32>} : memref<1x32x256xf32, #tpu.memory_space<vmem>>, vector<1x32x256xf32>,
    return
  }
  func.func @transform_0(%arg0: i32) -> (i32, i32, i32) {
    %c0_i32 = arith.constant 0 : i32
    %c0_i32_0 = arith.constant 0 : i32
    %c0_i32_1 = arith.constant 0 : i32
    return %arg0, %c0_i32, %c0_i32_0 : i32, i32, i32
  }
  func.func @transform_1(%arg0: i32) -> (i32, i32, i32) {
    %c0_i32 = arith.constant 0 : i32
    %c0_i32_0 = arith.constant 0 : i32
    %c0_i32_1 = arith.constant 0 : i32
    return %arg0, %c0_i32, %c0_i32_0 : i32, i32, i32
  }
  func.func @transform_2(%arg0: i32) -> (i32, i32) {
    %c0_i32 = arith.constant 0 : i32
    %c0_i32_0 = arith.constant 0 : i32
    %c0_i32_1 = arith.constant 0 : i32
    return %c0_i32, %c0_i32_0 : i32, i32
  }
  func.func @transform_3(%arg0: i32) -> (i32, i32) {
    %c0_i32 = arith.constant 0 : i32
    %c0_i32_0 = arith.constant 0 : i32
    %c0_i32_1 = arith.constant 0 : i32
    return %c0_i32, %c0_i32_0 : i32, i32
  }
  func.func @transform_4(%arg0: i32) -> (i32, i32, i32) {
    %c0_i32 = arith.constant 0 : i32
    %c0_i32_0 = arith.constant 0 : i32
    %c0_i32_1 = arith.constant 0 : i32
    return %arg0, %c0_i32, %c0_i32_0 : i32, i32, i32
  }
}

</mosaic_0001>

<llo_original>
// kernel: feature_align_2.2
$region0: #{feature_align_2.2}
  #allocation0 [shape = 'u32[]', space=smem, size = 0x4, offset = 0x4, fixed_abs, tag = 'smem constant byte address 0x4 - core index']
  #allocation1 [shape = 'u32[144,128]{1,0:T(1,128)}', space=vmem, size = 0x12000, scoped, tag = 'internal scratch']
  %s0 = inlined_call_operand.vmem [shape: f32[2,64,256], index: 0, kind: input, shape index: {}]
  %s1 = inlined_call_operand.vmem [shape: bf16[2,96,256], index: 1, kind: input, shape index: {}]
  %s2 = inlined_call_operand.vmem [shape: f32[98,256], index: 2, kind: input, shape index: {}]
  %s3 = inlined_call_operand.vmem [shape: f32[9,256], index: 3, kind: input, shape index: {}]
  %s4 = inlined_call_operand.hbm [shape: bf16[32,64], index: 4, kind: input, shape index: {}]
  %s5 = inlined_call_operand.vmem [shape: f32[32,1], index: 5, kind: input, shape index: {}]
  %s6 = inlined_call_operand.vmem [shape: f32[32,1], index: 6, kind: input, shape index: {}]
  %s7 = inlined_call_operand.hbm [shape: f32[32,32], index: 7, kind: input, shape index: {}]
  %s8 = inlined_call_operand.hbm [shape: bf16[32,96], index: 8, kind: input, shape index: {}]
  %s9 = inlined_call_operand.vmem [shape: bf16[32,64], index: 9, kind: input, shape index: {}]
  %s10 = inlined_call_operand.vmem [shape: bf16[216,288], index: 10, kind: input, shape index: {}]
  %s11 = inlined_call_operand.vmem [shape: f32[216,1], index: 11, kind: input, shape index: {}]
  %s12 = inlined_call_operand.vmem [shape: f32[2,32,256], index: 12, kind: output, shape index: {0}]
  %s13 = inlined_call_operand.vmem [shape: f32[2,32,256], index: 13, kind: output, shape index: {1}]
  %s14 = inlined_call_operand.vmem [shape: f32[2,216,256], index: 14, kind: output, shape index: {2}]
  %15 = xla_tuple %s12, %s13, %s14
  %s16 = sld [smem:[#allocation0]]
  $region109: #{feature_align_2.2} parent=0
    _
  %s18 = ssub.s32 1, %s16
  %s19 = scalar_select 0, %s18, %s16
  $region1: #{feature_align_2.2} parent=0
    #allocation2 [shape = 'u8[8192]{0}', space=vmem, size = 0x2000, scoped, tag = 'input window, operand 4, single buffered']
    #allocation3 [shape = 's32[2]{0}', space=sflag, size = 0x8, scoped, tag = 'scoped memory for feature_align_2.2']
    #allocation4 [shape = 'u8[16384]{0}', space=vmem, size = 0x4000, scoped, tag = 'input window, operand 7, single buffered']
    #allocation5 [shape = 's32[1]{0}', space=sflag, size = 0x4, scoped, tag = 'scoped memory for feature_align_2.2']
    #allocation6 [shape = 'u8[8192]{0}', space=vmem, size = 0x2000, scoped, tag = 'input window, operand 8, single buffered']
    %20 = vsyncpa [#allocation3], 0
    %21 = vsyncpa [#allocation5], 0
    loop: start=0, step=1, limit=4
    $region2: #{feature_align_2.2} parent=1 // loop_pre_header
      _
    $region3: #{feature_align_2.2} parent=1 // loop_header
      %s23 = sphi 0, %s27
      %p24 = scmp.ge.s32.totalorder %s23, 4
      %s33 = sphi 0, %s35
      %s36 = sphi 0, %s33
      %s37 = sphi 0, %s36
      %s53 = sphi 0, %s37
      %s59 = sphi 0, %s61
      %s62 = sphi 0, %s59
      %s63 = sphi 0, %s62
      %s79 = sphi 0, %s63
      %s83 = sphi 0, %s83
      %s85 = sphi 0, %s83
      %s86 = sphi 0, %s85
      %s100 = sphi 0, %s86
      %s104 = sphi 0, %s104
      %s106 = sphi 0, %s104
      %s107 = sphi 0, %s106
      %s121 = sphi 0, %s107
      %s125 = sphi 0, %s125
      %s127 = sphi 0, %s125
      %s128 = sphi 0, %s127
      %s142 = sphi 0, %s128
      %s146 = sphi 0, %s146
      %s148 = sphi 0, %s146
      %s149 = sphi 0, %s148
      %s163 = sphi 0, %s149
      %s167 = sphi 0, %s167
      %s169 = sphi 0, %s167
      %s170 = sphi 0, %s169
      %s184 = sphi 0, %s170
      %s188 = sphi 0, %s188
      %s190 = sphi 0, %s188
      %s191 = sphi 0, %s190
      %s205 = sphi 0, %s191
      %s209 = sphi 0, %s209
      %s211 = sphi 0, %s209
      %s212 = sphi 0, %s211
      %s226 = sphi 0, %s212
      %s230 = sphi 0, %s230
      %s232 = sphi 0, %s230
      %s233 = sphi 0, %s232
      %s247 = sphi 0, %s233
      %s251 = sphi 0, %s251
      %s253 = sphi 0, %s251
      %s254 = sphi 0, %s253
      %s268 = sphi 0, %s254
      %s272 = sphi 0, %s272
      %s274 = sphi 0, %s272
      %s275 = sphi 0, %s274
      %s289 = sphi 0, %s275
      %s295 = sphi 0, %s297
      %s298 = sphi 0, %s295
      %s299 = sphi 0, %s298
      %s315 = sphi 0, %s299
      %s321 = sphi 0, %s323
      %s324 = sphi 0, %s321
      %s325 = sphi 0, %s324
      %s341 = sphi 0, %s325
      %s347 = sphi 0, %s349
      %s350 = sphi 0, %s347
      %s351 = sphi 0, %s350
      %s367 = sphi 0, %s351
    $region4: #{feature_align_2.2} parent=1 // loop_header_branch
      %26 = sbr.rel (%p24) target = $region8
    $region5: #{feature_align_2.2} parent=1 // loop_body
      %s28 = ssub.s32 %s23, 1
      %s29 = ssub.s32 %s23, 2
      %s30 = sadd.s32 %s23, 1
      %s31 = ssub.s32 %s23, %s30
      %p32 = scmp.eq.s32.totalorder %s31, 0
      %s34 = sadd.s32 %s33, 1
      %s35 = scalar_select %p32, %s33, %s34
      %p38 = pneg %p32
      %p39 = scmp.eq.s32.totalorder %s23, 1
      %p40 = por %p38, %p39
      %p41 = scmp.ne.s32.totalorder %s33, %s36
      %p42 = scmp.eq.s32.totalorder %s23, 0
      %p43 = por %p41, %p42
      %p44 = scmp.ne.s32.totalorder %s33, %s36
      %p45 = scmp.eq.s32.totalorder %s28, 1
      %p46 = por %p44, %p45
      %p47 = scmp.ne.s32.totalorder %s36, %s37
      %p48 = scmp.eq.s32.totalorder %s28, 0
      %p49 = por %p47, %p48
      %p50 = scmp.ne.s32.totalorder %s36, %s37
      %p51 = scmp.eq.s32.totalorder %s29, 1
      %p52 = por %p50, %p51
      %p54 = scmp.ne.s32.totalorder %s37, %s53
      %p55 = scmp.eq.s32.totalorder %s29, 0
      %p56 = por %p54, %p55
      %s57 = ssub.s32 %s23, %s30
      %p58 = scmp.eq.s32.totalorder %s57, 0
      %s60 = sadd.s32 %s59, 1
      %s61 = scalar_select %p58, %s59, %s60
      %p64 = pneg %p58
      %p65 = scmp.eq.s32.totalorder %s23, 1
      %p66 = por %p64, %p65
      %p67 = scmp.ne.s32.totalorder %s59, %s62
      %p68 = scmp.eq.s32.totalorder %s23, 0
      %p69 = por %p67, %p68
      %p70 = scmp.ne.s32.totalorder %s59, %s62
      %p71 = scmp.eq.s32.totalorder %s28, 1
      %p72 = por %p70, %p71
      %p73 = scmp.ne.s32.totalorder %s62, %s63
      %p74 = scmp.eq.s32.totalorder %s28, 0
      %p75 = por %p73, %p74
      %p76 = scmp.ne.s32.totalorder %s62, %s63
      %p77 = scmp.eq.s32.totalorder %s29, 1
      %p78 = por %p76, %p77
      %p80 = scmp.ne.s32.totalorder %s63, %s79
      %p81 = scmp.eq.s32.totalorder %s29, 0
      %p82 = por %p80, %p81
      %s84 = sadd.s32 %s83, 1
      %p87 = scmp.eq.s32.totalorder %s23, 1
      %p88 = scmp.ne.s32.totalorder %s83, %s85
      %p89 = scmp.eq.s32.totalorder %s23, 0
      %p90 = por %p88, %p89
      %p91 = scmp.ne.s32.totalorder %s83, %s85
      %p92 = scmp.eq.s32.totalorder %s28, 1
      %p93 = por %p91, %p92
      %p94 = scmp.ne.s32.totalorder %s85, %s86
      %p95 = scmp.eq.s32.totalorder %s28, 0
      %p96 = por %p94, %p95
      %p97 = scmp.ne.s32.totalorder %s85, %s86
      %p98 = scmp.eq.s32.totalorder %s29, 1
      %p99 = por %p97, %p98
      %p101 = scmp.ne.s32.totalorder %s86, %s100
      %p102 = scmp.eq.s32.totalorder %s29, 0
      %p103 = por %p101, %p102
      %s105 = sadd.s32 %s104, 1
      %p108 = scmp.eq.s32.totalorder %s23, 1
      %p109 = scmp.ne.s32.totalorder %s104, %s106
      %p110 = scmp.eq.s32.totalorder %s23, 0
      %p111 = por %p109, %p110
      %p112 = scmp.ne.s32.totalorder %s104, %s106
      %p113 = scmp.eq.s32.totalorder %s28, 1
      %p114 = por %p112, %p113
      %p115 = scmp.ne.s32.totalorder %s106, %s107
      %p116 = scmp.eq.s32.totalorder %s28, 0
      %p117 = por %p115, %p116
      %p118 = scmp.ne.s32.totalorder %s106, %s107
      %p119 = scmp.eq.s32.totalorder %s29, 1
      %p120 = por %p118, %p119
      %p122 = scmp.ne.s32.totalorder %s107, %s121
      %p123 = scmp.eq.s32.totalorder %s29, 0
      %p124 = por %p122, %p123
      %s126 = sadd.s32 %s125, 1
      %p129 = scmp.eq.s32.totalorder %s23, 1
      %p130 = scmp.ne.s32.totalorder %s125, %s127
      %p131 = scmp.eq.s32.totalorder %s23, 0
      %p132 = por %p130, %p131
      %p133 = scmp.ne.s32.totalorder %s125, %s127
      %p134 = scmp.eq.s32.totalorder %s28, 1
      %p135 = por %p133, %p134
      %p136 = scmp.ne.s32.totalorder %s127, %s128
      %p137 = scmp.eq.s32.totalorder %s28, 0
      %p138 = por %p136, %p137
      %p139 = scmp.ne.s32.totalorder %s127, %s128
      %p140 = scmp.eq.s32.totalorder %s29, 1
      %p141 = por %p139, %p140
      %p143 = scmp.ne.s32.totalorder %s128, %s142
      %p144 = scmp.eq.s32.totalorder %s29, 0
      %p145 = por %p143, %p144
      %s147 = sadd.s32 %s146, 1
      %p150 = scmp.eq.s32.totalorder %s23, 1
      %p151 = scmp.ne.s32.totalorder %s146, %s148
      %p152 = scmp.eq.s32.totalorder %s23, 0
      %p153 = por %p151, %p152
      %p154 = scmp.ne.s32.totalorder %s146, %s148
      %p155 = scmp.eq.s32.totalorder %s28, 1
      %p156 = por %p154, %p155
      %p157 = scmp.ne.s32.totalorder %s148, %s149
      %p158 = scmp.eq.s32.totalorder %s28, 0
      %p159 = por %p157, %p158
      %p160 = scmp.ne.s32.totalorder %s148, %s149
      %p161 = scmp.eq.s32.totalorder %s29, 1
      %p162 = por %p160, %p161
      %p164 = scmp.ne.s32.totalorder %s149, %s163
      %p165 = scmp.eq.s32.totalorder %s29, 0
      %p166 = por %p164, %p165
      %s168 = sadd.s32 %s167, 1
      %p171 = scmp.eq.s32.totalorder %s23, 1
      %p172 = scmp.ne.s32.totalorder %s167, %s169
      %p173 = scmp.eq.s32.totalorder %s23, 0
      %p174 = por %p172, %p173
      %p175 = scmp.ne.s32.totalorder %s167, %s169
      %p176 = scmp.eq.s32.totalorder %s28, 1
      %p177 = por %p175, %p176
      %p178 = scmp.ne.s32.totalorder %s169, %s170
      %p179 = scmp.eq.s32.totalorder %s28, 0
      %p180 = por %p178, %p179
      %p181 = scmp.ne.s32.totalorder %s169, %s170
      %p182 = scmp.eq.s32.totalorder %s29, 1
      %p183 = por %p181, %p182
      %p185 = scmp.ne.s32.totalorder %s170, %s184
      %p186 = scmp.eq.s32.totalorder %s29, 0
      %p187 = por %p185, %p186
      %s189 = sadd.s32 %s188, 1
      %p192 = scmp.eq.s32.totalorder %s23, 1
      %p193 = scmp.ne.s32.totalorder %s188, %s190
      %p194 = scmp.eq.s32.totalorder %s23, 0
      %p195 = por %p193, %p194
      %p196 = scmp.ne.s32.totalorder %s188, %s190
      %p197 = scmp.eq.s32.totalorder %s28, 1
      %p198 = por %p196, %p197
      %p199 = scmp.ne.s32.totalorder %s190, %s191
      %p200 = scmp.eq.s32.totalorder %s28, 0
      %p201 = por %p199, %p200
      %p202 = scmp.ne.s32.totalorder %s190, %s191
      %p203 = scmp.eq.s32.totalorder %s29, 1
      %p204 = por %p202, %p203
      %p206 = scmp.ne.s32.totalorder %s191, %s205
      %p207 = scmp.eq.s32.totalorder %s29, 0
      %p208 = por %p206, %p207
      %s210 = sadd.s32 %s209, 1
      %p213 = scmp.eq.s32.totalorder %s23, 1
      %p214 = scmp.ne.s32.totalorder %s209, %s211
      %p215 = scmp.eq.s32.totalorder %s23, 0
      %p216 = por %p214, %p215
      %p217 = scmp.ne.s32.totalorder %s209, %s211
      %p218 = scmp.eq.s32.totalorder %s28, 1
      %p219 = por %p217, %p218
      %p220 = scmp.ne.s32.totalorder %s211, %s212
      %p221 = scmp.eq.s32.totalorder %s28, 0
      %p222 = por %p220, %p221
      %p223 = scmp.ne.s32.totalorder %s211, %s212
      %p224 = scmp.eq.s32.totalorder %s29, 1
      %p225 = por %p223, %p224
      %p227 = scmp.ne.s32.totalorder %s212, %s226
      %p228 = scmp.eq.s32.totalorder %s29, 0
      %p229 = por %p227, %p228
      %s231 = sadd.s32 %s230, 1
      %p234 = scmp.eq.s32.totalorder %s23, 1
      %p235 = scmp.ne.s32.totalorder %s230, %s232
      %p236 = scmp.eq.s32.totalorder %s23, 0
      %p237 = por %p235, %p236
      %p238 = scmp.ne.s32.totalorder %s230, %s232
      %p239 = scmp.eq.s32.totalorder %s28, 1
      %p240 = por %p238, %p239
      %p241 = scmp.ne.s32.totalorder %s232, %s233
      %p242 = scmp.eq.s32.totalorder %s28, 0
      %p243 = por %p241, %p242
      %p244 = scmp.ne.s32.totalorder %s232, %s233
      %p245 = scmp.eq.s32.totalorder %s29, 1
      %p246 = por %p244, %p245
      %p248 = scmp.ne.s32.totalorder %s233, %s247
      %p249 = scmp.eq.s32.totalorder %s29, 0
      %p250 = por %p248, %p249
      %s252 = sadd.s32 %s251, 1
      %p255 = scmp.eq.s32.totalorder %s23, 1
      %p256 = scmp.ne.s32.totalorder %s251, %s253
      %p257 = scmp.eq.s32.totalorder %s23, 0
      %p258 = por %p256, %p257
      %p259 = scmp.ne.s32.totalorder %s251, %s253
      %p260 = scmp.eq.s32.totalorder %s28, 1
      %p261 = por %p259, %p260
      %p262 = scmp.ne.s32.totalorder %s253, %s254
      %p263 = scmp.eq.s32.totalorder %s28, 0
      %p264 = por %p262, %p263
      %p265 = scmp.ne.s32.totalorder %s253, %s254
      %p266 = scmp.eq.s32.totalorder %s29, 1
      %p267 = por %p265, %p266
      %p269 = scmp.ne.s32.totalorder %s254, %s268
      %p270 = scmp.eq.s32.totalorder %s29, 0
      %p271 = por %p269, %p270
      %s273 = sadd.s32 %s272, 1
      %p276 = scmp.eq.s32.totalorder %s23, 1
      %p277 = scmp.ne.s32.totalorder %s272, %s274
      %p278 = scmp.eq.s32.totalorder %s23, 0
      %p279 = por %p277, %p278
      %p280 = scmp.ne.s32.totalorder %s272, %s274
      %p281 = scmp.eq.s32.totalorder %s28, 1
      %p282 = por %p280, %p281
      %p283 = scmp.ne.s32.totalorder %s274, %s275
      %p284 = scmp.eq.s32.totalorder %s28, 0
      %p285 = por %p283, %p284
      %p286 = scmp.ne.s32.totalorder %s274, %s275
      %p287 = scmp.eq.s32.totalorder %s29, 1
      %p288 = por %p286, %p287
      %p290 = scmp.ne.s32.totalorder %s275, %s289
      %p291 = scmp.eq.s32.totalorder %s29, 0
      %p292 = por %p290, %p291
      %s293 = ssub.s32 %s23, %s30
      %p294 = scmp.eq.s32.totalorder %s293, 0
      %s296 = sadd.s32 %s295, 1
      %s297 = scalar_select %p294, %s295, %s296
      %p300 = pneg %p294
      %p301 = scmp.eq.s32.totalorder %s23, 1
      %p302 = por %p300, %p301
      %p303 = scmp.ne.s32.totalorder %s295, %s298
      %p304 = scmp.eq.s32.totalorder %s23, 0
      %p305 = por %p303, %p304
      %p306 = scmp.ne.s32.totalorder %s295, %s298
      %p307 = scmp.eq.s32.totalorder %s28, 1
      %p308 = por %p306, %p307
      %p309 = scmp.ne.s32.totalorder %s298, %s299
      %p310 = scmp.eq.s32.totalorder %s28, 0
      %p311 = por %p309, %p310
      %p312 = scmp.ne.s32.totalorder %s298, %s299
      %p313 = scmp.eq.s32.totalorder %s29, 1
      %p314 = por %p312, %p313
      %p316 = scmp.ne.s32.totalorder %s299, %s315
      %p317 = scmp.eq.s32.totalorder %s29, 0
      %p318 = por %p316, %p317
      %s319 = ssub.s32 %s23, %s30
      %p320 = scmp.eq.s32.totalorder %s319, 0
      %s322 = sadd.s32 %s321, 1
      %s323 = scalar_select %p320, %s321, %s322
      %p326 = pneg %p320
      %p327 = scmp.eq.s32.totalorder %s23, 1
      %p328 = por %p326, %p327
      %p329 = scmp.ne.s32.totalorder %s321, %s324
      %p330 = scmp.eq.s32.totalorder %s23, 0
      %p331 = por %p329, %p330
      %p332 = scmp.ne.s32.totalorder %s321, %s324
      %p333 = scmp.eq.s32.totalorder %s28, 1
      %p334 = por %p332, %p333
      %p335 = scmp.ne.s32.totalorder %s324, %s325
      %p336 = scmp.eq.s32.totalorder %s28, 0
      %p337 = por %p335, %p336
      %p338 = scmp.ne.s32.totalorder %s324, %s325
      %p339 = scmp.eq.s32.totalorder %s29, 1
      %p340 = por %p338, %p339
      %p342 = scmp.ne.s32.totalorder %s325, %s341
      %p343 = scmp.eq.s32.totalorder %s29, 0
      %p344 = por %p342, %p343
      %s345 = ssub.s32 %s23, %s30
      %p346 = scmp.eq.s32.totalorder %s345, 0
      %s348 = sadd.s32 %s347, 1
      %s349 = scalar_select %p346, %s347, %s348
      %p352 = pneg %p346
      %p353 = scmp.eq.s32.totalorder %s23, 1
      %p354 = por %p352, %p353
      %p355 = scmp.ne.s32.totalorder %s347, %s350
      %p356 = scmp.eq.s32.totalorder %s23, 0
      %p357 = por %p355, %p356
      %p358 = scmp.ne.s32.totalorder %s347, %s350
      %p359 = scmp.eq.s32.totalorder %s28, 1
      %p360 = por %p358, %p359
      %p361 = scmp.ne.s32.totalorder %s350, %s351
      %p362 = scmp.eq.s32.totalorder %s28, 0
      %p363 = por %p361, %p362
      %p364 = scmp.ne.s32.totalorder %s350, %s351
      %p365 = scmp.eq.s32.totalorder %s29, 1
      %p366 = por %p364, %p365
      %p368 = scmp.ne.s32.totalorder %s351, %s367
      %p369 = scmp.eq.s32.totalorder %s29, 0
      %p370 = por %p368, %p369
      %p371 = scmp.le.s32.totalorder 1, %s23
      %p372 = scmp.lt.s32.totalorder %s23, 3
      %p373 = pnand %p371, %p372
      %p374 = pneg %p373
      // Predicated region
      $region9: #{feature_align_2.2} parent=5 // pred_check
        _
      $region10: #{feature_align_2.2} parent=5 // pred_check_branch
        %376 = sbr.rel (%p373) target = $region12
      $region11: #{feature_align_2.2} parent=5 // pred_region
        %s377 = ssub.s32 %s23, 1
        // Predicated region
        $region13: #{feature_align_2.2} parent=11 // pred_check
          %p378 = pneg %p96
        $region14: #{feature_align_2.2} parent=11 // pred_check_branch
          %380 = sbr.rel (%p378) target = $region16
        $region15: #{feature_align_2.2} parent=11 // pred_region
          _
        $region16: #{feature_align_2.2} parent=11 // pred_fallthru
          _
        // Predicated region
        $region17: #{feature_align_2.2} parent=11 // pred_check
          %p381 = pneg %p117
        $region18: #{feature_align_2.2} parent=11 // pred_check_branch
          %383 = sbr.rel (%p381) target = $region20
        $region19: #{feature_align_2.2} parent=11 // pred_region
          _
        $region20: #{feature_align_2.2} parent=11 // pred_fallthru
          _
        // Predicated region
        $region21: #{feature_align_2.2} parent=11 // pred_check
          %p384 = pneg %p138
        $region22: #{feature_align_2.2} parent=11 // pred_check_branch
          %386 = sbr.rel (%p384) target = $region24
        $region23: #{feature_align_2.2} parent=11 // pred_region
          %s388 = ssub.s32 256, 256
          %389 = vsyncadd [#allocation3], %s388
          %s390 = sshll.u32 [#allocation2], 4
          %s391 = int_to_ptr.vmem [resolvable:$true] %s390
          %396 = dma.hbm_to_vmem [thread:$0]  %s4, 256, %s391, [#allocation3], 64, 64, 4
        $region24: #{feature_align_2.2} parent=11 // pred_fallthru
          _
        // Predicated region
        $region25: #{feature_align_2.2} parent=11 // pred_check
          %p397 = pneg %p159
        $region26: #{feature_align_2.2} parent=11 // pred_check_branch
          %399 = sbr.rel (%p397) target = $region28
        $region27: #{feature_align_2.2} parent=11 // pred_region
          _
        $region28: #{feature_align_2.2} parent=11 // pred_fallthru
          _
        // Predicated region
        $region29: #{feature_align_2.2} parent=11 // pred_check
          %p400 = pneg %p180
        $region30: #{feature_align_2.2} parent=11 // pred_check_branch
          %402 = sbr.rel (%p400) target = $region32
        $region31: #{feature_align_2.2} parent=11 // pred_region
          _
        $region32: #{feature_align_2.2} parent=11 // pred_fallthru
          _
        // Predicated region
        $region33: #{feature_align_2.2} parent=11 // pred_check
          %p403 = pneg %p201
        $region34: #{feature_align_2.2} parent=11 // pred_check_branch
          %405 = sbr.rel (%p403) target = $region36
        $region35: #{feature_align_2.2} parent=11 // pred_region
          %s407 = ssub.s32 512, 512
          %408 = vsyncadd [#allocation5], %s407
          %s409 = sshll.u32 [#allocation4], 4
          %s410 = int_to_ptr.vmem [resolvable:$true] %s409
          %415 = dma.hbm_to_vmem [thread:$0]  %s7, 512, %s410, [#allocation5], 128, 128, 8
        $region36: #{feature_align_2.2} parent=11 // pred_fallthru
          _
        // Predicated region
        $region37: #{feature_align_2.2} parent=11 // pred_check
          %p416 = pneg %p222
        $region38: #{feature_align_2.2} parent=11 // pred_check_branch
          %418 = sbr.rel (%p416) target = $region40
        $region39: #{feature_align_2.2} parent=11 // pred_region
          %s420 = ssub.s32 256, 256
          %421 = vsyncadd [#allocation5], %s420
          %s422 = sshll.u32 [#allocation6], 4
          %s423 = int_to_ptr.vmem [resolvable:$true] %s422
          %428 = dma.hbm_to_vmem [thread:$0]  %s8, 256, %s423, [#allocation5], 64, 64, 4
        $region40: #{feature_align_2.2} parent=11 // pred_fallthru
          _
        // Predicated region
        $region41: #{feature_align_2.2} parent=11 // pred_check
          %p429 = pneg %p243
        $region42: #{feature_align_2.2} parent=11 // pred_check_branch
          %431 = sbr.rel (%p429) target = $region44
        $region43: #{feature_align_2.2} parent=11 // pred_region
          _
        $region44: #{feature_align_2.2} parent=11 // pred_fallthru
          _
        // Predicated region
        $region45: #{feature_align_2.2} parent=11 // pred_check
          %p432 = pneg %p264
        $region46: #{feature_align_2.2} parent=11 // pred_check_branch
          %434 = sbr.rel (%p432) target = $region48
        $region47: #{feature_align_2.2} parent=11 // pred_region
          _
        $region48: #{feature_align_2.2} parent=11 // pred_fallthru
          _
        // Predicated region
        $region49: #{feature_align_2.2} parent=11 // pred_check
          %p435 = pneg %p285
        $region50: #{feature_align_2.2} parent=11 // pred_check_branch
          %437 = sbr.rel (%p435) target = $region52
        $region51: #{feature_align_2.2} parent=11 // pred_region
          _
        $region52: #{feature_align_2.2} parent=11 // pred_fallthru
          _
      $region12: #{feature_align_2.2} parent=5 // pred_fallthru
        _
      %p438 = scmp.lt.s32.totalorder %s23, 2
      // Predicated region
      $region53: #{feature_align_2.2} parent=5 // pred_check
        %p439 = pneg %p438
      $region54: #{feature_align_2.2} parent=5 // pred_check_branch
        %441 = sbr.rel (%p439) target = $region56
      $region55: #{feature_align_2.2} parent=5 // pred_region
        // Predicated region
        $region57: #{feature_align_2.2} parent=55 // pred_check
          %p442 = pneg %p43
        $region58: #{feature_align_2.2} parent=55 // pred_check_branch
          %444 = sbr.rel (%p442) target = $region60
        $region59: #{feature_align_2.2} parent=55 // pred_region
          %p445 = scmp.lt.s32.totalorder %s23, 1
          %s446 = scalar_select %p445, %s23, 1
          %s447 = smul.addr %s446, 16
          %s448 = smul.addr %s447, 8
          %s449 = scalar_lea.vmem %s0, %s448
        $region60: #{feature_align_2.2} parent=55 // pred_fallthru
          _
        // Predicated region
        $region61: #{feature_align_2.2} parent=55 // pred_check
          %p450 = pneg %p69
        $region62: #{feature_align_2.2} parent=55 // pred_check_branch
          %452 = sbr.rel (%p450) target = $region64
        $region63: #{feature_align_2.2} parent=55 // pred_region
          %p453 = scmp.lt.s32.totalorder %s23, 1
          %s454 = scalar_select %p453, %s23, 1
          %s455 = smul.addr %s454, 24
          %s456 = smul.addr %s455, 4
          %s457 = scalar_lea.vmem %s1, %s456
        $region64: #{feature_align_2.2} parent=55 // pred_fallthru
          _
      $region56: #{feature_align_2.2} parent=5 // pred_fallthru
        _
      %p458 = scmp.le.s32.totalorder 1, %s23
      %p459 = scmp.lt.s32.totalorder %s23, 3
      %p460 = pnand %p458, %p459
      %p461 = pneg %p460
      // Predicated region
      $region65: #{feature_align_2.2} parent=5 // pred_check
        _
      $region66: #{feature_align_2.2} parent=5 // pred_check_branch
        %463 = sbr.rel (%p460) target = $region68
      $region67: #{feature_align_2.2} parent=5 // pred_region
        %s464 = ssub.s32 %s23, 1
        // Predicated region
        $region69: #{feature_align_2.2} parent=67 // pred_check
          %p465 = pneg %p138
        $region70: #{feature_align_2.2} parent=67 // pred_check_branch
          %467 = sbr.rel (%p465) target = $region72
        $region71: #{feature_align_2.2} parent=67 // pred_region
          %468 = dma.done [#allocation3], 256
        $region72: #{feature_align_2.2} parent=67 // pred_fallthru
          _
        // Predicated region
        $region73: #{feature_align_2.2} parent=67 // pred_check
          %p469 = pneg %p201
        $region74: #{feature_align_2.2} parent=67 // pred_check_branch
          %471 = sbr.rel (%p469) target = $region76
        $region75: #{feature_align_2.2} parent=67 // pred_region
          %472 = dma.done [#allocation5], 512
        $region76: #{feature_align_2.2} parent=67 // pred_fallthru
          _
        // Predicated region
        $region77: #{feature_align_2.2} parent=67 // pred_check
          %p473 = pneg %p222
        $region78: #{feature_align_2.2} parent=67 // pred_check_branch
          %475 = sbr.rel (%p473) target = $region80
        $region79: #{feature_align_2.2} parent=67 // pred_region
          %476 = dma.done [#allocation5], 256
        $region80: #{feature_align_2.2} parent=67 // pred_fallthru
          _
        %p477 = scmp.lt.s32.totalorder %s28, 1
        %s478 = scalar_select %p477, %s28, 1
        %s479 = smul.addr %s478, 16
        %s480 = smul.addr %s479, 8
        %s481 = scalar_lea.vmem %s0, %s480
        %p482 = pneg %p49
        %p483 = pneg %p46
        %p484 = scmp.lt.s32.totalorder %s28, 1
        %s485 = scalar_select %p484, %s28, 1
        %s486 = smul.addr %s485, 24
        %s487 = smul.addr %s486, 4
        %s488 = scalar_lea.vmem %s1, %s487
        %p489 = pneg %p75
        %p490 = pneg %p72
        %p491 = pneg %p96
        %p492 = pneg %p93
        %p493 = pneg %p117
        %p494 = pneg %p114
        %p495 = pneg %p138
        %p496 = pneg %p135
        %p497 = pneg %p159
        %p498 = pneg %p156
        %p499 = pneg %p180
        %p500 = pneg %p177
        %p501 = pneg %p201
        %p502 = pneg %p198
        %p503 = pneg %p222
        %p504 = pneg %p219
        %p505 = pneg %p243
        %p506 = pneg %p240
        %p507 = pneg %p264
        %p508 = pneg %p261
        %p509 = pneg %p285
        %p510 = pneg %p282
        %p511 = pneg %p311
        %p512 = pneg %p308
        %p513 = scmp.lt.s32.totalorder %s28, 1
        %s514 = scalar_select %p513, %s28, 1
        %s515 = smul.addr %s514, 8
        %s516 = smul.addr %s515, 8
        %s517 = scalar_lea.vmem %s12, %s516
        %p518 = pneg %p337
        %p519 = pneg %p334
        %p520 = scmp.lt.s32.totalorder %s28, 1
        %s521 = scalar_select %p520, %s28, 1
        %s522 = smul.addr %s521, 8
        %s523 = smul.addr %s522, 8
        %s524 = scalar_lea.vmem %s13, %s523
        %p525 = pneg %p363
        %p526 = pneg %p360
        %p527 = scmp.lt.s32.totalorder %s28, 1
        %s528 = scalar_select %p527, %s28, 1
        %s529 = smul.addr %s528, 54
        %s530 = smul.addr %s529, 8
        %s531 = scalar_lea.vmem %s14, %s530
        %p532 = scmp.lt.s32.totalorder %s28, 1
        %s533 = scalar_select %p532, %s28, 1
        %s534 = smul.addr %s533, 16
        %s535 = smul.addr %s534, 8
        %s536 = scalar_lea.vmem %s0, %s535
        %p537 = scmp.lt.s32.totalorder %s28, 1
        %s538 = scalar_select %p537, %s28, 1
        %s539 = smul.addr %s538, 24
        %s540 = smul.addr %s539, 4
        %s541 = scalar_lea.vmem %s1, %s540
        %p542 = scmp.lt.s32.totalorder %s28, 1
        %s543 = scalar_select %p542, %s28, 1
        %s544 = smul.addr %s543, 8
        %s545 = smul.addr %s544, 8
        %s546 = scalar_lea.vmem %s12, %s545
        %p547 = scmp.lt.s32.totalorder %s28, 1
        %s548 = scalar_select %p547, %s28, 1
        %s549 = smul.addr %s548, 8
        %s550 = smul.addr %s549, 8
        %s551 = scalar_lea.vmem %s13, %s550
        %p552 = scmp.lt.s32.totalorder %s28, 1
        %s553 = scalar_select %p552, %s28, 1
        %s554 = smul.addr %s553, 54
        %s555 = smul.addr %s554, 8
        %s556 = scalar_lea.vmem %s14, %s555
        %v558 = vld [vmem:[%s536] sm:$0xff]
        %v559 = vld [vmem:[%s536 + $0x8] sm:$0xff]
        %v560 = vld [vmem:[%s536 + $0x10] sm:$0xff]
        %v561 = vld [vmem:[%s536 + $0x18] sm:$0xff]
        %v562 = vld [vmem:[%s536 + $0x20] sm:$0xff]
        %v563 = vld [vmem:[%s536 + $0x28] sm:$0xff]
        %v564 = vld [vmem:[%s536 + $0x30] sm:$0xff]
        %v565 = vld [vmem:[%s536 + $0x38] sm:$0xff]
        %v566 = vld [vmem:[%s536 + $0x40] sm:$0xff]
        %v567 = vld [vmem:[%s536 + $0x48] sm:$0xff]
        %v568 = vld [vmem:[%s536 + $0x50] sm:$0xff]
        %v569 = vld [vmem:[%s536 + $0x58] sm:$0xff]
        %v570 = vld [vmem:[%s536 + $0x60] sm:$0xff]
        %v571 = vld [vmem:[%s536 + $0x68] sm:$0xff]
        %v572 = vld [vmem:[%s536 + $0x70] sm:$0xff]
        %v573 = vld [vmem:[%s536 + $0x78] sm:$0xff]
        %v574 = vadd.f32 %v558, %v560
        %v575 = vadd.f32 %v574, %v562
        %v576 = vadd.f32 %v575, %v564
        %v577 = vadd.f32 %v576, %v566
        %v578 = vadd.f32 %v577, %v568
        %v579 = vadd.f32 %v578, %v570
        %v580 = vadd.f32 %v579, %v572
        %v581 = vrot.slane %v580, 4
        %v582 = vadd.f32 %v580, %v581
        %v583 = vrot.slane %v582, 2
        %v584 = vadd.f32 %v582, %v583
        %v585 = vrot.slane %v584, 1
        %v586 = vadd.f32 %v584, %v585
        %v587 = vadd.f32 %v559, %v561
        %v588 = vadd.f32 %v587, %v563
        %v589 = vadd.f32 %v588, %v565
        %v590 = vadd.f32 %v589, %v567
        %v591 = vadd.f32 %v590, %v569
        %v592 = vadd.f32 %v591, %v571
        %v593 = vadd.f32 %v592, %v573
        %v594 = vrot.slane %v593, 4
        %v595 = vadd.f32 %v593, %v594
        %v596 = vrot.slane %v595, 2
        %v597 = vadd.f32 %v595, %v596
        %v598 = vrot.slane %v597, 1
        %v599 = vadd.f32 %v597, %v598
        %v600 = vrcp.pop 64.0
        %v601 = vmul.f32 %v586, %v600
        %v602 = vmul.f32 %v599, %v600
        %v603 = vmax.f32 %v558, %v562
        %v604 = vmax.f32 %v560, %v564
        %v605 = vmax.f32 %v603, %v566
        %v606 = vmax.f32 %v604, %v568
        %v607 = vmax.f32 %v605, %v570
        %v608 = vmax.f32 %v606, %v572
        %v609 = vmax.f32 %v607, %v608
        %v610 = vrot.slane %v609, 4
        %v611 = vmax.f32 %v609, %v610
        %v612 = vrot.slane %v611, 2
        %v613 = vmax.f32 %v611, %v612
        %v614 = vrot.slane %v613, 1
        %v615 = vmax.f32 %v613, %v614
        %v616 = vmax.f32 %v559, %v563
        %v617 = vmax.f32 %v561, %v565
        %v618 = vmax.f32 %v616, %v567
        %v619 = vmax.f32 %v617, %v569
        %v620 = vmax.f32 %v618, %v571
        %v621 = vmax.f32 %v619, %v573
        %v622 = vmax.f32 %v620, %v621
        %v623 = vrot.slane %v622, 4
        %v624 = vmax.f32 %v622, %v623
        %v625 = vrot.slane %v624, 2
        %v626 = vmax.f32 %v624, %v625
        %v627 = vrot.slane %v626, 1
        %v628 = vmax.f32 %v626, %v627
        %v629 = vlaneseq
        %v630 = vshrl.u32 %v629, 7
        %vm631 = vcmp.eq.s32.totalorder %v630, 0
        %v632 = vsel %vm631, %v601, %v615
        %v633 = vsel %vm631, %v602, %v628
        %634 = vrot.lane.b32.xlu0 %v632, 3
        %v635 = vpop.permute.xlu0 %634
        %636 = vrot.lane.b32.xlu0 %v633, 3
        %v637 = vpop.permute.xlu0 %636
        %v638 = vlaneseq
        %v639 = vand.u32 %v638, 127
        %vm640 = vcmp.lt.s32.totalorder %v639, 3
        %v641 = vsel %vm640, %v635, %v637
        %v642 = vsel %vm640, %v637, %v635
        %643 = vrot.lane.b32.xlu0 %v632, 2
        %v644 = vpop.permute.xlu0 %643
        %645 = vrot.lane.b32.xlu0 %v633, 2
        %v646 = vpop.permute.xlu0 %645
        %vm647 = vcmp.lt.s32.totalorder %v639, 2
        %v648 = vsel %vm647, %v644, %v646
        %v649 = vsel %vm647, %v646, %v644
        %650 = vrot.lane.b32.xlu0 %v632, 1
        %v651 = vpop.permute.xlu0 %650
        %652 = vrot.lane.b32.xlu0 %v633, 1
        %v653 = vpop.permute.xlu0 %652
        %vm654 = vcmp.lt.s32.totalorder %v639, 1
        %v655 = vsel %vm654, %v651, %v653
        %v656 = vsel %vm654, %v653, %v651
        %657 = vrot.lane.b32.xlu0 %v632, 127
        %v658 = vpop.permute.xlu0 %657
        %659 = vrot.lane.b32.xlu0 %v633, 127
        %v660 = vpop.permute.xlu0 %659
        %vm661 = vcmp.lt.s32.totalorder %v639, 127
        %v662 = vsel %vm661, %v658, %v660
        %v663 = vsel %vm661, %v660, %v658
        %664 = vrot.lane.b32.xlu0 %v632, 126
        %v665 = vpop.permute.xlu0 %664
        %666 = vrot.lane.b32.xlu0 %v633, 126
        %v667 = vpop.permute.xlu0 %666
        %vm668 = vcmp.lt.s32.totalorder %v639, 126
        %v669 = vsel %vm668, %v665, %v667
        %v670 = vsel %vm668, %v667, %v665
        %671 = vrot.lane.b32.xlu0 %v632, 125
        %v672 = vpop.permute.xlu0 %671
        %673 = vrot.lane.b32.xlu0 %v633, 125
        %v674 = vpop.permute.xlu0 %673
        %vm675 = vcmp.lt.s32.totalorder %v639, 125
        %v676 = vsel %vm675, %v672, %v674
        %v677 = vsel %vm675, %v674, %v672
        %v680 = vrot.slane %v649, 6
        %v681 = vrot.slane %v648, 6
        %v686 = vrot.slane %v656, 4
        %v687 = vrot.slane %v655, 4
        %v692 = vrot.slane %v632, 2
        %v693 = vrot.slane %v633, 2
        %v698 = vrot.slane %v669, 6
        %v699 = vrot.slane %v670, 6
        %v704 = vrot.slane %v676, 4
        %v705 = vrot.slane %v677, 4
        %vm708 = vcmask 1041408
        %v709 = vsel %vm708, %v642, %v680
        %v710 = vsel %vm708, %v641, %v681
        %vm711 = vcmask 1043456
        %v712 = vsel %vm711, %v709, %v686
        %v713 = vsel %vm711, %v710, %v687
        %vm714 = vcmask 1045504
        %v715 = vsel %vm714, %v712, %v692
        %v716 = vsel %vm714, %v713, %v693
        %v717 = vsel %vm708, %v662, %v698
        %v718 = vsel %vm708, %v663, %v699
        %v719 = vsel %vm711, %v717, %v704
        %v720 = vsel %vm711, %v718, %v705
        %721 = vrot.lane.b32.xlu0 %v715, 48
        %v722 = vpop.permute.xlu0 %721
        %723 = vrot.lane.b32.xlu0 %v719, 48
        %v724 = vpop.permute.xlu0 %723
        %725 = vrot.lane.b32.xlu0 %v716, 48
        %v726 = vpop.permute.xlu0 %725
        %727 = vrot.lane.b32.xlu0 %v720, 48
        %v728 = vpop.permute.xlu0 %727
        %vm729 = vcmp.lt.s32.totalorder %v639, 48
        %v730 = vsel %vm729, %v722, %v726
        %v731 = vsel %vm729, %v724, %v728
        %v732 = vsel %vm729, %v726, %v722
        %v733 = vsel %vm729, %v728, %v724
        %v734 = vld [vmem:[%s2] sm:$0xff]
        %v735 = vld [vmem:[%s2 + $0x8] sm:$0xff]
        %v736 = vld [vmem:[%s2 + $0x10] sm:$0x3f]
        %v737 = vld [vmem:[%s2 + $0x18] sm:$0x3f]
        %v738 = vmul.f32 %v732, %v734
        %v739 = vmul.f32 %v730, %v735
        %v740 = vmul.f32 %v733, %v736
        %v741 = vmul.f32 %v731, %v737
        %v742 = vadd.f32 %v738, 0.0
        %v743 = vadd.f32 %v739, 0.0
        %v744 = vadd.f32 %v740, 0.0
        %v745 = vadd.f32 %v741, 0.0
        %746 = vrot.lane.b32.xlu0 %v715, 32
        %v747 = vpop.permute.xlu0 %746
        %748 = vrot.lane.b32.xlu0 %v719, 32
        %v749 = vpop.permute.xlu0 %748
        %750 = vrot.lane.b32.xlu0 %v716, 32
        %v751 = vpop.permute.xlu0 %750
        %752 = vrot.lane.b32.xlu0 %v720, 32
        %v753 = vpop.permute.xlu0 %752
        %vm754 = vcmp.lt.s32.totalorder %v639, 32
        %v755 = vsel %vm754, %v747, %v751
        %v756 = vsel %vm754, %v749, %v753
        %v757 = vsel %vm754, %v751, %v747
        %v758 = vsel %vm754, %v753, %v749
        %v759 = vld [vmem:[%s2 + $0x10] sm:$0xc0]
        %v760 = vld [vmem:[%s2 + $0x18] sm:$0xc0]
        %v761 = vld [vmem:[%s2 + $0x20] sm:$0xff]
        %v762 = vld [vmem:[%s2 + $0x28] sm:$0xff]
        %v763 = vld [vmem:[%s2 + $0x30] sm:$0xf]
        %v764 = vld [vmem:[%s2 + $0x38] sm:$0xf]
        %v771 = vrot.slane %v759, 6
        %v772 = vrot.slane %v761, 6
        %v773 = vsel %vm708, %v771, %v772
        %v774 = vrot.slane %v760, 6
        %v775 = vrot.slane %v762, 6
        %v776 = vsel %vm708, %v774, %v775
        %v777 = vrot.slane %v763, 6
        %v778 = vsel %vm708, %v772, %v777
        %v779 = vrot.slane %v764, 6
        %v780 = vsel %vm708, %v775, %v779
        %v785 = vmul.f32 %v757, %v773
        %v786 = vmul.f32 %v755, %v776
        %v787 = vmul.f32 %v758, %v778
        %v788 = vmul.f32 %v756, %v780
        %v789 = vadd.f32 %v742, %v785
        %v790 = vadd.f32 %v743, %v786
        %v791 = vadd.f32 %v744, %v787
        %v792 = vadd.f32 %v745, %v788
        %793 = vrot.lane.b32.xlu0 %v715, 16
        %v794 = vpop.permute.xlu0 %793
        %795 = vrot.lane.b32.xlu0 %v719, 16
        %v796 = vpop.permute.xlu0 %795
        %797 = vrot.lane.b32.xlu0 %v716, 16
        %v798 = vpop.permute.xlu0 %797
        %799 = vrot.lane.b32.xlu0 %v720, 16
        %v800 = vpop.permute.xlu0 %799
        %vm801 = vcmp.lt.s32.totalorder %v639, 16
        %v802 = vsel %vm801, %v794, %v798
        %v803 = vsel %vm801, %v796, %v800
        %v804 = vsel %vm801, %v798, %v794
        %v805 = vsel %vm801, %v800, %v796
        %v806 = vld [vmem:[%s2 + $0x30] sm:$0xf0]
        %v807 = vld [vmem:[%s2 + $0x38] sm:$0xf0]
        %v808 = vld [vmem:[%s2 + $0x40] sm:$0xff]
        %v809 = vld [vmem:[%s2 + $0x48] sm:$0xff]
        %v810 = vld [vmem:[%s2 + $0x50] sm:$0x3]
        %v811 = vld [vmem:[%s2 + $0x58] sm:$0x3]
        %v818 = vrot.slane %v806, 4
        %v819 = vrot.slane %v808, 4
        %v820 = vsel %vm711, %v818, %v819
        %v821 = vrot.slane %v807, 4
        %v822 = vrot.slane %v809, 4
        %v823 = vsel %vm711, %v821, %v822
        %v824 = vrot.slane %v810, 4
        %v825 = vsel %vm711, %v819, %v824
        %v826 = vrot.slane %v811, 4
        %v827 = vsel %vm711, %v822, %v826
        %v832 = vmul.f32 %v804, %v820
        %v833 = vmul.f32 %v802, %v823
        %v834 = vmul.f32 %v805, %v825
        %v835 = vmul.f32 %v803, %v827
        %v836 = vadd.f32 %v789, %v832
        %v837 = vadd.f32 %v790, %v833
        %v838 = vadd.f32 %v791, %v834
        %v839 = vadd.f32 %v792, %v835
        %v840 = vld [vmem:[%s2 + $0x50] sm:$0xfc]
        %v841 = vld [vmem:[%s2 + $0x58] sm:$0xfc]
        %v842 = vld [vmem:[%s2 + $0x60] sm:$0xff]
        %v843 = vld [vmem:[%s2 + $0x68] sm:$0xff]
        %v848 = vrot.slane %v840, 2
        %v849 = vrot.slane %v842, 2
        %v850 = vsel %vm714, %v848, %v849
        %v851 = vrot.slane %v841, 2
        %v852 = vrot.slane %v843, 2
        %v853 = vsel %vm714, %v851, %v852
        %v858 = vmul.f32 %v715, %v850
        %v859 = vmul.f32 %v716, %v853
        %v860 = vmul.f32 %v719, %v849
        %v861 = vmul.f32 %v720, %v852
        %v862 = vadd.f32 %v836, %v858
        %v863 = vadd.f32 %v837, %v859
        %v864 = vadd.f32 %v838, %v860
        %v865 = vadd.f32 %v839, %v861
        %866 = vrot.lane.b32.xlu0 %v715, 112
        %v867 = vpop.permute.xlu0 %866
        %868 = vrot.lane.b32.xlu0 %v719, 112
        %v869 = vpop.permute.xlu0 %868
        %870 = vrot.lane.b32.xlu0 %v716, 112
        %v871 = vpop.permute.xlu0 %870
        %872 = vrot.lane.b32.xlu0 %v720, 112
        %v873 = vpop.permute.xlu0 %872
        %vm874 = vcmp.lt.s32.totalorder %v639, 112
        %v875 = vsel %vm874, %v867, %v871
        %v876 = vsel %vm874, %v869, %v873
        %v877 = vsel %vm874, %v871, %v867
        %v878 = vsel %vm874, %v873, %v869
        %v879 = vld [vmem:[%s2 + $0x70] sm:$0xff]
        %v880 = vld [vmem:[%s2 + $0x78] sm:$0xff]
        %v881 = vld [vmem:[%s2 + $0x80] sm:$0x3f]
        %v882 = vld [vmem:[%s2 + $0x88] sm:$0x3f]
        %v883 = vmul.f32 %v875, %v879
        %v884 = vmul.f32 %v877, %v880
        %v885 = vmul.f32 %v876, %v881
        %v886 = vmul.f32 %v878, %v882
        %v887 = vadd.f32 %v862, %v883
        %v888 = vadd.f32 %v863, %v884
        %v889 = vadd.f32 %v864, %v885
        %v890 = vadd.f32 %v865, %v886
        %891 = vrot.lane.b32.xlu0 %v715, 96
        %v892 = vpop.permute.xlu0 %891
        %893 = vrot.lane.b32.xlu0 %v719, 96
        %v894 = vpop.permute.xlu0 %893
        %895 = vrot.lane.b32.xlu0 %v716, 96
        %v896 = vpop.permute.xlu0 %895
        %897 = vrot.lane.b32.xlu0 %v720, 96
        %v898 = vpop.permute.xlu0 %897
        %vm899 = vcmp.lt.s32.totalorder %v639, 96
        %v900 = vsel %vm899, %v892, %v896
        %v901 = vsel %vm899, %v894, %v898
        %v902 = vsel %vm899, %v896, %v892
        %v903 = vsel %vm899, %v898, %v894
        %v904 = vld [vmem:[%s2 + $0x80] sm:$0xc0]
        %v905 = vld [vmem:[%s2 + $0x88] sm:$0xc0]
        %v906 = vld [vmem:[%s2 + $0x90] sm:$0xff]
        %v907 = vld [vmem:[%s2 + $0x98] sm:$0xff]
        %v908 = vld [vmem:[%s2 + $0xa0] sm:$0xf]
        %v909 = vld [vmem:[%s2 + $0xa8] sm:$0xf]
        %v916 = vrot.slane %v904, 6
        %v917 = vrot.slane %v906, 6
        %v918 = vsel %vm708, %v916, %v917
        %v919 = vrot.slane %v905, 6
        %v920 = vrot.slane %v907, 6
        %v921 = vsel %vm708, %v919, %v920
        %v922 = vrot.slane %v908, 6
        %v923 = vsel %vm708, %v917, %v922
        %v924 = vrot.slane %v909, 6
        %v925 = vsel %vm708, %v920, %v924
        %v930 = vmul.f32 %v900, %v918
        %v931 = vmul.f32 %v902, %v921
        %v932 = vmul.f32 %v901, %v923
        %v933 = vmul.f32 %v903, %v925
        %v934 = vadd.f32 %v887, %v930
        %v935 = vadd.f32 %v888, %v931
        %v936 = vadd.f32 %v889, %v932
        %v937 = vadd.f32 %v890, %v933
        %938 = vrot.lane.b32.xlu0 %v715, 80
        %v939 = vpop.permute.xlu0 %938
        %940 = vrot.lane.b32.xlu0 %v719, 80
        %v941 = vpop.permute.xlu0 %940
        %942 = vrot.lane.b32.xlu0 %v716, 80
        %v943 = vpop.permute.xlu0 %942
        %944 = vrot.lane.b32.xlu0 %v720, 80
        %v945 = vpop.permute.xlu0 %944
        %vm946 = vcmp.lt.s32.totalorder %v639, 80
        %v947 = vsel %vm946, %v939, %v943
        %v948 = vsel %vm946, %v941, %v945
        %v949 = vsel %vm946, %v943, %v939
        %v950 = vsel %vm946, %v945, %v941
        %v951 = vld [vmem:[%s2 + $0xa0] sm:$0xf0]
        %v952 = vld [vmem:[%s2 + $0xa8] sm:$0xf0]
        %v953 = vld [vmem:[%s2 + $0xb0] sm:$0xff]
        %v954 = vld [vmem:[%s2 + $0xb8] sm:$0xff]
        %v955 = vld [vmem:[%s2 + $0xc0] sm:$0x3]
        %v956 = vld [vmem:[%s2 + $0xc8] sm:$0x3]
        %v963 = vrot.slane %v951, 4
        %v964 = vrot.slane %v953, 4
        %v965 = vsel %vm711, %v963, %v964
        %v966 = vrot.slane %v952, 4
        %v967 = vrot.slane %v954, 4
        %v968 = vsel %vm711, %v966, %v967
        %v969 = vrot.slane %v955, 4
        %v970 = vsel %vm711, %v964, %v969
        %v971 = vrot.slane %v956, 4
        %v972 = vsel %vm711, %v967, %v971
        %v977 = vmul.f32 %v947, %v965
        %v978 = vmul.f32 %v949, %v968
        %v979 = vmul.f32 %v948, %v970
        %v980 = vmul.f32 %v950, %v972
        %v981 = vadd.f32 %v934, %v977
        %v982 = vadd.f32 %v935, %v978
        %v983 = vadd.f32 %v936, %v979
        %v984 = vadd.f32 %v937, %v980
        %v985 = vsel %vm714, %v983, 0.0
        %v986 = vadd.f32 %v981, %v985
        %v987 = vrot.slane %v986, 4
        %v988 = vadd.f32 %v986, %v987
        %v989 = vrot.slane %v988, 2
        %v990 = vadd.f32 %v988, %v989
        %v991 = vrot.slane %v990, 1
        %v992 = vadd.f32 %v990, %v991
        %v993 = vsel %vm714, %v984, 0.0
        %v994 = vadd.f32 %v982, %v993
        %v995 = vrot.slane %v994, 4
        %v996 = vadd.f32 %v994, %v995
        %v997 = vrot.slane %v996, 2
        %v998 = vadd.f32 %v996, %v997
        %v999 = vrot.slane %v998, 1
        %v1000 = vadd.f32 %v998, %v999
        %v1001 = vxor.u32 %v992, 2147483648
        %v1002 = vxor.u32 %v1000, 2147483648
        %v1003 = vmul.f32 %v1001, 1.442695
        %v1004 = vpow.pop %v1003
        %v1005 = vmul.f32 %v1002, 1.442695
        %v1006 = vpow.pop %v1005
        %v1007 = vadd.f32 %v1004, 1.0
        %v1008 = vadd.f32 %v1006, 1.0
        %v1009 = vrcp.pop %v1007
        %v1010 = vmul.f32 1.0, %v1009
        %v1011 = vrcp.pop %v1008
        %v1012 = vmul.f32 1.0, %v1011
        %v1013 = vadd.f32 %v1010, 1.0
        %v1014 = vadd.f32 %v1012, 1.0
        %v1015 = vmul.f32 %v558, %v1013
        %v1016 = vmul.f32 %v559, %v1014
        %v1017 = vmul.f32 %v560, %v1013
        %v1018 = vmul.f32 %v561, %v1014
        %v1019 = vmul.f32 %v562, %v1013
        %v1020 = vmul.f32 %v563, %v1014
        %v1021 = vmul.f32 %v564, %v1013
        %v1022 = vmul.f32 %v565, %v1014
        %v1023 = vmul.f32 %v566, %v1013
        %v1024 = vmul.f32 %v567, %v1014
        %v1025 = vmul.f32 %v568, %v1013
        %v1026 = vmul.f32 %v569, %v1014
        %v1027 = vmul.f32 %v570, %v1013
        %v1028 = vmul.f32 %v571, %v1014
        %v1029 = vmul.f32 %v572, %v1013
        %v1030 = vmul.f32 %v573, %v1014
        %v1031 = vpack.c.bf16 %v1017, %v1015
        %v1032 = vpack.c.bf16 %v1018, %v1016
        %v1033 = vpack.c.bf16 %v1021, %v1019
        %v1034 = vpack.c.bf16 %v1022, %v1020
        %v1035 = vpack.c.bf16 %v1025, %v1023
        %v1036 = vpack.c.bf16 %v1026, %v1024
        %v1037 = vpack.c.bf16 %v1029, %v1027
        %v1038 = vpack.c.bf16 %v1030, %v1028
        %v1039 = vld [vmem:[#allocation2] sm:$0xf]
        %v1040 = vld [vmem:[#allocation2 + $0x4] sm:$0xf]
        %v1041 = vld [vmem:[#allocation2 + $0x8] sm:$0xf]
        %v1042 = vld [vmem:[#allocation2 + $0xc] sm:$0xf]
        %v1047 = vunpack.c.l.b16 %v1039
        %v1048 = vunpack.c.l.b16 %v1040
        %v1049 = vunpack.c.l.b16 %v1041
        %v1050 = vunpack.c.l.b16 %v1042
        %v1051 = vpack.c.b16 %v1048, %v1047
        %v1052 = vpack.c.b16 %v1050, %v1049
        %vm1053 = vcmask 523264
        %v1055 = vsel %vm1053, %v1051, 0
        %v1058 = vsel %vm1053, %v1052, 0
        %1060 = vmatprep.subr.bf16.mxu0 %v1032
        %1061 = vmatpush1.bf16.msra.mxu0 %v1031
        %1062 = vmatprep.subr.bf16.mxu0 %v1034
        %1063 = vmatpush1.bf16.msra.mxu0 %v1033
        %1064 = vmatprep.subr.bf16.mxu0 %v1036
        %1065 = vmatpush1.bf16.msra.mxu0 %v1035
        %1066 = vmatprep.subr.bf16.mxu0 %v1038
        %1067 = vmatpush1.bf16.msra.mxu0 %v1037
        %1068 = vmatprep.subr.bf16.mxu0 0
        %1069 = vmatpush1.bf16.msra.mxu0 0
        %1070 = vmatprep.subr.bf16.mxu0 0
        %1071 = vmatpush1.bf16.msra.mxu0 0
        %1072 = vmatprep.subr.bf16.mxu0 0
        %1073 = vmatpush1.bf16.msra.mxu0 0
        %1074 = vmatprep.subr.bf16.mxu0 0
        %1075 = vmatpush1.bf16.msra.mxu0 0
        %1076 = vmatprep.subr.bf16.mxu0 0
        %1077 = vmatpush1.bf16.msra.mxu0 0
        %1078 = vmatprep.subr.bf16.mxu0 0
        %1079 = vmatpush1.bf16.msra.mxu0 0
        %1080 = vmatprep.subr.bf16.mxu0 0
        %1081 = vmatpush1.bf16.msra.mxu0 0
        %1082 = vmatprep.subr.bf16.mxu0 0
        %1083 = vmatpush1.bf16.msra.mxu0 0
        %1084 = vmatprep.subr.bf16.mxu0 0
        %1085 = vmatpush1.bf16.msra.mxu0 0
        %1086 = vmatprep.subr.bf16.mxu0 0
        %1087 = vmatpush1.bf16.msra.mxu0 0
        %1088 = vmatprep.subr.bf16.mxu0 0
        %1089 = vmatpush1.bf16.msra.mxu0 0
        %1090 = vmatprep.subr.bf16.mxu0 0
        %1091 = vmatpush1.bf16.msra.mxu0 0
        %1092 = vmatprep.mubr.bf16.mxu0 0
        %1093 = vmatmul.mubr.bf16.gmra.mrb[0].mxu0 %v1055
        %v1094 = vpop.f32.mrb[0].mxu0
        %v1095 = vadd.f32 0.0, %v1094
        %v1096 = vpop.f32.mrb[0].mxu0
        %v1097 = vadd.f32 0.0, %v1096
        %v1098 = vpop.f32.mrb[0].mxu0
        %v1099 = vadd.f32 0.0, %v1098
        %v1100 = vpop.f32.mrb[0].mxu0
        %v1101 = vadd.f32 0.0, %v1100
        %1102 = vmatprep.mubr.bf16.mxu0 0
        %1103 = vmatmul.mubr.bf16.gmra.mrb[0].mxu0 %v1058
        %v1104 = vpop.f32.mrb[0].mxu0
        %v1105 = vadd.f32 0.0, %v1104
        %v1106 = vpop.f32.mrb[0].mxu0
        %v1107 = vadd.f32 0.0, %v1106
        %v1108 = vpop.f32.mrb[0].mxu0
        %v1109 = vadd.f32 0.0, %v1108
        %v1110 = vpop.f32.mrb[0].mxu0
        %v1111 = vadd.f32 0.0, %v1110
        %1112 = vdwg.mxu0
        %v1113 = vadd.f32 %v1095, %v1097
        %1114 = vadd.xlane.f32.xlu0 %v1113
        %v1115 = vpop.xlane.xlu0 %1114
        %v1116 = vadd.f32 %v1099, %v1101
        %1117 = vadd.xlane.f32.xlu0 %v1116
        %v1118 = vpop.xlane.xlu0 %1117
        %v1119 = vadd.f32 %v1105, %v1107
        %1120 = vadd.xlane.f32.xlu0 %v1119
        %v1121 = vpop.xlane.xlu0 %1120
        %v1122 = vadd.f32 %v1109, %v1111
        %1123 = vadd.xlane.f32.xlu0 %v1122
        %v1124 = vpop.xlane.xlu0 %1123
        %v1125 = vrcp.pop 256.0
        %v1126 = vmul.f32 %v1115, %v1125
        %v1127 = vmul.f32 %v1118, %v1125
        %v1128 = vmul.f32 %v1121, %v1125
        %v1129 = vmul.f32 %v1124, %v1125
        %v1130 = vmul.f32 %v1095, %v1095
        %v1131 = vmul.f32 %v1097, %v1097
        %v1132 = vmul.f32 %v1099, %v1099
        %v1133 = vmul.f32 %v1101, %v1101
        %v1134 = vmul.f32 %v1105, %v1105
        %v1135 = vmul.f32 %v1107, %v1107
        %v1136 = vmul.f32 %v1109, %v1109
        %v1137 = vmul.f32 %v1111, %v1111
        %v1138 = vadd.f32 %v1130, %v1131
        %1139 = vadd.xlane.f32.xlu0 %v1138
        %v1140 = vpop.xlane.xlu0 %1139
        %v1141 = vadd.f32 %v1132, %v1133
        %1142 = vadd.xlane.f32.xlu0 %v1141
        %v1143 = vpop.xlane.xlu0 %1142
        %v1144 = vadd.f32 %v1134, %v1135
        %1145 = vadd.xlane.f32.xlu0 %v1144
        %v1146 = vpop.xlane.xlu0 %1145
        %v1147 = vadd.f32 %v1136, %v1137
        %1148 = vadd.xlane.f32.xlu0 %v1147
        %v1149 = vpop.xlane.xlu0 %1148
        %v1150 = vmul.f32 %v1140, %v1125
        %v1151 = vmul.f32 %v1143, %v1125
        %v1152 = vmul.f32 %v1146, %v1125
        %v1153 = vmul.f32 %v1149, %v1125
        %v1154 = vmul.f32 %v1126, %v1126
        %v1155 = vmul.f32 %v1127, %v1127
        %v1156 = vmul.f32 %v1128, %v1128
        %v1157 = vmul.f32 %v1129, %v1129
        %v1158 = vsub.f32 %v1150, %v1154
        %v1159 = vsub.f32 %v1151, %v1155
        %v1160 = vsub.f32 %v1152, %v1156
        %v1161 = vsub.f32 %v1153, %v1157
        %v1162 = vmax.f32 %v1158, 0.0
        %v1163 = vmax.f32 %v1159, 0.0
        %v1164 = vmax.f32 %v1160, 0.0
        %v1165 = vmax.f32 %v1161, 0.0
        %v1166 = vadd.f32 %v1162, 1e-05
        %v1167 = vadd.f32 %v1163, 1e-05
        %v1168 = vadd.f32 %v1164, 1e-05
        %v1169 = vadd.f32 %v1165, 1e-05
        %v1170 = vrsqrt.pop %v1166
        %v1171 = vrsqrt.pop %v1167
        %v1172 = vrsqrt.pop %v1168
        %v1173 = vrsqrt.pop %v1169
        %v1174 = vsub.f32 %v1095, %v1126
        %v1175 = vsub.f32 %v1097, %v1126
        %v1176 = vsub.f32 %v1099, %v1127
        %v1177 = vsub.f32 %v1101, %v1127
        %v1178 = vsub.f32 %v1105, %v1128
        %v1179 = vsub.f32 %v1107, %v1128
        %v1180 = vsub.f32 %v1109, %v1129
        %v1181 = vsub.f32 %v1111, %v1129
        %v1182 = vmul.f32 %v1174, %v1170
        %v1183 = vmul.f32 %v1175, %v1170
        %v1184 = vmul.f32 %v1176, %v1171
        %v1185 = vmul.f32 %v1177, %v1171
        %v1186 = vmul.f32 %v1178, %v1172
        %v1187 = vmul.f32 %v1179, %v1172
        %v1188 = vmul.f32 %v1180, %v1173
        %v1189 = vmul.f32 %v1181, %v1173
        %v1190 = vld [vmem:[%s5] sm:$0xff]
        %v1191 = vld [vmem:[%s5 + $0x8] sm:$0xff]
        %v1192 = vld [vmem:[%s5 + $0x10] sm:$0xff]
        %v1193 = vld [vmem:[%s5 + $0x18] sm:$0xff]
        %1195 = vset.pattern.permute.xlu0 0
        %1196 = vperm.xlu0 %1195, %v1190
        %v1197 = vpop.permute.xlu0 %1196
        %1200 = vset.pattern.permute.xlu0 0
        %1201 = vperm.xlu0 %1200, %v1191
        %v1202 = vpop.permute.xlu0 %1201
        %1205 = vset.pattern.permute.xlu0 0
        %1206 = vperm.xlu0 %1205, %v1192
        %v1207 = vpop.permute.xlu0 %1206
        %1210 = vset.pattern.permute.xlu0 0
        %1211 = vperm.xlu0 %1210, %v1193
        %v1212 = vpop.permute.xlu0 %1211
        %v1214 = vmul.f32 %v1182, %v1197
        %v1215 = vmul.f32 %v1183, %v1197
        %v1216 = vmul.f32 %v1184, %v1202
        %v1217 = vmul.f32 %v1185, %v1202
        %v1218 = vmul.f32 %v1186, %v1207
        %v1219 = vmul.f32 %v1187, %v1207
        %v1220 = vmul.f32 %v1188, %v1212
        %v1221 = vmul.f32 %v1189, %v1212
        %v1222 = vld [vmem:[%s6] sm:$0xff]
        %v1223 = vld [vmem:[%s6 + $0x8] sm:$0xff]
        %v1224 = vld [vmem:[%s6 + $0x10] sm:$0xff]
        %v1225 = vld [vmem:[%s6 + $0x18] sm:$0xff]
        %1227 = vset.pattern.permute.xlu0 0
        %1228 = vperm.xlu0 %1227, %v1222
        %v1229 = vpop.permute.xlu0 %1228
        %1232 = vset.pattern.permute.xlu0 0
        %1233 = vperm.xlu0 %1232, %v1223
        %v1234 = vpop.permute.xlu0 %1233
        %1237 = vset.pattern.permute.xlu0 0
        %1238 = vperm.xlu0 %1237, %v1224
        %v1239 = vpop.permute.xlu0 %1238
        %1242 = vset.pattern.permute.xlu0 0
        %1243 = vperm.xlu0 %1242, %v1225
        %v1244 = vpop.permute.xlu0 %1243
        %v1246 = vadd.f32 %v1214, %v1229
        %v1247 = vadd.f32 %v1215, %v1229
        %v1248 = vadd.f32 %v1216, %v1234
        %v1249 = vadd.f32 %v1217, %v1234
        %v1250 = vadd.f32 %v1218, %v1239
        %v1251 = vadd.f32 %v1219, %v1239
        %v1252 = vadd.f32 %v1220, %v1244
        %v1253 = vadd.f32 %v1221, %v1244
        %1254 = vst [vmem:[%s546] sm:$0xff] %v1246
        %1255 = vst [vmem:[%s546 + $0x8] sm:$0xff] %v1247
        %1256 = vst [vmem:[%s546 + $0x10] sm:$0xff] %v1248
        %1257 = vst [vmem:[%s546 + $0x18] sm:$0xff] %v1249
        %1258 = vst [vmem:[%s546 + $0x20] sm:$0xff] %v1250
        %1259 = vst [vmem:[%s546 + $0x28] sm:$0xff] %v1251
        %1260 = vst [vmem:[%s546 + $0x30] sm:$0xff] %v1252
        %1261 = vst [vmem:[%s546 + $0x38] sm:$0xff] %v1253
        %v1262 = vld [vmem:[#allocation6] sm:$0xf]
        %v1263 = vld [vmem:[#allocation6 + $0x4] sm:$0xf]
        %v1264 = vld [vmem:[#allocation6 + $0x8] sm:$0xf]
        %v1265 = vld [vmem:[#allocation6 + $0xc] sm:$0xf]
        %v1266 = vld [vmem:[%s541] sm:$0xff]
        %v1267 = vld [vmem:[%s541 + $0x8] sm:$0xff]
        %v1268 = vld [vmem:[%s541 + $0x10] sm:$0xff]
        %v1269 = vld [vmem:[%s541 + $0x18] sm:$0xff]
        %v1270 = vld [vmem:[%s541 + $0x20] sm:$0xff]
        %v1271 = vld [vmem:[%s541 + $0x28] sm:$0xff]
        %v1272 = vld [vmem:[%s541 + $0x30] sm:$0xff]
        %v1273 = vld [vmem:[%s541 + $0x38] sm:$0xff]
        %v1274 = vld [vmem:[%s541 + $0x40] sm:$0xff]
        %v1275 = vld [vmem:[%s541 + $0x48] sm:$0xff]
        %v1276 = vld [vmem:[%s541 + $0x50] sm:$0xff]
        %v1277 = vld [vmem:[%s541 + $0x58] sm:$0xff]
        %v1282 = vunpack.c.l.b16 %v1262
        %v1283 = vunpack.c.l.b16 %v1263
        %v1284 = vunpack.c.l.b16 %v1264
        %v1285 = vunpack.c.l.b16 %v1265
        %v1286 = vpack.c.b16 %v1283, %v1282
        %v1287 = vpack.c.b16 %v1285, %v1284
        %v1300 = vunpack.c.l.b16 %v1266
        %v1301 = vunpack.c.h.b16 %v1266
        %v1302 = vunpack.c.l.b16 %v1267
        %v1303 = vunpack.c.h.b16 %v1267
        %v1304 = vunpack.c.l.b16 %v1268
        %v1305 = vunpack.c.h.b16 %v1268
        %v1306 = vunpack.c.l.b16 %v1269
        %v1307 = vunpack.c.h.b16 %v1269
        %v1308 = vunpack.c.l.b16 %v1270
        %v1309 = vunpack.c.h.b16 %v1270
        %v1310 = vunpack.c.l.b16 %v1271
        %v1311 = vunpack.c.h.b16 %v1271
        %v1312 = vunpack.c.l.b16 %v1272
        %v1313 = vunpack.c.h.b16 %v1272
        %v1314 = vunpack.c.l.b16 %v1273
        %v1315 = vunpack.c.h.b16 %v1273
        %v1316 = vunpack.c.l.b16 %v1274
        %v1317 = vunpack.c.h.b16 %v1274
        %v1318 = vunpack.c.l.b16 %v1275
        %v1319 = vunpack.c.h.b16 %v1275
        %v1320 = vunpack.c.l.b16 %v1276
        %v1321 = vunpack.c.h.b16 %v1276
        %v1322 = vunpack.c.l.b16 %v1277
        %v1323 = vunpack.c.h.b16 %v1277
        %v1324 = vpack.c.b16 %v1302, %v1300
        %v1325 = vpack.c.b16 %v1303, %v1301
        %v1326 = vpack.c.b16 %v1306, %v1304
        %v1327 = vpack.c.b16 %v1307, %v1305
        %v1328 = vpack.c.b16 %v1310, %v1308
        %v1329 = vpack.c.b16 %v1311, %v1309
        %v1330 = vpack.c.b16 %v1314, %v1312
        %v1331 = vpack.c.b16 %v1315, %v1313
        %v1332 = vpack.c.b16 %v1318, %v1316
        %v1333 = vpack.c.b16 %v1319, %v1317
        %v1334 = vpack.c.b16 %v1322, %v1320
        %v1335 = vpack.c.b16 %v1323, %v1321
        %vm1348 = vcmask 785408
        %v1350 = vsel %vm1348, %v1286, 0
        %v1353 = vsel %vm1348, %v1287, 0
        %1355 = vmatprep.subr.bf16.mxu0 %v1325
        %1356 = vmatpush1.bf16.msra.mxu0 %v1324
        %1357 = vmatprep.subr.bf16.mxu0 %v1327
        %1358 = vmatpush1.bf16.msra.mxu0 %v1326
        %1359 = vmatprep.subr.bf16.mxu0 %v1329
        %1360 = vmatpush1.bf16.msra.mxu0 %v1328
        %1361 = vmatprep.subr.bf16.mxu0 %v1331
        %1362 = vmatpush1.bf16.msra.mxu0 %v1330
        %1363 = vmatprep.subr.bf16.mxu0 %v1333
        %1364 = vmatpush1.bf16.msra.mxu0 %v1332
        %1365 = vmatprep.subr.bf16.mxu0 %v1335
        %1366 = vmatpush1.bf16.msra.mxu0 %v1334
        %1367 = vmatprep.subr.bf16.mxu0 0
        %1368 = vmatpush1.bf16.msra.mxu0 0
        %1369 = vmatprep.subr.bf16.mxu0 0
        %1370 = vmatpush1.bf16.msra.mxu0 0
        %1371 = vmatprep.subr.bf16.mxu0 0
        %1372 = vmatpush1.bf16.msra.mxu0 0
        %1373 = vmatprep.subr.bf16.mxu0 0
        %1374 = vmatpush1.bf16.msra.mxu0 0
        %1375 = vmatprep.subr.bf16.mxu0 0
        %1376 = vmatpush1.bf16.msra.mxu0 0
        %1377 = vmatprep.subr.bf16.mxu0 0
        %1378 = vmatpush1.bf16.msra.mxu0 0
        %1379 = vmatprep.subr.bf16.mxu0 0
        %1380 = vmatpush1.bf16.msra.mxu0 0
        %1381 = vmatprep.subr.bf16.mxu0 0
        %1382 = vmatpush1.bf16.msra.mxu0 0
        %1383 = vmatprep.subr.bf16.mxu0 0
        %1384 = vmatpush1.bf16.msra.mxu0 0
        %1385 = vmatprep.subr.bf16.mxu0 0
        %1386 = vmatpush1.bf16.msra.mxu0 0
        %1387 = vmatprep.mubr.bf16.mxu0 0
        %1388 = vmatmul.mubr.bf16.gmra.mrb[0].mxu0 %v1350
        %v1389 = vpop.f32.mrb[0].mxu0
        %v1390 = vadd.f32 0.0, %v1389
        %v1391 = vpop.f32.mrb[0].mxu0
        %v1392 = vadd.f32 0.0, %v1391
        %v1393 = vpop.f32.mrb[0].mxu0
        %v1394 = vadd.f32 0.0, %v1393
        %v1395 = vpop.f32.mrb[0].mxu0
        %v1396 = vadd.f32 0.0, %v1395
        %1397 = vmatprep.mubr.bf16.mxu0 0
        %1398 = vmatmul.mubr.bf16.gmra.mrb[0].mxu0 %v1353
        %v1399 = vpop.f32.mrb[0].mxu0
        %v1400 = vadd.f32 0.0, %v1399
        %v1401 = vpop.f32.mrb[0].mxu0
        %v1402 = vadd.f32 0.0, %v1401
        %v1403 = vpop.f32.mrb[0].mxu0
        %v1404 = vadd.f32 0.0, %v1403
        %v1405 = vpop.f32.mrb[0].mxu0
        %v1406 = vadd.f32 0.0, %v1405
        %1407 = vdwg.mxu0
        %v1408 = vmax.f32 %v1390, 0.0
        %v1409 = vmax.f32 %v1392, 0.0
        %v1410 = vmax.f32 %v1394, 0.0
        %v1411 = vmax.f32 %v1396, 0.0
        %v1412 = vmax.f32 %v1400, 0.0
        %v1413 = vmax.f32 %v1402, 0.0
        %v1414 = vmax.f32 %v1404, 0.0
        %v1415 = vmax.f32 %v1406, 0.0
        %1416 = vst [vmem:[%s551] sm:$0xff] %v1408
        %1417 = vst [vmem:[%s551 + $0x8] sm:$0xff] %v1409
        %1418 = vst [vmem:[%s551 + $0x10] sm:$0xff] %v1410
        %1419 = vst [vmem:[%s551 + $0x18] sm:$0xff] %v1411
        %1420 = vst [vmem:[%s551 + $0x20] sm:$0xff] %v1412
        %1421 = vst [vmem:[%s551 + $0x28] sm:$0xff] %v1413
        %1422 = vst [vmem:[%s551 + $0x30] sm:$0xff] %v1414
        %1423 = vst [vmem:[%s551 + $0x38] sm:$0xff] %v1415
        %v1424 = vpack.c.bf16 %v1248, %v1246
        %v1425 = vpack.c.bf16 %v1249, %v1247
        %v1426 = vpack.c.bf16 %v1252, %v1250
        %v1427 = vpack.c.bf16 %v1253, %v1251
        %v1428 = vpack.c.bf16 %v1410, %v1408
        %v1429 = vpack.c.bf16 %v1411, %v1409
        %v1430 = vpack.c.bf16 %v1414, %v1412
        %v1431 = vpack.c.bf16 %v1415, %v1413
        %v1432 = vld [vmem:[%s9] sm:$0xf]
        %v1433 = vld [vmem:[%s9 + $0x4] sm:$0xf]
        %v1434 = vld [vmem:[%s9 + $0x8] sm:$0xf]
        %v1435 = vld [vmem:[%s9 + $0xc] sm:$0xf]
        %v1440 = vunpack.c.l.b16 %v1432
        %v1441 = vunpack.c.l.b16 %v1433
        %v1442 = vunpack.c.l.b16 %v1434
        %v1443 = vunpack.c.l.b16 %v1435
        %v1444 = vpack.c.b16 %v1441, %v1440
        %v1445 = vpack.c.b16 %v1443, %v1442
        %v1447 = vsel %vm1053, %v1444, 0
        %v1450 = vsel %vm1053, %v1445, 0
        %1452 = vmatprep.subr.bf16.mxu0 %v1425
        %1453 = vmatpush1.bf16.msra.mxu0 %v1424
        %1454 = vmatprep.subr.bf16.mxu0 %v1427
        %1455 = vmatpush1.bf16.msra.mxu0 %v1426
        %1456 = vmatprep.subr.bf16.mxu0 %v1429
        %1457 = vmatpush1.bf16.msra.mxu0 %v1428
        %1458 = vmatprep.subr.bf16.mxu0 %v1431
        %1459 = vmatpush1.bf16.msra.mxu0 %v1430
        %1460 = vmatprep.subr.bf16.mxu0 0
        %1461 = vmatpush1.bf16.msra.mxu0 0
        %1462 = vmatprep.subr.bf16.mxu0 0
        %1463 = vmatpush1.bf16.msra.mxu0 0
        %1464 = vmatprep.subr.bf16.mxu0 0
        %1465 = vmatpush1.bf16.msra.mxu0 0
        %1466 = vmatprep.subr.bf16.mxu0 0
        %1467 = vmatpush1.bf16.msra.mxu0 0
        %1468 = vmatprep.subr.bf16.mxu0 0
        %1469 = vmatpush1.bf16.msra.mxu0 0
        %1470 = vmatprep.subr.bf16.mxu0 0
        %1471 = vmatpush1.bf16.msra.mxu0 0
        %1472 = vmatprep.subr.bf16.mxu0 0
        %1473 = vmatpush1.bf16.msra.mxu0 0
        %1474 = vmatprep.subr.bf16.mxu0 0
        %1475 = vmatpush1.bf16.msra.mxu0 0
        %1476 = vmatprep.subr.bf16.mxu0 0
        %1477 = vmatpush1.bf16.msra.mxu0 0
        %1478 = vmatprep.subr.bf16.mxu0 0
        %1479 = vmatpush1.bf16.msra.mxu0 0
        %1480 = vmatprep.subr.bf16.mxu0 0
        %1481 = vmatpush1.bf16.msra.mxu0 0
        %1482 = vmatprep.subr.bf16.mxu0 0
        %1483 = vmatpush1.bf16.msra.mxu0 0
        %1484 = vmatprep.mubr.bf16.mxu0 0
        %1485 = vmatmul.mubr.bf16.gmra.mrb[0].mxu0 %v1447
        %v1486 = vpop.f32.mrb[0].mxu0
        %v1487 = vadd.f32 0.0, %v1486
        %v1488 = vpop.f32.mrb[0].mxu0
        %v1489 = vadd.f32 0.0, %v1488
        %v1490 = vpop.f32.mrb[0].mxu0
        %v1491 = vadd.f32 0.0, %v1490
        %v1492 = vpop.f32.mrb[0].mxu0
        %v1493 = vadd.f32 0.0, %v1492
        %1494 = vmatprep.mubr.bf16.mxu0 0
        %1495 = vmatmul.mubr.bf16.gmra.mrb[0].mxu0 %v1450
        %v1496 = vpop.f32.mrb[0].mxu0
        %v1497 = vadd.f32 0.0, %v1496
        %v1498 = vpop.f32.mrb[0].mxu0
        %v1499 = vadd.f32 0.0, %v1498
        %v1500 = vpop.f32.mrb[0].mxu0
        %v1501 = vadd.f32 0.0, %v1500
        %v1502 = vpop.f32.mrb[0].mxu0
        %v1503 = vadd.f32 0.0, %v1502
        %1504 = vdwg.mxu0
        %1505 = vrot.lane.b32.xlu0 %v1487, 17
        %v1506 = vpop.permute.xlu0 %1505
        %1507 = vrot.lane.b32.xlu0 %v1491, 17
        %v1508 = vpop.permute.xlu0 %1507
        %1509 = vrot.lane.b32.xlu0 %v1497, 17
        %v1510 = vpop.permute.xlu0 %1509
        %1511 = vrot.lane.b32.xlu0 %v1501, 17
        %v1512 = vpop.permute.xlu0 %1511
        %1513 = vrot.lane.b32.xlu0 %v1489, 17
        %v1514 = vpop.permute.xlu0 %1513
        %1515 = vrot.lane.b32.xlu0 %v1493, 17
        %v1516 = vpop.permute.xlu0 %1515
        %1517 = vrot.lane.b32.xlu0 %v1499, 17
        %v1518 = vpop.permute.xlu0 %1517
        %1519 = vrot.lane.b32.xlu0 %v1503, 17
        %v1520 = vpop.permute.xlu0 %1519
        %vm1521 = vcmp.lt.s32.totalorder %v639, 17
        %v1522 = vsel %vm1521, %v1506, %v1514
        %v1523 = vsel %vm1521, %v1508, %v1516
        %v1524 = vsel %vm1521, %v1510, %v1518
        %v1525 = vsel %vm1521, %v1512, %v1520
        %v1526 = vsel %vm1521, %v1514, %v1506
        %v1527 = vsel %vm1521, %v1516, %v1508
        %v1528 = vsel %vm1521, %v1518, %v1510
        %v1529 = vsel %vm1521, %v1520, %v1512
        %v1530 = vld [vmem:[%s3] ss:$8 sm:$0x3]
        %v1532 = vlaneseq
        %v1533 = vshrl.u32 %v1532, 7
        %v1534 = vsub.s32 0, %v1533
        %v1535 = vrot.slane %v1530, %v1534
        %v1536 = vlaneseq
        %v1537 = vshrl.u32 %v1536, 7
        %v1538 = vsub.s32 1, %v1537
        %v1539 = vrot.slane %v1530, %v1538
        %v1542 = vmul.f32 %v1526, %v1535
        %v1543 = vmul.f32 %v1522, %v1539
        %v1544 = vmul.f32 %v1527, %v1535
        %v1545 = vmul.f32 %v1523, %v1539
        %v1546 = vmul.f32 %v1528, %v1535
        %v1547 = vmul.f32 %v1524, %v1539
        %v1548 = vmul.f32 %v1529, %v1535
        %v1549 = vmul.f32 %v1525, %v1539
        %v1550 = vpack.c.bf16 %v1544, %v1542
        %v1551 = vpack.c.bf16 %v1545, %v1543
        %v1552 = vpack.c.bf16 %v1548, %v1546
        %v1553 = vpack.c.bf16 %v1549, %v1547
        %1554 = vrot.lane.b32.xlu0 %v1487, 16
        %v1555 = vpop.permute.xlu0 %1554
        %1556 = vrot.lane.b32.xlu0 %v1491, 16
        %v1557 = vpop.permute.xlu0 %1556
        %1558 = vrot.lane.b32.xlu0 %v1497, 16
        %v1559 = vpop.permute.xlu0 %1558
        %1560 = vrot.lane.b32.xlu0 %v1501, 16
        %v1561 = vpop.permute.xlu0 %1560
        %1562 = vrot.lane.b32.xlu0 %v1489, 16
        %v1563 = vpop.permute.xlu0 %1562
        %1564 = vrot.lane.b32.xlu0 %v1493, 16
        %v1565 = vpop.permute.xlu0 %1564
        %1566 = vrot.lane.b32.xlu0 %v1499, 16
        %v1567 = vpop.permute.xlu0 %1566
        %1568 = vrot.lane.b32.xlu0 %v1503, 16
        %v1569 = vpop.permute.xlu0 %1568
        %v1570 = vsel %vm801, %v1555, %v1563
        %v1571 = vsel %vm801, %v1557, %v1565
        %v1572 = vsel %vm801, %v1559, %v1567
        %v1573 = vsel %vm801, %v1561, %v1569
        %v1574 = vsel %vm801, %v1563, %v1555
        %v1575 = vsel %vm801, %v1565, %v1557
        %v1576 = vsel %vm801, %v1567, %v1559
        %v1577 = vsel %vm801, %v1569, %v1561
        %s1578 = scalar_lea.vmem %s3, 1
        %v1579 = vld [vmem:[%s1578] ss:$8 sm:$0x3]
        %v1581 = vlaneseq
        %v1582 = vshrl.u32 %v1581, 7
        %v1583 = vsub.s32 0, %v1582
        %v1584 = vrot.slane %v1579, %v1583
        %v1585 = vlaneseq
        %v1586 = vshrl.u32 %v1585, 7
        %v1587 = vsub.s32 1, %v1586
        %v1588 = vrot.slane %v1579, %v1587
        %v1591 = vmul.f32 %v1574, %v1584
        %v1592 = vmul.f32 %v1570, %v1588
        %v1593 = vmul.f32 %v1575, %v1584
        %v1594 = vmul.f32 %v1571, %v1588
        %v1595 = vmul.f32 %v1576, %v1584
        %v1596 = vmul.f32 %v1572, %v1588
        %v1597 = vmul.f32 %v1577, %v1584
        %v1598 = vmul.f32 %v1573, %v1588
        %v1599 = vpack.c.bf16 %v1593, %v1591
        %v1600 = vpack.c.bf16 %v1594, %v1592
        %v1601 = vpack.c.bf16 %v1597, %v1595
        %v1602 = vpack.c.bf16 %v1598, %v1596
        %1603 = vrot.lane.b32.xlu0 %v1487, 15
        %v1604 = vpop.permute.xlu0 %1603
        %1605 = vrot.lane.b32.xlu0 %v1491, 15
        %v1606 = vpop.permute.xlu0 %1605
        %1607 = vrot.lane.b32.xlu0 %v1497, 15
        %v1608 = vpop.permute.xlu0 %1607
        %1609 = vrot.lane.b32.xlu0 %v1501, 15
        %v1610 = vpop.permute.xlu0 %1609
        %1611 = vrot.lane.b32.xlu0 %v1489, 15
        %v1612 = vpop.permute.xlu0 %1611
        %1613 = vrot.lane.b32.xlu0 %v1493, 15
        %v1614 = vpop.permute.xlu0 %1613
        %1615 = vrot.lane.b32.xlu0 %v1499, 15
        %v1616 = vpop.permute.xlu0 %1615
        %1617 = vrot.lane.b32.xlu0 %v1503, 15
        %v1618 = vpop.permute.xlu0 %1617
        %vm1619 = vcmp.lt.s32.totalorder %v639, 15
        %v1620 = vsel %vm1619, %v1604, %v1612
        %v1621 = vsel %vm1619, %v1606, %v1614
        %v1622 = vsel %vm1619, %v1608, %v1616
        %v1623 = vsel %vm1619, %v1610, %v1618
        %v1624 = vsel %vm1619, %v1612, %v1604
        %v1625 = vsel %vm1619, %v1614, %v1606
        %v1626 = vsel %vm1619, %v1616, %v1608
        %v1627 = vsel %vm1619, %v1618, %v1610
        %s1628 = scalar_lea.vmem %s3, 2
        %v1629 = vld [vmem:[%s1628] ss:$8 sm:$0x3]
        %v1631 = vlaneseq
        %v1632 = vshrl.u32 %v1631, 7
        %v1633 = vsub.s32 0, %v1632
        %v1634 = vrot.slane %v1629, %v1633
        %v1635 = vlaneseq
        %v1636 = vshrl.u32 %v1635, 7
        %v1637 = vsub.s32 1, %v1636
        %v1638 = vrot.slane %v1629, %v1637
        %v1641 = vmul.f32 %v1624, %v1634
        %v1642 = vmul.f32 %v1620, %v1638
        %v1643 = vmul.f32 %v1625, %v1634
        %v1644 = vmul.f32 %v1621, %v1638
        %v1645 = vmul.f32 %v1626, %v1634
        %v1646 = vmul.f32 %v1622, %v1638
        %v1647 = vmul.f32 %v1627, %v1634
        %v1648 = vmul.f32 %v1623, %v1638
        %v1649 = vpack.c.bf16 %v1643, %v1641
        %v1650 = vpack.c.bf16 %v1644, %v1642
        %v1651 = vpack.c.bf16 %v1647, %v1645
        %v1652 = vpack.c.bf16 %v1648, %v1646
        %1653 = vrot.lane.b32.xlu0 %v1487, 1
        %v1654 = vpop.permute.xlu0 %1653
        %1655 = vrot.lane.b32.xlu0 %v1491, 1
        %v1656 = vpop.permute.xlu0 %1655
        %1657 = vrot.lane.b32.xlu0 %v1497, 1
        %v1658 = vpop.permute.xlu0 %1657
        %1659 = vrot.lane.b32.xlu0 %v1501, 1
        %v1660 = vpop.permute.xlu0 %1659
        %1661 = vrot.lane.b32.xlu0 %v1489, 1
        %v1662 = vpop.permute.xlu0 %1661
        %1663 = vrot.lane.b32.xlu0 %v1493, 1
        %v1664 = vpop.permute.xlu0 %1663
        %1665 = vrot.lane.b32.xlu0 %v1499, 1
        %v1666 = vpop.permute.xlu0 %1665
        %1667 = vrot.lane.b32.xlu0 %v1503, 1
        %v1668 = vpop.permute.xlu0 %1667
        %v1669 = vsel %vm654, %v1654, %v1662
        %v1670 = vsel %vm654, %v1656, %v1664
        %v1671 = vsel %vm654, %v1658, %v1666
        %v1672 = vsel %vm654, %v1660, %v1668
        %v1673 = vsel %vm654, %v1662, %v1654
        %v1674 = vsel %vm654, %v1664, %v1656
        %v1675 = vsel %vm654, %v1666, %v1658
        %v1676 = vsel %vm654, %v1668, %v1660
        %s1677 = scalar_lea.vmem %s3, 3
        %v1678 = vld [vmem:[%s1677] ss:$8 sm:$0x3]
        %v1680 = vlaneseq
        %v1681 = vshrl.u32 %v1680, 7
        %v1682 = vsub.s32 0, %v1681
        %v1683 = vrot.slane %v1678, %v1682
        %v1684 = vlaneseq
        %v1685 = vshrl.u32 %v1684, 7
        %v1686 = vsub.s32 1, %v1685
        %v1687 = vrot.slane %v1678, %v1686
        %v1690 = vmul.f32 %v1673, %v1683
        %v1691 = vmul.f32 %v1669, %v1687
        %v1692 = vmul.f32 %v1674, %v1683
        %v1693 = vmul.f32 %v1670, %v1687
        %v1694 = vmul.f32 %v1675, %v1683
        %v1695 = vmul.f32 %v1671, %v1687
        %v1696 = vmul.f32 %v1676, %v1683
        %v1697 = vmul.f32 %v1672, %v1687
        %v1698 = vpack.c.bf16 %v1692, %v1690
        %v1699 = vpack.c.bf16 %v1693, %v1691
        %v1700 = vpack.c.bf16 %v1696, %v1694
        %v1701 = vpack.c.bf16 %v1697, %v1695
        %s1702 = scalar_lea.vmem %s3, 4
        %v1703 = vld [vmem:[%s1702] ss:$8 sm:$0x3]
        %v1705 = vlaneseq
        %v1706 = vshrl.u32 %v1705, 7
        %v1707 = vsub.s32 0, %v1706
        %v1708 = vrot.slane %v1703, %v1707
        %v1709 = vlaneseq
        %v1710 = vshrl.u32 %v1709, 7
        %v1711 = vsub.s32 1, %v1710
        %v1712 = vrot.slane %v1703, %v1711
        %v1715 = vmul.f32 %v1487, %v1708
        %v1716 = vmul.f32 %v1489, %v1712
        %v1717 = vmul.f32 %v1491, %v1708
        %v1718 = vmul.f32 %v1493, %v1712
        %v1719 = vmul.f32 %v1497, %v1708
        %v1720 = vmul.f32 %v1499, %v1712
        %v1721 = vmul.f32 %v1501, %v1708
        %v1722 = vmul.f32 %v1503, %v1712
        %v1723 = vpack.c.bf16 %v1717, %v1715
        %v1724 = vpack.c.bf16 %v1718, %v1716
        %v1725 = vpack.c.bf16 %v1721, %v1719
        %v1726 = vpack.c.bf16 %v1722, %v1720
        %1727 = vrot.lane.b32.xlu0 %v1487, 127
        %v1728 = vpop.permute.xlu0 %1727
        %1729 = vrot.lane.b32.xlu0 %v1491, 127
        %v1730 = vpop.permute.xlu0 %1729
        %1731 = vrot.lane.b32.xlu0 %v1497, 127
        %v1732 = vpop.permute.xlu0 %1731
        %1733 = vrot.lane.b32.xlu0 %v1501, 127
        %v1734 = vpop.permute.xlu0 %1733
        %1735 = vrot.lane.b32.xlu0 %v1489, 127
        %v1736 = vpop.permute.xlu0 %1735
        %1737 = vrot.lane.b32.xlu0 %v1493, 127
        %v1738 = vpop.permute.xlu0 %1737
        %1739 = vrot.lane.b32.xlu0 %v1499, 127
        %v1740 = vpop.permute.xlu0 %1739
        %1741 = vrot.lane.b32.xlu0 %v1503, 127
        %v1742 = vpop.permute.xlu0 %1741
        %v1743 = vsel %vm661, %v1728, %v1736
        %v1744 = vsel %vm661, %v1730, %v1738
        %v1745 = vsel %vm661, %v1732, %v1740
        %v1746 = vsel %vm661, %v1734, %v1742
        %v1747 = vsel %vm661, %v1736, %v1728
        %v1748 = vsel %vm661, %v1738, %v1730
        %v1749 = vsel %vm661, %v1740, %v1732
        %v1750 = vsel %vm661, %v1742, %v1734
        %s1751 = scalar_lea.vmem %s3, 5
        %v1752 = vld [vmem:[%s1751] ss:$8 sm:$0x3]
        %v1754 = vlaneseq
        %v1755 = vshrl.u32 %v1754, 7
        %v1756 = vsub.s32 0, %v1755
        %v1757 = vrot.slane %v1752, %v1756
        %v1758 = vlaneseq
        %v1759 = vshrl.u32 %v1758, 7
        %v1760 = vsub.s32 1, %v1759
        %v1761 = vrot.slane %v1752, %v1760
        %v1764 = vmul.f32 %v1743, %v1757
        %v1765 = vmul.f32 %v1747, %v1761
        %v1766 = vmul.f32 %v1744, %v1757
        %v1767 = vmul.f32 %v1748, %v1761
        %v1768 = vmul.f32 %v1745, %v1757
        %v1769 = vmul.f32 %v1749, %v1761
        %v1770 = vmul.f32 %v1746, %v1757
        %v1771 = vmul.f32 %v1750, %v1761
        %v1772 = vpack.c.bf16 %v1766, %v1764
        %v1773 = vpack.c.bf16 %v1767, %v1765
        %v1774 = vpack.c.bf16 %v1770, %v1768
        %v1775 = vpack.c.bf16 %v1771, %v1769
        %1776 = vrot.lane.b32.xlu0 %v1487, 113
        %v1777 = vpop.permute.xlu0 %1776
        %1778 = vrot.lane.b32.xlu0 %v1491, 113
        %v1779 = vpop.permute.xlu0 %1778
        %1780 = vrot.lane.b32.xlu0 %v1497, 113
        %v1781 = vpop.permute.xlu0 %1780
        %1782 = vrot.lane.b32.xlu0 %v1501, 113
        %v1783 = vpop.permute.xlu0 %1782
        %1784 = vrot.lane.b32.xlu0 %v1489, 113
        %v1785 = vpop.permute.xlu0 %1784
        %1786 = vrot.lane.b32.xlu0 %v1493, 113
        %v1787 = vpop.permute.xlu0 %1786
        %1788 = vrot.lane.b32.xlu0 %v1499, 113
        %v1789 = vpop.permute.xlu0 %1788
        %1790 = vrot.lane.b32.xlu0 %v1503, 113
        %v1791 = vpop.permute.xlu0 %1790
        %vm1792 = vcmp.lt.s32.totalorder %v639, 113
        %v1793 = vsel %vm1792, %v1777, %v1785
        %v1794 = vsel %vm1792, %v1779, %v1787
        %v1795 = vsel %vm1792, %v1781, %v1789
        %v1796 = vsel %vm1792, %v1783, %v1791
        %v1797 = vsel %vm1792, %v1785, %v1777
        %v1798 = vsel %vm1792, %v1787, %v1779
        %v1799 = vsel %vm1792, %v1789, %v1781
        %v1800 = vsel %vm1792, %v1791, %v1783
        %s1801 = scalar_lea.vmem %s3, 6
        %v1802 = vld [vmem:[%s1801] ss:$8 sm:$0x3]
        %v1804 = vlaneseq
        %v1805 = vshrl.u32 %v1804, 7
        %v1806 = vsub.s32 0, %v1805
        %v1807 = vrot.slane %v1802, %v1806
        %v1808 = vlaneseq
        %v1809 = vshrl.u32 %v1808, 7
        %v1810 = vsub.s32 1, %v1809
        %v1811 = vrot.slane %v1802, %v1810
        %v1814 = vmul.f32 %v1793, %v1807
        %v1815 = vmul.f32 %v1797, %v1811
        %v1816 = vmul.f32 %v1794, %v1807
        %v1817 = vmul.f32 %v1798, %v1811
        %v1818 = vmul.f32 %v1795, %v1807
        %v1819 = vmul.f32 %v1799, %v1811
        %v1820 = vmul.f32 %v1796, %v1807
        %v1821 = vmul.f32 %v1800, %v1811
        %v1822 = vpack.c.bf16 %v1816, %v1814
        %v1823 = vpack.c.bf16 %v1817, %v1815
        %v1824 = vpack.c.bf16 %v1820, %v1818
        %v1825 = vpack.c.bf16 %v1821, %v1819
        %1826 = vrot.lane.b32.xlu0 %v1487, 112
        %v1827 = vpop.permute.xlu0 %1826
        %1828 = vrot.lane.b32.xlu0 %v1491, 112
        %v1829 = vpop.permute.xlu0 %1828
        %1830 = vrot.lane.b32.xlu0 %v1497, 112
        %v1831 = vpop.permute.xlu0 %1830
        %1832 = vrot.lane.b32.xlu0 %v1501, 112
        %v1833 = vpop.permute.xlu0 %1832
        %1834 = vrot.lane.b32.xlu0 %v1489, 112
        %v1835 = vpop.permute.xlu0 %1834
        %1836 = vrot.lane.b32.xlu0 %v1493, 112
        %v1837 = vpop.permute.xlu0 %1836
        %1838 = vrot.lane.b32.xlu0 %v1499, 112
        %v1839 = vpop.permute.xlu0 %1838
        %1840 = vrot.lane.b32.xlu0 %v1503, 112
        %v1841 = vpop.permute.xlu0 %1840
        %v1842 = vsel %vm874, %v1827, %v1835
        %v1843 = vsel %vm874, %v1829, %v1837
        %v1844 = vsel %vm874, %v1831, %v1839
        %v1845 = vsel %vm874, %v1833, %v1841
        %v1846 = vsel %vm874, %v1835, %v1827
        %v1847 = vsel %vm874, %v1837, %v1829
        %v1848 = vsel %vm874, %v1839, %v1831
        %v1849 = vsel %vm874, %v1841, %v1833
        %s1850 = scalar_lea.vmem %s3, 7
        %v1851 = vld [vmem:[%s1850] ss:$8 sm:$0x3]
        %v1853 = vlaneseq
        %v1854 = vshrl.u32 %v1853, 7
        %v1855 = vsub.s32 0, %v1854
        %v1856 = vrot.slane %v1851, %v1855
        %v1857 = vlaneseq
        %v1858 = vshrl.u32 %v1857, 7
        %v1859 = vsub.s32 1, %v1858
        %v1860 = vrot.slane %v1851, %v1859
        %v1863 = vmul.f32 %v1842, %v1856
        %v1864 = vmul.f32 %v1846, %v1860
        %v1865 = vmul.f32 %v1843, %v1856
        %v1866 = vmul.f32 %v1847, %v1860
        %v1867 = vmul.f32 %v1844, %v1856
        %v1868 = vmul.f32 %v1848, %v1860
        %v1869 = vmul.f32 %v1845, %v1856
        %v1870 = vmul.f32 %v1849, %v1860
        %v1871 = vpack.c.bf16 %v1865, %v1863
        %v1872 = vpack.c.bf16 %v1866, %v1864
        %v1873 = vpack.c.bf16 %v1869, %v1867
        %v1874 = vpack.c.bf16 %v1870, %v1868
        %1875 = vrot.lane.b32.xlu0 %v1487, 111
        %v1876 = vpop.permute.xlu0 %1875
        %1877 = vrot.lane.b32.xlu0 %v1491, 111
        %v1878 = vpop.permute.xlu0 %1877
        %1879 = vrot.lane.b32.xlu0 %v1497, 111
        %v1880 = vpop.permute.xlu0 %1879
        %1881 = vrot.lane.b32.xlu0 %v1501, 111
        %v1882 = vpop.permute.xlu0 %1881
        %1883 = vrot.lane.b32.xlu0 %v1489, 111
        %v1884 = vpop.permute.xlu0 %1883
        %1885 = vrot.lane.b32.xlu0 %v1493, 111
        %v1886 = vpop.permute.xlu0 %1885
        %1887 = vrot.lane.b32.xlu0 %v1499, 111
        %v1888 = vpop.permute.xlu0 %1887
        %1889 = vrot.lane.b32.xlu0 %v1503, 111
        %v1890 = vpop.permute.xlu0 %1889
        %vm1891 = vcmp.lt.s32.totalorder %v639, 111
        %v1892 = vsel %vm1891, %v1876, %v1884
        %v1893 = vsel %vm1891, %v1878, %v1886
        %v1894 = vsel %vm1891, %v1880, %v1888
        %v1895 = vsel %vm1891, %v1882, %v1890
        %v1896 = vsel %vm1891, %v1884, %v1876
        %v1897 = vsel %vm1891, %v1886, %v1878
        %v1898 = vsel %vm1891, %v1888, %v1880
        %v1899 = vsel %vm1891, %v1890, %v1882
        %s1900 = scalar_lea.vmem %s3, 16
        %v1901 = vld [vmem:[%s1900] ss:$8 sm:$0x3]
        %v1903 = vlaneseq
        %v1904 = vshrl.u32 %v1903, 7
        %v1905 = vsub.s32 0, %v1904
        %v1906 = vrot.slane %v1901, %v1905
        %v1907 = vlaneseq
        %v1908 = vshrl.u32 %v1907, 7
        %v1909 = vsub.s32 1, %v1908
        %v1910 = vrot.slane %v1901, %v1909
        %v1913 = vmul.f32 %v1892, %v1906
        %v1914 = vmul.f32 %v1896, %v1910
        %v1915 = vmul.f32 %v1893, %v1906
        %v1916 = vmul.f32 %v1897, %v1910
        %v1917 = vmul.f32 %v1894, %v1906
        %v1918 = vmul.f32 %v1898, %v1910
        %v1919 = vmul.f32 %v1895, %v1906
        %v1920 = vmul.f32 %v1899, %v1910
        %v1921 = vpack.c.bf16 %v1915, %v1913
        %v1922 = vpack.c.bf16 %v1916, %v1914
        %v1923 = vpack.c.bf16 %v1919, %v1917
        %v1924 = vpack.c.bf16 %v1920, %v1918
        %v1925 = vld [vmem:[%s10] sm:$0xff]
        %v1926 = vld [vmem:[%s10 + $0x8] sm:$0xf]
        %v1927 = vld [vmem:[%s10 + $0xc] sm:$0xff]
        %v1928 = vld [vmem:[%s10 + $0x14] sm:$0xf]
        %v1929 = vld [vmem:[%s10 + $0x18] sm:$0xff]
        %v1930 = vld [vmem:[%s10 + $0x20] sm:$0xf]
        %v1931 = vld [vmem:[%s10 + $0x24] sm:$0xff]
        %v1932 = vld [vmem:[%s10 + $0x2c] sm:$0xf]
        %v1933 = vld [vmem:[%s10 + $0x30] sm:$0xff]
        %v1934 = vld [vmem:[%s10 + $0x38] sm:$0xf]
        %v1935 = vld [vmem:[%s10 + $0x3c] sm:$0xff]
        %v1936 = vld [vmem:[%s10 + $0x44] sm:$0xf]
        %v1937 = vld [vmem:[%s10 + $0x48] sm:$0xff]
        %v1938 = vld [vmem:[%s10 + $0x50] sm:$0xf]
        %v1939 = vld [vmem:[%s10 + $0x54] sm:$0xff]
        %v1940 = vld [vmem:[%s10 + $0x5c] sm:$0xf]
        %v1941 = vld [vmem:[%s10 + $0x60] sm:$0xff]
        %v1942 = vld [vmem:[%s10 + $0x68] sm:$0xf]
        %v1943 = vld [vmem:[%s10 + $0x6c] sm:$0xff]
        %v1944 = vld [vmem:[%s10 + $0x74] sm:$0xf]
        %v1945 = vld [vmem:[%s10 + $0x78] sm:$0xff]
        %v1946 = vld [vmem:[%s10 + $0x80] sm:$0xf]
        %v1947 = vld [vmem:[%s10 + $0x84] sm:$0xff]
        %v1948 = vld [vmem:[%s10 + $0x8c] sm:$0xf]
        %v1949 = vld [vmem:[%s10 + $0x90] sm:$0xff]
        %v1950 = vld [vmem:[%s10 + $0x98] sm:$0xf]
        %v1951 = vld [vmem:[%s10 + $0x9c] sm:$0xff]
        %v1952 = vld [vmem:[%s10 + $0xa4] sm:$0xf]
        %v1953 = vld [vmem:[%s10 + $0xa8] sm:$0xff]
        %v1954 = vld [vmem:[%s10 + $0xb0] sm:$0xf]
        %v1955 = vld [vmem:[%s10 + $0xb4] sm:$0xff]
        %v1956 = vld [vmem:[%s10 + $0xbc] sm:$0xf]
        %v1957 = vld [vmem:[%s10 + $0xc0] sm:$0xff]
        %v1958 = vld [vmem:[%s10 + $0xc8] sm:$0xf]
        %v1959 = vld [vmem:[%s10 + $0xcc] sm:$0xff]
        %v1960 = vld [vmem:[%s10 + $0xd4] sm:$0xf]
        %v1961 = vld [vmem:[%s10 + $0xd8] sm:$0xff]
        %v1962 = vld [vmem:[%s10 + $0xe0] sm:$0xf]
        %v1963 = vld [vmem:[%s10 + $0xe4] sm:$0xff]
        %v1964 = vld [vmem:[%s10 + $0xec] sm:$0xf]
        %v1965 = vld [vmem:[%s10 + $0xf0] sm:$0xff]
        %v1966 = vld [vmem:[%s10 + $0xf8] sm:$0xf]
        %v1967 = vld [vmem:[%s10 + $0xfc] sm:$0xff]
        %v1968 = vld [vmem:[%s10 + $0x104] sm:$0xf]
        %v1969 = vld [vmem:[%s10 + $0x108] sm:$0xff]
        %v1970 = vld [vmem:[%s10 + $0x110] sm:$0xf]
        %v1971 = vld [vmem:[%s10 + $0x114] sm:$0xff]
        %v1972 = vld [vmem:[%s10 + $0x11c] sm:$0xf]
        %v1973 = vld [vmem:[%s10 + $0x120] sm:$0xff]
        %v1974 = vld [vmem:[%s10 + $0x128] sm:$0xf]
        %v1975 = vld [vmem:[%s10 + $0x12c] sm:$0xff]
        %v1976 = vld [vmem:[%s10 + $0x134] sm:$0xf]
        %v1977 = vld [vmem:[%s10 + $0x138] sm:$0xff]
        %v1978 = vld [vmem:[%s10 + $0x140] sm:$0xf]
        %v1979 = vld [vmem:[%s11] sm:$0xff]
        %v1980 = vld [vmem:[%s11 + $0x8] sm:$0xff]
        %v1981 = vld [vmem:[%s11 + $0x10] sm:$0xff]
        %v1982 = vld [vmem:[%s11 + $0x18] sm:$0xff]
        %v1983 = vld [vmem:[%s11 + $0x20] sm:$0xff]
        %v1984 = vld [vmem:[%s11 + $0x28] sm:$0xff]
        %v1985 = vld [vmem:[%s11 + $0x30] sm:$0xff]
        %v1986 = vld [vmem:[%s11 + $0x38] sm:$0xff]
        %v1987 = vld [vmem:[%s11 + $0x40] sm:$0xff]
        %v1988 = vld [vmem:[%s11 + $0x48] sm:$0xff]
        %v1989 = vld [vmem:[%s11 + $0x50] sm:$0xff]
        %v1990 = vld [vmem:[%s11 + $0x58] sm:$0xff]
        %v1991 = vld [vmem:[%s11 + $0x60] sm:$0xff]
        %v1992 = vld [vmem:[%s11 + $0x68] sm:$0xff]
        %v1993 = vld [vmem:[%s11 + $0x70] sm:$0xff]
        %v1994 = vld [vmem:[%s11 + $0x78] sm:$0xff]
        %v1995 = vld [vmem:[%s11 + $0x80] sm:$0xff]
        %v1996 = vld [vmem:[%s11 + $0x88] sm:$0xff]
        %v1997 = vld [vmem:[%s11 + $0x90] sm:$0xff]
        %v1998 = vld [vmem:[%s11 + $0x98] sm:$0xff]
        %v1999 = vld [vmem:[%s11 + $0xa0] sm:$0xff]
        %v2000 = vld [vmem:[%s11 + $0xa8] sm:$0xff]
        %v2001 = vld [vmem:[%s11 + $0xb0] sm:$0xff]
        %v2002 = vld [vmem:[%s11 + $0xb8] sm:$0xff]
        %v2003 = vld [vmem:[%s11 + $0xc0] sm:$0xff]
        %v2004 = vld [vmem:[%s11 + $0xc8] sm:$0xff]
        %v2005 = vld [vmem:[%s11 + $0xd0] sm:$0xff]
        %2007 = vset.pattern.permute.xlu0 0
        %2008 = vperm.xlu0 %2007, %v1979
        %v2009 = vpop.permute.xlu0 %2008
        %2012 = vset.pattern.permute.xlu0 0
        %2013 = vperm.xlu0 %2012, %v1980
        %v2014 = vpop.permute.xlu0 %2013
        %2017 = vset.pattern.permute.xlu0 0
        %2018 = vperm.xlu0 %2017, %v1981
        %v2019 = vpop.permute.xlu0 %2018
        %2022 = vset.pattern.permute.xlu0 0
        %2023 = vperm.xlu0 %2022, %v1982
        %v2024 = vpop.permute.xlu0 %2023
        %2027 = vset.pattern.permute.xlu0 0
        %2028 = vperm.xlu0 %2027, %v1983
        %v2029 = vpop.permute.xlu0 %2028
        %2032 = vset.pattern.permute.xlu0 0
        %2033 = vperm.xlu0 %2032, %v1984
        %v2034 = vpop.permute.xlu0 %2033
        %2037 = vset.pattern.permute.xlu0 0
        %2038 = vperm.xlu0 %2037, %v1985
        %v2039 = vpop.permute.xlu0 %2038
        %2042 = vset.pattern.permute.xlu0 0
        %2043 = vperm.xlu0 %2042, %v1986
        %v2044 = vpop.permute.xlu0 %2043
        %2047 = vset.pattern.permute.xlu0 0
        %2048 = vperm.xlu0 %2047, %v1987
        %v2049 = vpop.permute.xlu0 %2048
        %2052 = vset.pattern.permute.xlu0 0
        %2053 = vperm.xlu0 %2052, %v1988
        %v2054 = vpop.permute.xlu0 %2053
        %2057 = vset.pattern.permute.xlu0 0
        %2058 = vperm.xlu0 %2057, %v1989
        %v2059 = vpop.permute.xlu0 %2058
        %2062 = vset.pattern.permute.xlu0 0
        %2063 = vperm.xlu0 %2062, %v1990
        %v2064 = vpop.permute.xlu0 %2063
        %2067 = vset.pattern.permute.xlu0 0
        %2068 = vperm.xlu0 %2067, %v1991
        %v2069 = vpop.permute.xlu0 %2068
        %2072 = vset.pattern.permute.xlu0 0
        %2073 = vperm.xlu0 %2072, %v1992
        %v2074 = vpop.permute.xlu0 %2073
        %2077 = vset.pattern.permute.xlu0 0
        %2078 = vperm.xlu0 %2077, %v1993
        %v2079 = vpop.permute.xlu0 %2078
        %2082 = vset.pattern.permute.xlu0 0
        %2083 = vperm.xlu0 %2082, %v1994
        %v2084 = vpop.permute.xlu0 %2083
        %2087 = vset.pattern.permute.xlu0 0
        %2088 = vperm.xlu0 %2087, %v1995
        %v2089 = vpop.permute.xlu0 %2088
        %2092 = vset.pattern.permute.xlu0 0
        %2093 = vperm.xlu0 %2092, %v1996
        %v2094 = vpop.permute.xlu0 %2093
        %2097 = vset.pattern.permute.xlu0 0
        %2098 = vperm.xlu0 %2097, %v1997
        %v2099 = vpop.permute.xlu0 %2098
        %2102 = vset.pattern.permute.xlu0 0
        %2103 = vperm.xlu0 %2102, %v1998
        %v2104 = vpop.permute.xlu0 %2103
        %2107 = vset.pattern.permute.xlu0 0
        %2108 = vperm.xlu0 %2107, %v1999
        %v2109 = vpop.permute.xlu0 %2108
        %2112 = vset.pattern.permute.xlu0 0
        %2113 = vperm.xlu0 %2112, %v2000
        %v2114 = vpop.permute.xlu0 %2113
        %2117 = vset.pattern.permute.xlu0 0
        %2118 = vperm.xlu0 %2117, %v2001
        %v2119 = vpop.permute.xlu0 %2118
        %2122 = vset.pattern.permute.xlu0 0
        %2123 = vperm.xlu0 %2122, %v2002
        %v2124 = vpop.permute.xlu0 %2123
        %2127 = vset.pattern.permute.xlu0 0
        %2128 = vperm.xlu0 %2127, %v2003
        %v2129 = vpop.permute.xlu0 %2128
        %2132 = vset.pattern.permute.xlu0 0
        %2133 = vperm.xlu0 %2132, %v2004
        %v2134 = vpop.permute.xlu0 %2133
        %2137 = vset.pattern.permute.xlu0 0
        %2138 = vperm.xlu0 %2137, %v2005
        %v2139 = vpop.permute.xlu0 %2138
        %v2195 = vunpack.c.l.b16 %v1925
        %v2196 = vunpack.c.h.b16 %v1925
        %v2197 = vunpack.c.l.b16 %v1926
        %v2198 = vunpack.c.l.b16 %v1927
        %v2199 = vunpack.c.h.b16 %v1927
        %v2200 = vunpack.c.l.b16 %v1928
        %v2201 = vunpack.c.l.b16 %v1929
        %v2202 = vunpack.c.h.b16 %v1929
        %v2203 = vunpack.c.l.b16 %v1930
        %v2204 = vunpack.c.l.b16 %v1931
        %v2205 = vunpack.c.h.b16 %v1931
        %v2206 = vunpack.c.l.b16 %v1932
        %v2207 = vunpack.c.l.b16 %v1933
        %v2208 = vunpack.c.h.b16 %v1933
        %v2209 = vunpack.c.l.b16 %v1934
        %v2210 = vunpack.c.l.b16 %v1935
        %v2211 = vunpack.c.h.b16 %v1935
        %v2212 = vunpack.c.l.b16 %v1936
        %v2213 = vunpack.c.l.b16 %v1937
        %v2214 = vunpack.c.h.b16 %v1937
        %v2215 = vunpack.c.l.b16 %v1938
        %v2216 = vunpack.c.l.b16 %v1939
        %v2217 = vunpack.c.h.b16 %v1939
        %v2218 = vunpack.c.l.b16 %v1940
        %v2219 = vunpack.c.l.b16 %v1941
        %v2220 = vunpack.c.h.b16 %v1941
        %v2221 = vunpack.c.l.b16 %v1942
        %v2222 = vunpack.c.l.b16 %v1943
        %v2223 = vunpack.c.h.b16 %v1943
        %v2224 = vunpack.c.l.b16 %v1944
        %v2225 = vunpack.c.l.b16 %v1945
        %v2226 = vunpack.c.h.b16 %v1945
        %v2227 = vunpack.c.l.b16 %v1946
        %v2228 = vunpack.c.l.b16 %v1947
        %v2229 = vunpack.c.h.b16 %v1947
        %v2230 = vunpack.c.l.b16 %v1948
        %v2231 = vunpack.c.l.b16 %v1949
        %v2232 = vunpack.c.h.b16 %v1949
        %v2233 = vunpack.c.l.b16 %v1950
        %v2234 = vunpack.c.l.b16 %v1951
        %v2235 = vunpack.c.h.b16 %v1951
        %v2236 = vunpack.c.l.b16 %v1952
        %v2237 = vunpack.c.l.b16 %v1953
        %v2238 = vunpack.c.h.b16 %v1953
        %v2239 = vunpack.c.l.b16 %v1954
        %v2240 = vunpack.c.l.b16 %v1955
        %v2241 = vunpack.c.h.b16 %v1955
        %v2242 = vunpack.c.l.b16 %v1956
        %v2243 = vunpack.c.l.b16 %v1957
        %v2244 = vunpack.c.h.b16 %v1957
        %v2245 = vunpack.c.l.b16 %v1958
        %v2246 = vunpack.c.l.b16 %v1959
        %v2247 = vunpack.c.h.b16 %v1959
        %v2248 = vunpack.c.l.b16 %v1960
        %v2249 = vunpack.c.l.b16 %v1961
        %v2250 = vunpack.c.h.b16 %v1961
        %v2251 = vunpack.c.l.b16 %v1962
        %v2252 = vunpack.c.l.b16 %v1963
        %v2253 = vunpack.c.h.b16 %v1963
        %v2254 = vunpack.c.l.b16 %v1964
        %v2255 = vunpack.c.l.b16 %v1965
        %v2256 = vunpack.c.h.b16 %v1965
        %v2257 = vunpack.c.l.b16 %v1966
        %v2258 = vunpack.c.l.b16 %v1967
        %v2259 = vunpack.c.h.b16 %v1967
        %v2260 = vunpack.c.l.b16 %v1968
        %v2261 = vunpack.c.l.b16 %v1969
        %v2262 = vunpack.c.h.b16 %v1969
        %v2263 = vunpack.c.l.b16 %v1970
        %v2264 = vunpack.c.l.b16 %v1971
        %v2265 = vunpack.c.h.b16 %v1971
        %v2266 = vunpack.c.l.b16 %v1972
        %v2267 = vunpack.c.l.b16 %v1973
        %v2268 = vunpack.c.h.b16 %v1973
        %v2269 = vunpack.c.l.b16 %v1974
        %v2270 = vunpack.c.l.b16 %v1975
        %v2271 = vunpack.c.h.b16 %v1975
        %v2272 = vunpack.c.l.b16 %v1976
        %v2273 = vunpack.c.l.b16 %v1977
        %v2274 = vunpack.c.h.b16 %v1977
        %v2275 = vunpack.c.l.b16 %v1978
        %v2276 = vpack.c.b16 %v2198, %v2195
        %v2277 = vpack.c.b16 %v2199, %v2196
        %v2278 = vpack.c.b16 %v2200, %v2197
        %v2279 = vpack.c.b16 %v2204, %v2201
        %v2280 = vpack.c.b16 %v2205, %v2202
        %v2281 = vpack.c.b16 %v2206, %v2203
        %v2282 = vpack.c.b16 %v2210, %v2207
        %v2283 = vpack.c.b16 %v2211, %v2208
        %v2284 = vpack.c.b16 %v2212, %v2209
        %v2285 = vpack.c.b16 %v2216, %v2213
        %v2286 = vpack.c.b16 %v2217, %v2214
        %v2287 = vpack.c.b16 %v2218, %v2215
        %v2288 = vpack.c.b16 %v2222, %v2219
        %v2289 = vpack.c.b16 %v2223, %v2220
        %v2290 = vpack.c.b16 %v2224, %v2221
        %v2291 = vpack.c.b16 %v2228, %v2225
        %v2292 = vpack.c.b16 %v2229, %v2226
        %v2293 = vpack.c.b16 %v2230, %v2227
        %v2294 = vpack.c.b16 %v2234, %v2231
        %v2295 = vpack.c.b16 %v2235, %v2232
        %v2296 = vpack.c.b16 %v2236, %v2233
        %v2297 = vpack.c.b16 %v2240, %v2237
        %v2298 = vpack.c.b16 %v2241, %v2238
        %v2299 = vpack.c.b16 %v2242, %v2239
        %v2300 = vpack.c.b16 %v2246, %v2243
        %v2301 = vpack.c.b16 %v2247, %v2244
        %v2302 = vpack.c.b16 %v2248, %v2245
        %v2303 = vpack.c.b16 %v2252, %v2249
        %v2304 = vpack.c.b16 %v2253, %v2250
        %v2305 = vpack.c.b16 %v2254, %v2251
        %v2306 = vpack.c.b16 %v2258, %v2255
        %v2307 = vpack.c.b16 %v2259, %v2256
        %v2308 = vpack.c.b16 %v2260, %v2257
        %v2309 = vpack.c.b16 %v2264, %v2261
        %v2310 = vpack.c.b16 %v2265, %v2262
        %v2311 = vpack.c.b16 %v2266, %v2263
        %v2312 = vpack.c.b16 %v2270, %v2267
        %v2313 = vpack.c.b16 %v2271, %v2268
        %v2314 = vpack.c.b16 %v2272, %v2269
        %v2315 = vpack.c.b16 %v2273, %v2273
        %v2316 = vpack.c.b16 %v2274, %v2274
        %v2317 = vpack.c.b16 %v2275, %v2275
        %vm2346 = vcmask 261120
        %v2348 = vsel %vm2346, %v2278, 0
        %v2351 = vsel %vm2346, %v2281, 0
        %v2354 = vsel %vm2346, %v2284, 0
        %v2357 = vsel %vm2346, %v2287, 0
        %v2360 = vsel %vm2346, %v2290, 0
        %v2363 = vsel %vm2346, %v2293, 0
        %v2366 = vsel %vm2346, %v2296, 0
        %v2369 = vsel %vm2346, %v2299, 0
        %v2372 = vsel %vm2346, %v2302, 0
        %v2375 = vsel %vm2346, %v2305, 0
        %v2378 = vsel %vm2346, %v2308, 0
        %v2381 = vsel %vm2346, %v2311, 0
        %v2384 = vsel %vm2346, %v2314, 0
        %v2387 = vsel %vm2346, %v2317, 0
        %2389 = vmatprep.subr.bf16.mxu0 %v1551
        %2390 = vmatpush1.bf16.msra.mxu0 %v1550
        %2391 = vmatprep.subr.bf16.mxu0 %v1553
        %2392 = vmatpush1.bf16.msra.mxu0 %v1552
        %2393 = vmatprep.subr.bf16.mxu0 %v1600
        %2394 = vmatpush1.bf16.msra.mxu0 %v1599
        %2395 = vmatprep.subr.bf16.mxu0 %v1602
        %2396 = vmatpush1.bf16.msra.mxu0 %v1601
        %2397 = vmatprep.subr.bf16.mxu0 %v1650
        %2398 = vmatpush1.bf16.msra.mxu0 %v1649
        %2399 = vmatprep.subr.bf16.mxu0 %v1652
        %2400 = vmatpush1.bf16.msra.mxu0 %v1651
        %2401 = vmatprep.subr.bf16.mxu0 %v1699
        %2402 = vmatpush1.bf16.msra.mxu0 %v1698
        %2403 = vmatprep.subr.bf16.mxu0 %v1701
        %2404 = vmatpush1.bf16.msra.mxu0 %v1700
        %2405 = vmatprep.subr.bf16.mxu0 %v1724
        %2406 = vmatpush1.bf16.msra.mxu0 %v1723
        %2407 = vmatprep.subr.bf16.mxu0 %v1726
        %2408 = vmatpush1.bf16.msra.mxu0 %v1725
        %2409 = vmatprep.subr.bf16.mxu0 %v1773
        %2410 = vmatpush1.bf16.msra.mxu0 %v1772
        %2411 = vmatprep.subr.bf16.mxu0 %v1775
        %2412 = vmatpush1.bf16.msra.mxu0 %v1774
        %2413 = vmatprep.subr.bf16.mxu0 %v1823
        %2414 = vmatpush1.bf16.msra.mxu0 %v1822
        %2415 = vmatprep.subr.bf16.mxu0 %v1825
        %2416 = vmatpush1.bf16.msra.mxu0 %v1824
        %2417 = vmatprep.subr.bf16.mxu0 %v1872
        %2418 = vmatpush1.bf16.msra.mxu0 %v1871
        %2419 = vmatprep.subr.bf16.mxu0 %v1874
        %2420 = vmatpush1.bf16.msra.mxu0 %v1873
        %2421 = vmatprep.mubr.bf16.mxu0 %v2277
        %2422 = vmatmul.mubr.bf16.gmra.mrb[0].mxu0 %v2276
        %v2423 = vpop.f32.mrb[0].mxu0
        %v2424 = vadd.f32 %v2009, %v2423
        %v2425 = vpop.f32.mrb[0].mxu0
        %v2426 = vadd.f32 %v2009, %v2425
        %v2427 = vpop.f32.mrb[0].mxu0
        %v2428 = vadd.f32 %v2014, %v2427
        %v2429 = vpop.f32.mrb[0].mxu0
        %v2430 = vadd.f32 %v2014, %v2429
        %2431 = vmatprep.mubr.bf16.mxu0 %v2280
        %2432 = vmatmul.mubr.bf16.gmra.mrb[0].mxu0 %v2279
        %v2433 = vpop.f32.mrb[0].mxu0
        %v2434 = vadd.f32 %v2019, %v2433
        %v2435 = vpop.f32.mrb[0].mxu0
        %v2436 = vadd.f32 %v2019, %v2435
        %v2437 = vpop.f32.mrb[0].mxu0
        %v2438 = vadd.f32 %v2024, %v2437
        %v2439 = vpop.f32.mrb[0].mxu0
        %v2440 = vadd.f32 %v2024, %v2439
        %2441 = vmatprep.mubr.bf16.mxu0 %v2283
        %2442 = vmatmul.mubr.bf16.gmra.mrb[0].mxu0 %v2282
        %v2443 = vpop.f32.mrb[0].mxu0
        %v2444 = vadd.f32 %v2029, %v2443
        %v2445 = vpop.f32.mrb[0].mxu0
        %v2446 = vadd.f32 %v2029, %v2445
        %v2447 = vpop.f32.mrb[0].mxu0
        %v2448 = vadd.f32 %v2034, %v2447
        %v2449 = vpop.f32.mrb[0].mxu0
        %v2450 = vadd.f32 %v2034, %v2449
        %2451 = vmatprep.mubr.bf16.mxu0 %v2286
        %2452 = vmatmul.mubr.bf16.gmra.mrb[0].mxu0 %v2285
        %v2453 = vpop.f32.mrb[0].mxu0
        %v2454 = vadd.f32 %v2039, %v2453
        %v2455 = vpop.f32.mrb[0].mxu0
        %v2456 = vadd.f32 %v2039, %v2455
        %v2457 = vpop.f32.mrb[0].mxu0
        %v2458 = vadd.f32 %v2044, %v2457
        %v2459 = vpop.f32.mrb[0].mxu0
        %v2460 = vadd.f32 %v2044, %v2459
        %2461 = vmatprep.mubr.bf16.mxu0 %v2289
        %2462 = vmatmul.mubr.bf16.gmra.mrb[0].mxu0 %v2288
        %v2463 = vpop.f32.mrb[0].mxu0
        %v2464 = vadd.f32 %v2049, %v2463
        %v2465 = vpop.f32.mrb[0].mxu0
        %v2466 = vadd.f32 %v2049, %v2465
        %v2467 = vpop.f32.mrb[0].mxu0
        %v2468 = vadd.f32 %v2054, %v2467
        %v2469 = vpop.f32.mrb[0].mxu0
        %v2470 = vadd.f32 %v2054, %v2469
        %2471 = vmatprep.mubr.bf16.mxu0 %v2292
        %2472 = vmatmul.mubr.bf16.gmra.mrb[0].mxu0 %v2291
        %v2473 = vpop.f32.mrb[0].mxu0
        %v2474 = vadd.f32 %v2059, %v2473
        %v2475 = vpop.f32.mrb[0].mxu0
        %v2476 = vadd.f32 %v2059, %v2475
        %v2477 = vpop.f32.mrb[0].mxu0
        %v2478 = vadd.f32 %v2064, %v2477
        %v2479 = vpop.f32.mrb[0].mxu0
        %v2480 = vadd.f32 %v2064, %v2479
        %2481 = vmatprep.mubr.bf16.mxu0 %v2295
        %2482 = vmatmul.mubr.bf16.gmra.mrb[0].mxu0 %v2294
        %v2483 = vpop.f32.mrb[0].mxu0
        %v2484 = vadd.f32 %v2069, %v2483
        %v2485 = vpop.f32.mrb[0].mxu0
        %v2486 = vadd.f32 %v2069, %v2485
        %v2487 = vpop.f32.mrb[0].mxu0
        %v2488 = vadd.f32 %v2074, %v2487
        %v2489 = vpop.f32.mrb[0].mxu0
        %v2490 = vadd.f32 %v2074, %v2489
        %2491 = vmatprep.mubr.bf16.mxu0 %v2298
        %2492 = vmatmul.mubr.bf16.gmra.mrb[0].mxu0 %v2297
        %v2493 = vpop.f32.mrb[0].mxu0
        %v2494 = vadd.f32 %v2079, %v2493
        %v2495 = vpop.f32.mrb[0].mxu0
        %v2496 = vadd.f32 %v2079, %v2495
        %v2497 = vpop.f32.mrb[0].mxu0
        %v2498 = vadd.f32 %v2084, %v2497
        %v2499 = vpop.f32.mrb[0].mxu0
        %v2500 = vadd.f32 %v2084, %v2499
        %2501 = vmatprep.mubr.bf16.mxu0 %v2301
        %2502 = vmatmul.mubr.bf16.gmra.mrb[0].mxu0 %v2300
        %v2503 = vpop.f32.mrb[0].mxu0
        %v2504 = vadd.f32 %v2089, %v2503
        %v2505 = vpop.f32.mrb[0].mxu0
        %v2506 = vadd.f32 %v2089, %v2505
        %v2507 = vpop.f32.mrb[0].mxu0
        %v2508 = vadd.f32 %v2094, %v2507
        %v2509 = vpop.f32.mrb[0].mxu0
        %v2510 = vadd.f32 %v2094, %v2509
        %2511 = vmatprep.mubr.bf16.mxu0 %v2304
        %2512 = vmatmul.mubr.bf16.gmra.mrb[0].mxu0 %v2303
        %v2513 = vpop.f32.mrb[0].mxu0
        %v2514 = vadd.f32 %v2099, %v2513
        %v2515 = vpop.f32.mrb[0].mxu0
        %v2516 = vadd.f32 %v2099, %v2515
        %v2517 = vpop.f32.mrb[0].mxu0
        %v2518 = vadd.f32 %v2104, %v2517
        %v2519 = vpop.f32.mrb[0].mxu0
        %v2520 = vadd.f32 %v2104, %v2519
        %2521 = vmatprep.mubr.bf16.mxu0 %v2307
        %2522 = vmatmul.mubr.bf16.gmra.mrb[0].mxu0 %v2306
        %v2523 = vpop.f32.mrb[0].mxu0
        %v2524 = vadd.f32 %v2109, %v2523
        %v2525 = vpop.f32.mrb[0].mxu0
        %v2526 = vadd.f32 %v2109, %v2525
        %v2527 = vpop.f32.mrb[0].mxu0
        %v2528 = vadd.f32 %v2114, %v2527
        %v2529 = vpop.f32.mrb[0].mxu0
        %v2530 = vadd.f32 %v2114, %v2529
        %2531 = vmatprep.mubr.bf16.mxu0 %v2310
        %2532 = vmatmul.mubr.bf16.gmra.mrb[0].mxu0 %v2309
        %v2533 = vpop.f32.mrb[0].mxu0
        %v2534 = vadd.f32 %v2119, %v2533
        %v2535 = vpop.f32.mrb[0].mxu0
        %v2536 = vadd.f32 %v2119, %v2535
        %v2537 = vpop.f32.mrb[0].mxu0
        %v2538 = vadd.f32 %v2124, %v2537
        %v2539 = vpop.f32.mrb[0].mxu0
        %v2540 = vadd.f32 %v2124, %v2539
        %2541 = vmatprep.mubr.bf16.mxu0 %v2313
        %2542 = vmatmul.mubr.bf16.gmra.mrb[0].mxu0 %v2312
        %v2543 = vpop.f32.mrb[0].mxu0
        %v2544 = vadd.f32 %v2129, %v2543
        %v2545 = vpop.f32.mrb[0].mxu0
        %v2546 = vadd.f32 %v2129, %v2545
        %v2547 = vpop.f32.mrb[0].mxu0
        %v2548 = vadd.f32 %v2134, %v2547
        %v2549 = vpop.f32.mrb[0].mxu0
        %v2550 = vadd.f32 %v2134, %v2549
        %2551 = vmatprep.mubr.bf16.mxu0 %v2316
        %2552 = vmatmul.mubr.bf16.gmra.mrb[0].mxu0 %v2315
        %v2553 = vpop.f32.mrb[0].mxu0
        %v2554 = vadd.f32 %v2139, %v2553
        %v2555 = vpop.f32.mrb[0].mxu0
        %v2556 = vadd.f32 %v2139, %v2555
        %v2557 = vpop.f32.mrb[0].mxu0
        %v2558 = vpop.f32.mrb[0].mxu0
        %2559 = vdwg.mxu0
        %2560 = vmatprep.subr.bf16.mxu0 %v1922
        %2561 = vmatpush1.bf16.msra.mxu0 %v1921
        %2562 = vmatprep.subr.bf16.mxu0 %v1924
        %2563 = vmatpush1.bf16.msra.mxu0 %v1923
        %2564 = vmatprep.subr.bf16.mxu0 0
        %2565 = vmatpush1.bf16.msra.mxu0 0
        %2566 = vmatprep.subr.bf16.mxu0 0
        %2567 = vmatpush1.bf16.msra.mxu0 0
        %2568 = vmatprep.subr.bf16.mxu0 0
        %2569 = vmatpush1.bf16.msra.mxu0 0
        %2570 = vmatprep.subr.bf16.mxu0 0
        %2571 = vmatpush1.bf16.msra.mxu0 0
        %2572 = vmatprep.subr.bf16.mxu0 0
        %2573 = vmatpush1.bf16.msra.mxu0 0
        %2574 = vmatprep.subr.bf16.mxu0 0
        %2575 = vmatpush1.bf16.msra.mxu0 0
        %2576 = vmatprep.subr.bf16.mxu0 0
        %2577 = vmatpush1.bf16.msra.mxu0 0
        %2578 = vmatprep.subr.bf16.mxu0 0
        %2579 = vmatpush1.bf16.msra.mxu0 0
        %2580 = vmatprep.subr.bf16.mxu0 0
        %2581 = vmatpush1.bf16.msra.mxu0 0
        %2582 = vmatprep.subr.bf16.mxu0 0
        %2583 = vmatpush1.bf16.msra.mxu0 0
        %2584 = vmatprep.subr.bf16.mxu0 0
        %2585 = vmatpush1.bf16.msra.mxu0 0
        %2586 = vmatprep.subr.bf16.mxu0 0
        %2587 = vmatpush1.bf16.msra.mxu0 0
        %2588 = vmatprep.subr.bf16.mxu0 0
        %2589 = vmatpush1.bf16.msra.mxu0 0
        %2590 = vmatprep.subr.bf16.mxu0 0
        %2591 = vmatpush1.bf16.msra.mxu0 0
        %2592 = vmatprep.mubr.bf16.mxu0 0
        %2593 = vmatmul.mubr.bf16.gmra.mrb[0].mxu0 %v2348
        %v2594 = vpop.f32.mrb[0].mxu0
        %v2595 = vadd.f32 %v2424, %v2594
        %v2596 = vpop.f32.mrb[0].mxu0
        %v2597 = vadd.f32 %v2426, %v2596
        %v2598 = vpop.f32.mrb[0].mxu0
        %v2599 = vadd.f32 %v2428, %v2598
        %v2600 = vpop.f32.mrb[0].mxu0
        %v2601 = vadd.f32 %v2430, %v2600
        %2602 = vmatprep.mubr.bf16.mxu0 0
        %2603 = vmatmul.mubr.bf16.gmra.mrb[0].mxu0 %v2351
        %v2604 = vpop.f32.mrb[0].mxu0
        %v2605 = vadd.f32 %v2434, %v2604
        %v2606 = vpop.f32.mrb[0].mxu0
        %v2607 = vadd.f32 %v2436, %v2606
        %v2608 = vpop.f32.mrb[0].mxu0
        %v2609 = vadd.f32 %v2438, %v2608
        %v2610 = vpop.f32.mrb[0].mxu0
        %v2611 = vadd.f32 %v2440, %v2610
        %2612 = vmatprep.mubr.bf16.mxu0 0
        %2613 = vmatmul.mubr.bf16.gmra.mrb[0].mxu0 %v2354
        %v2614 = vpop.f32.mrb[0].mxu0
        %v2615 = vadd.f32 %v2444, %v2614
        %v2616 = vpop.f32.mrb[0].mxu0
        %v2617 = vadd.f32 %v2446, %v2616
        %v2618 = vpop.f32.mrb[0].mxu0
        %v2619 = vadd.f32 %v2448, %v2618
        %v2620 = vpop.f32.mrb[0].mxu0
        %v2621 = vadd.f32 %v2450, %v2620
        %2622 = vmatprep.mubr.bf16.mxu0 0
        %2623 = vmatmul.mubr.bf16.gmra.mrb[0].mxu0 %v2357
        %v2624 = vpop.f32.mrb[0].mxu0
        %v2625 = vadd.f32 %v2454, %v2624
        %v2626 = vpop.f32.mrb[0].mxu0
        %v2627 = vadd.f32 %v2456, %v2626
        %v2628 = vpop.f32.mrb[0].mxu0
        %v2629 = vadd.f32 %v2458, %v2628
        %v2630 = vpop.f32.mrb[0].mxu0
        %v2631 = vadd.f32 %v2460, %v2630
        %2632 = vmatprep.mubr.bf16.mxu0 0
        %2633 = vmatmul.mubr.bf16.gmra.mrb[0].mxu0 %v2360
        %v2634 = vpop.f32.mrb[0].mxu0
        %v2635 = vadd.f32 %v2464, %v2634
        %v2636 = vpop.f32.mrb[0].mxu0
        %v2637 = vadd.f32 %v2466, %v2636
        %v2638 = vpop.f32.mrb[0].mxu0
        %v2639 = vadd.f32 %v2468, %v2638
        %v2640 = vpop.f32.mrb[0].mxu0
        %v2641 = vadd.f32 %v2470, %v2640
        %2642 = vmatprep.mubr.bf16.mxu0 0
        %2643 = vmatmul.mubr.bf16.gmra.mrb[0].mxu0 %v2363
        %v2644 = vpop.f32.mrb[0].mxu0
        %v2645 = vadd.f32 %v2474, %v2644
        %v2646 = vpop.f32.mrb[0].mxu0
        %v2647 = vadd.f32 %v2476, %v2646
        %v2648 = vpop.f32.mrb[0].mxu0
        %v2649 = vadd.f32 %v2478, %v2648
        %v2650 = vpop.f32.mrb[0].mxu0
        %v2651 = vadd.f32 %v2480, %v2650
        %2652 = vmatprep.mubr.bf16.mxu0 0
        %2653 = vmatmul.mubr.bf16.gmra.mrb[0].mxu0 %v2366
        %v2654 = vpop.f32.mrb[0].mxu0
        %v2655 = vadd.f32 %v2484, %v2654
        %v2656 = vpop.f32.mrb[0].mxu0
        %v2657 = vadd.f32 %v2486, %v2656
        %v2658 = vpop.f32.mrb[0].mxu0
        %v2659 = vadd.f32 %v2488, %v2658
        %v2660 = vpop.f32.mrb[0].mxu0
        %v2661 = vadd.f32 %v2490, %v2660
        %2662 = vmatprep.mubr.bf16.mxu0 0
        %2663 = vmatmul.mubr.bf16.gmra.mrb[0].mxu0 %v2369
        %v2664 = vpop.f32.mrb[0].mxu0
        %v2665 = vadd.f32 %v2494, %v2664
        %v2666 = vpop.f32.mrb[0].mxu0
        %v2667 = vadd.f32 %v2496, %v2666
        %v2668 = vpop.f32.mrb[0].mxu0
        %v2669 = vadd.f32 %v2498, %v2668
        %v2670 = vpop.f32.mrb[0].mxu0
        %v2671 = vadd.f32 %v2500, %v2670
        %2672 = vmatprep.mubr.bf16.mxu0 0
        %2673 = vmatmul.mubr.bf16.gmra.mrb[0].mxu0 %v2372
        %v2674 = vpop.f32.mrb[0].mxu0
        %v2675 = vadd.f32 %v2504, %v2674
        %v2676 = vpop.f32.mrb[0].mxu0
        %v2677 = vadd.f32 %v2506, %v2676
        %v2678 = vpop.f32.mrb[0].mxu0
        %v2679 = vadd.f32 %v2508, %v2678
        %v2680 = vpop.f32.mrb[0].mxu0
        %v2681 = vadd.f32 %v2510, %v2680
        %2682 = vmatprep.mubr.bf16.mxu0 0
        %2683 = vmatmul.mubr.bf16.gmra.mrb[0].mxu0 %v2375
        %v2684 = vpop.f32.mrb[0].mxu0
        %v2685 = vadd.f32 %v2514, %v2684
        %v2686 = vpop.f32.mrb[0].mxu0
        %v2687 = vadd.f32 %v2516, %v2686
        %v2688 = vpop.f32.mrb[0].mxu0
        %v2689 = vadd.f32 %v2518, %v2688
        %v2690 = vpop.f32.mrb[0].mxu0
        %v2691 = vadd.f32 %v2520, %v2690
        %2692 = vmatprep.mubr.bf16.mxu0 0
        %2693 = vmatmul.mubr.bf16.gmra.mrb[0].mxu0 %v2378
        %v2694 = vpop.f32.mrb[0].mxu0
        %v2695 = vadd.f32 %v2524, %v2694
        %v2696 = vpop.f32.mrb[0].mxu0
        %v2697 = vadd.f32 %v2526, %v2696
        %v2698 = vpop.f32.mrb[0].mxu0
        %v2699 = vadd.f32 %v2528, %v2698
        %v2700 = vpop.f32.mrb[0].mxu0
        %v2701 = vadd.f32 %v2530, %v2700
        %2702 = vmatprep.mubr.bf16.mxu0 0
        %2703 = vmatmul.mubr.bf16.gmra.mrb[0].mxu0 %v2381
        %v2704 = vpop.f32.mrb[0].mxu0
        %v2705 = vadd.f32 %v2534, %v2704
        %v2706 = vpop.f32.mrb[0].mxu0
        %v2707 = vadd.f32 %v2536, %v2706
        %v2708 = vpop.f32.mrb[0].mxu0
        %v2709 = vadd.f32 %v2538, %v2708
        %v2710 = vpop.f32.mrb[0].mxu0
        %v2711 = vadd.f32 %v2540, %v2710
        %2712 = vmatprep.mubr.bf16.mxu0 0
        %2713 = vmatmul.mubr.bf16.gmra.mrb[0].mxu0 %v2384
        %v2714 = vpop.f32.mrb[0].mxu0
        %v2715 = vadd.f32 %v2544, %v2714
        %v2716 = vpop.f32.mrb[0].mxu0
        %v2717 = vadd.f32 %v2546, %v2716
        %v2718 = vpop.f32.mrb[0].mxu0
        %v2719 = vadd.f32 %v2548, %v2718
        %v2720 = vpop.f32.mrb[0].mxu0
        %v2721 = vadd.f32 %v2550, %v2720
        %2722 = vmatprep.mubr.bf16.mxu0 0
        %2723 = vmatmul.mubr.bf16.gmra.mrb[0].mxu0 %v2387
        %v2724 = vpop.f32.mrb[0].mxu0
        %v2725 = vadd.f32 %v2554, %v2724
        %v2726 = vpop.f32.mrb[0].mxu0
        %v2727 = vadd.f32 %v2556, %v2726
        %v2728 = vpop.f32.mrb[0].mxu0
        %v2729 = vpop.f32.mrb[0].mxu0
        %2730 = vdwg.mxu0
        %v2731 = vadd.s32 %v630, 8
        %v2732 = vadd.s32 %v630, 16
        %v2733 = vadd.s32 %v630, 24
        %v2734 = vadd.s32 %v630, 32
        %v2735 = vadd.s32 %v630, 40
        %v2736 = vadd.s32 %v630, 48
        %v2737 = vadd.s32 %v630, 56
        %v2738 = vadd.s32 %v630, 64
        %v2739 = vadd.s32 %v630, 72
        %v2740 = vadd.s32 %v630, 80
        %v2741 = vadd.s32 %v630, 88
        %v2742 = vadd.s32 %v630, 96
        %v2743 = vadd.s32 %v630, 104
        %v2744 = vadd.s32 %v630, 112
        %v2745 = vadd.s32 %v630, 120
        %v2746 = vadd.s32 %v630, 128
        %v2747 = vadd.s32 %v630, 136
        %v2748 = vadd.s32 %v630, 144
        %v2749 = vadd.s32 %v630, 152
        %v2750 = vadd.s32 %v630, 160
        %v2751 = vadd.s32 %v630, 168
        %v2752 = vadd.s32 %v630, 176
        %v2753 = vadd.s32 %v630, 184
        %v2754 = vadd.s32 %v630, 192
        %v2755 = vadd.s32 %v630, 200
        %v2756 = vadd.s32 %v630, 208
        %vm2757 = vcmp.ge.s32.totalorder %v630, 144
        %vm2758 = vcmp.ge.s32.totalorder %v2731, 144
        %vm2759 = vcmp.ge.s32.totalorder %v2732, 144
        %vm2760 = vcmp.ge.s32.totalorder %v2733, 144
        %vm2761 = vcmp.ge.s32.totalorder %v2734, 144
        %vm2762 = vcmp.ge.s32.totalorder %v2735, 144
        %vm2763 = vcmp.ge.s32.totalorder %v2736, 144
        %vm2764 = vcmp.ge.s32.totalorder %v2737, 144
        %vm2765 = vcmp.ge.s32.totalorder %v2738, 144
        %vm2766 = vcmp.ge.s32.totalorder %v2739, 144
        %vm2767 = vcmp.ge.s32.totalorder %v2740, 144
        %vm2768 = vcmp.ge.s32.totalorder %v2741, 144
        %vm2769 = vcmp.ge.s32.totalorder %v2742, 144
        %vm2770 = vcmp.ge.s32.totalorder %v2743, 144
        %vm2771 = vcmp.ge.s32.totalorder %v2744, 144
        %vm2772 = vcmp.ge.s32.totalorder %v2745, 144
        %vm2773 = vcmp.ge.s32.totalorder %v2746, 144
        %vm2774 = vcmp.ge.s32.totalorder %v2747, 144
        %vm2775 = vcmp.ge.s32.totalorder %v2748, 144
        %vm2776 = vcmp.ge.s32.totalorder %v2749, 144
        %vm2777 = vcmp.ge.s32.totalorder %v2750, 144
        %vm2778 = vcmp.ge.s32.totalorder %v2751, 144
        %vm2779 = vcmp.ge.s32.totalorder %v2752, 144
        %vm2780 = vcmp.ge.s32.totalorder %v2753, 144
        %vm2781 = vcmp.ge.s32.totalorder %v2754, 144
        %vm2782 = vcmp.ge.s32.totalorder %v2755, 144
        %vm2783 = vcmp.ge.s32.totalorder %v2756, 144
        %vm2784 = vcmp.lt.s32.totalorder %v630, 216
        %vm2785 = vcmp.lt.s32.totalorder %v2731, 216
        %vm2786 = vcmp.lt.s32.totalorder %v2732, 216
        %vm2787 = vcmp.lt.s32.totalorder %v2733, 216
        %vm2788 = vcmp.lt.s32.totalorder %v2734, 216
        %vm2789 = vcmp.lt.s32.totalorder %v2735, 216
        %vm2790 = vcmp.lt.s32.totalorder %v2736, 216
        %vm2791 = vcmp.lt.s32.totalorder %v2737, 216
        %vm2792 = vcmp.lt.s32.totalorder %v2738, 216
        %vm2793 = vcmp.lt.s32.totalorder %v2739, 216
        %vm2794 = vcmp.lt.s32.totalorder %v2740, 216
        %vm2795 = vcmp.lt.s32.totalorder %v2741, 216
        %vm2796 = vcmp.lt.s32.totalorder %v2742, 216
        %vm2797 = vcmp.lt.s32.totalorder %v2743, 216
        %vm2798 = vcmp.lt.s32.totalorder %v2744, 216
        %vm2799 = vcmp.lt.s32.totalorder %v2745, 216
        %vm2800 = vcmp.lt.s32.totalorder %v2746, 216
        %vm2801 = vcmp.lt.s32.totalorder %v2747, 216
        %vm2802 = vcmp.lt.s32.totalorder %v2748, 216
        %vm2803 = vcmp.lt.s32.totalorder %v2749, 216
        %vm2804 = vcmp.lt.s32.totalorder %v2750, 216
        %vm2805 = vcmp.lt.s32.totalorder %v2751, 216
        %vm2806 = vcmp.lt.s32.totalorder %v2752, 216
        %vm2807 = vcmp.lt.s32.totalorder %v2753, 216
        %vm2808 = vcmp.lt.s32.totalorder %v2754, 216
        %vm2809 = vcmp.lt.s32.totalorder %v2755, 216
        %vm2810 = vcmp.lt.s32.totalorder %v2756, 216
        %vm2811 = vmand %vm2757, %vm2784
        %vm2812 = vmand %vm2758, %vm2785
        %vm2813 = vmand %vm2759, %vm2786
        %vm2814 = vmand %vm2760, %vm2787
        %vm2815 = vmand %vm2761, %vm2788
        %vm2816 = vmand %vm2762, %vm2789
        %vm2817 = vmand %vm2763, %vm2790
        %vm2818 = vmand %vm2764, %vm2791
        %vm2819 = vmand %vm2765, %vm2792
        %vm2820 = vmand %vm2766, %vm2793
        %vm2821 = vmand %vm2767, %vm2794
        %vm2822 = vmand %vm2768, %vm2795
        %vm2823 = vmand %vm2769, %vm2796
        %vm2824 = vmand %vm2770, %vm2797
        %vm2825 = vmand %vm2771, %vm2798
        %vm2826 = vmand %vm2772, %vm2799
        %vm2827 = vmand %vm2773, %vm2800
        %vm2828 = vmand %vm2774, %vm2801
        %vm2829 = vmand %vm2775, %vm2802
        %vm2830 = vmand %vm2776, %vm2803
        %vm2831 = vmand %vm2777, %vm2804
        %vm2832 = vmand %vm2778, %vm2805
        %vm2833 = vmand %vm2779, %vm2806
        %vm2834 = vmand %vm2780, %vm2807
        %vm2835 = vmand %vm2781, %vm2808
        %vm2836 = vmand %vm2782, %vm2809
        %vm2837 = vmand %vm2783, %vm2810
        %v2838 = vxor.u32 %v2595, 2147483648
        %v2839 = vxor.u32 %v2597, 2147483648
        %v2840 = vxor.u32 %v2599, 2147483648
        %v2841 = vxor.u32 %v2601, 2147483648
        %v2842 = vxor.u32 %v2605, 2147483648
        %v2843 = vxor.u32 %v2607, 2147483648
        %v2844 = vxor.u32 %v2609, 2147483648
        %v2845 = vxor.u32 %v2611, 2147483648
        %v2846 = vxor.u32 %v2615, 2147483648
        %v2847 = vxor.u32 %v2617, 2147483648
        %v2848 = vxor.u32 %v2619, 2147483648
        %v2849 = vxor.u32 %v2621, 2147483648
        %v2850 = vxor.u32 %v2625, 2147483648
        %v2851 = vxor.u32 %v2627, 2147483648
        %v2852 = vxor.u32 %v2629, 2147483648
        %v2853 = vxor.u32 %v2631, 2147483648
        %v2854 = vxor.u32 %v2635, 2147483648
        %v2855 = vxor.u32 %v2637, 2147483648
        %v2856 = vxor.u32 %v2639, 2147483648
        %v2857 = vxor.u32 %v2641, 2147483648
        %v2858 = vxor.u32 %v2645, 2147483648
        %v2859 = vxor.u32 %v2647, 2147483648
        %v2860 = vxor.u32 %v2649, 2147483648
        %v2861 = vxor.u32 %v2651, 2147483648
        %v2862 = vxor.u32 %v2655, 2147483648
        %v2863 = vxor.u32 %v2657, 2147483648
        %v2864 = vxor.u32 %v2659, 2147483648
        %v2865 = vxor.u32 %v2661, 2147483648
        %v2866 = vxor.u32 %v2665, 2147483648
        %v2867 = vxor.u32 %v2667, 2147483648
        %v2868 = vxor.u32 %v2669, 2147483648
        %v2869 = vxor.u32 %v2671, 2147483648
        %v2870 = vxor.u32 %v2675, 2147483648
        %v2871 = vxor.u32 %v2677, 2147483648
        %v2872 = vxor.u32 %v2679, 2147483648
        %v2873 = vxor.u32 %v2681, 2147483648
        %v2874 = vxor.u32 %v2685, 2147483648
        %v2875 = vxor.u32 %v2687, 2147483648
        %v2876 = vxor.u32 %v2689, 2147483648
        %v2877 = vxor.u32 %v2691, 2147483648
        %v2878 = vxor.u32 %v2695, 2147483648
        %v2879 = vxor.u32 %v2697, 2147483648
        %v2880 = vxor.u32 %v2699, 2147483648
        %v2881 = vxor.u32 %v2701, 2147483648
        %v2882 = vxor.u32 %v2705, 2147483648
        %v2883 = vxor.u32 %v2707, 2147483648
        %v2884 = vxor.u32 %v2709, 2147483648
        %v2885 = vxor.u32 %v2711, 2147483648
        %v2886 = vxor.u32 %v2715, 2147483648
        %v2887 = vxor.u32 %v2717, 2147483648
        %v2888 = vxor.u32 %v2719, 2147483648
        %v2889 = vxor.u32 %v2721, 2147483648
        %v2890 = vxor.u32 %v2725, 2147483648
        %v2891 = vxor.u32 %v2727, 2147483648
        %v2892 = vmul.f32 %v2838, 1.442695
        %v2893 = vpow.pop %v2892
        %v2894 = vmul.f32 %v2839, 1.442695
        %v2895 = vpow.pop %v2894
        %v2896 = vmul.f32 %v2840, 1.442695
        %v2897 = vpow.pop %v2896
        %v2898 = vmul.f32 %v2841, 1.442695
        %v2899 = vpow.pop %v2898
        %v2900 = vmul.f32 %v2842, 1.442695
        %v2901 = vpow.pop %v2900
        %v2902 = vmul.f32 %v2843, 1.442695
        %v2903 = vpow.pop %v2902
        %v2904 = vmul.f32 %v2844, 1.442695
        %v2905 = vpow.pop %v2904
        %v2906 = vmul.f32 %v2845, 1.442695
        %v2907 = vpow.pop %v2906
        %v2908 = vmul.f32 %v2846, 1.442695
        %v2909 = vpow.pop %v2908
        %v2910 = vmul.f32 %v2847, 1.442695
        %v2911 = vpow.pop %v2910
        %v2912 = vmul.f32 %v2848, 1.442695
        %v2913 = vpow.pop %v2912
        %v2914 = vmul.f32 %v2849, 1.442695
        %v2915 = vpow.pop %v2914
        %v2916 = vmul.f32 %v2850, 1.442695
        %v2917 = vpow.pop %v2916
        %v2918 = vmul.f32 %v2851, 1.442695
        %v2919 = vpow.pop %v2918
        %v2920 = vmul.f32 %v2852, 1.442695
        %v2921 = vpow.pop %v2920
        %v2922 = vmul.f32 %v2853, 1.442695
        %v2923 = vpow.pop %v2922
        %v2924 = vmul.f32 %v2854, 1.442695
        %v2925 = vpow.pop %v2924
        %v2926 = vmul.f32 %v2855, 1.442695
        %v2927 = vpow.pop %v2926
        %v2928 = vmul.f32 %v2856, 1.442695
        %v2929 = vpow.pop %v2928
        %v2930 = vmul.f32 %v2857, 1.442695
        %v2931 = vpow.pop %v2930
        %v2932 = vmul.f32 %v2858, 1.442695
        %v2933 = vpow.pop %v2932
        %v2934 = vmul.f32 %v2859, 1.442695
        %v2935 = vpow.pop %v2934
        %v2936 = vmul.f32 %v2860, 1.442695
        %v2937 = vpow.pop %v2936
        %v2938 = vmul.f32 %v2861, 1.442695
        %v2939 = vpow.pop %v2938
        %v2940 = vmul.f32 %v2862, 1.442695
        %v2941 = vpow.pop %v2940
        %v2942 = vmul.f32 %v2863, 1.442695
        %v2943 = vpow.pop %v2942
        %v2944 = vmul.f32 %v2864, 1.442695
        %v2945 = vpow.pop %v2944
        %v2946 = vmul.f32 %v2865, 1.442695
        %v2947 = vpow.pop %v2946
        %v2948 = vmul.f32 %v2866, 1.442695
        %v2949 = vpow.pop %v2948
        %v2950 = vmul.f32 %v2867, 1.442695
        %v2951 = vpow.pop %v2950
        %v2952 = vmul.f32 %v2868, 1.442695
        %v2953 = vpow.pop %v2952
        %v2954 = vmul.f32 %v2869, 1.442695
        %v2955 = vpow.pop %v2954
        %v2956 = vmul.f32 %v2870, 1.442695
        %v2957 = vpow.pop %v2956
        %v2958 = vmul.f32 %v2871, 1.442695
        %v2959 = vpow.pop %v2958
        %v2960 = vmul.f32 %v2872, 1.442695
        %v2961 = vpow.pop %v2960
        %v2962 = vmul.f32 %v2873, 1.442695
        %v2963 = vpow.pop %v2962
        %v2964 = vmul.f32 %v2874, 1.442695
        %v2965 = vpow.pop %v2964
        %v2966 = vmul.f32 %v2875, 1.442695
        %v2967 = vpow.pop %v2966
        %v2968 = vmul.f32 %v2876, 1.442695
        %v2969 = vpow.pop %v2968
        %v2970 = vmul.f32 %v2877, 1.442695
        %v2971 = vpow.pop %v2970
        %v2972 = vmul.f32 %v2878, 1.442695
        %v2973 = vpow.pop %v2972
        %v2974 = vmul.f32 %v2879, 1.442695
        %v2975 = vpow.pop %v2974
        %v2976 = vmul.f32 %v2880, 1.442695
        %v2977 = vpow.pop %v2976
        %v2978 = vmul.f32 %v2881, 1.442695
        %v2979 = vpow.pop %v2978
        %v2980 = vmul.f32 %v2882, 1.442695
        %v2981 = vpow.pop %v2980
        %v2982 = vmul.f32 %v2883, 1.442695
        %v2983 = vpow.pop %v2982
        %v2984 = vmul.f32 %v2884, 1.442695
        %v2985 = vpow.pop %v2984
        %v2986 = vmul.f32 %v2885, 1.442695
        %v2987 = vpow.pop %v2986
        %v2988 = vmul.f32 %v2886, 1.442695
        %v2989 = vpow.pop %v2988
        %v2990 = vmul.f32 %v2887, 1.442695
        %v2991 = vpow.pop %v2990
        %v2992 = vmul.f32 %v2888, 1.442695
        %v2993 = vpow.pop %v2992
        %v2994 = vmul.f32 %v2889, 1.442695
        %v2995 = vpow.pop %v2994
        %v2996 = vmul.f32 %v2890, 1.442695
        %v2997 = vpow.pop %v2996
        %v2998 = vmul.f32 %v2891, 1.442695
        %v2999 = vpow.pop %v2998
        %v3000 = vadd.f32 %v2893, 1.0
        %v3001 = vadd.f32 %v2895, 1.0
        %v3002 = vadd.f32 %v2897, 1.0
        %v3003 = vadd.f32 %v2899, 1.0
        %v3004 = vadd.f32 %v2901, 1.0
        %v3005 = vadd.f32 %v2903, 1.0
        %v3006 = vadd.f32 %v2905, 1.0
        %v3007 = vadd.f32 %v2907, 1.0
        %v3008 = vadd.f32 %v2909, 1.0
        %v3009 = vadd.f32 %v2911, 1.0
        %v3010 = vadd.f32 %v2913, 1.0
        %v3011 = vadd.f32 %v2915, 1.0
        %v3012 = vadd.f32 %v2917, 1.0
        %v3013 = vadd.f32 %v2919, 1.0
        %v3014 = vadd.f32 %v2921, 1.0
        %v3015 = vadd.f32 %v2923, 1.0
        %v3016 = vadd.f32 %v2925, 1.0
        %v3017 = vadd.f32 %v2927, 1.0
        %v3018 = vadd.f32 %v2929, 1.0
        %v3019 = vadd.f32 %v2931, 1.0
        %v3020 = vadd.f32 %v2933, 1.0
        %v3021 = vadd.f32 %v2935, 1.0
        %v3022 = vadd.f32 %v2937, 1.0
        %v3023 = vadd.f32 %v2939, 1.0
        %v3024 = vadd.f32 %v2941, 1.0
        %v3025 = vadd.f32 %v2943, 1.0
        %v3026 = vadd.f32 %v2945, 1.0
        %v3027 = vadd.f32 %v2947, 1.0
        %v3028 = vadd.f32 %v2949, 1.0
        %v3029 = vadd.f32 %v2951, 1.0
        %v3030 = vadd.f32 %v2953, 1.0
        %v3031 = vadd.f32 %v2955, 1.0
        %v3032 = vadd.f32 %v2957, 1.0
        %v3033 = vadd.f32 %v2959, 1.0
        %v3034 = vadd.f32 %v2961, 1.0
        %v3035 = vadd.f32 %v2963, 1.0
        %v3036 = vadd.f32 %v2965, 1.0
        %v3037 = vadd.f32 %v2967, 1.0
        %v3038 = vadd.f32 %v2969, 1.0
        %v3039 = vadd.f32 %v2971, 1.0
        %v3040 = vadd.f32 %v2973, 1.0
        %v3041 = vadd.f32 %v2975, 1.0
        %v3042 = vadd.f32 %v2977, 1.0
        %v3043 = vadd.f32 %v2979, 1.0
        %v3044 = vadd.f32 %v2981, 1.0
        %v3045 = vadd.f32 %v2983, 1.0
        %v3046 = vadd.f32 %v2985, 1.0
        %v3047 = vadd.f32 %v2987, 1.0
        %v3048 = vadd.f32 %v2989, 1.0
        %v3049 = vadd.f32 %v2991, 1.0
        %v3050 = vadd.f32 %v2993, 1.0
        %v3051 = vadd.f32 %v2995, 1.0
        %v3052 = vadd.f32 %v2997, 1.0
        %v3053 = vadd.f32 %v2999, 1.0
        %v3054 = vrcp.pop %v3000
        %v3055 = vmul.f32 1.0, %v3054
        %v3056 = vrcp.pop %v3001
        %v3057 = vmul.f32 1.0, %v3056
        %v3058 = vrcp.pop %v3002
        %v3059 = vmul.f32 1.0, %v3058
        %v3060 = vrcp.pop %v3003
        %v3061 = vmul.f32 1.0, %v3060
        %v3062 = vrcp.pop %v3004
        %v3063 = vmul.f32 1.0, %v3062
        %v3064 = vrcp.pop %v3005
        %v3065 = vmul.f32 1.0, %v3064
        %v3066 = vrcp.pop %v3006
        %v3067 = vmul.f32 1.0, %v3066
        %v3068 = vrcp.pop %v3007
        %v3069 = vmul.f32 1.0, %v3068
        %v3070 = vrcp.pop %v3008
        %v3071 = vmul.f32 1.0, %v3070
        %v3072 = vrcp.pop %v3009
        %v3073 = vmul.f32 1.0, %v3072
        %v3074 = vrcp.pop %v3010
        %v3075 = vmul.f32 1.0, %v3074
        %v3076 = vrcp.pop %v3011
        %v3077 = vmul.f32 1.0, %v3076
        %v3078 = vrcp.pop %v3012
        %v3079 = vmul.f32 1.0, %v3078
        %v3080 = vrcp.pop %v3013
        %v3081 = vmul.f32 1.0, %v3080
        %v3082 = vrcp.pop %v3014
        %v3083 = vmul.f32 1.0, %v3082
        %v3084 = vrcp.pop %v3015
        %v3085 = vmul.f32 1.0, %v3084
        %v3086 = vrcp.pop %v3016
        %v3087 = vmul.f32 1.0, %v3086
        %v3088 = vrcp.pop %v3017
        %v3089 = vmul.f32 1.0, %v3088
        %v3090 = vrcp.pop %v3018
        %v3091 = vmul.f32 1.0, %v3090
        %v3092 = vrcp.pop %v3019
        %v3093 = vmul.f32 1.0, %v3092
        %v3094 = vrcp.pop %v3020
        %v3095 = vmul.f32 1.0, %v3094
        %v3096 = vrcp.pop %v3021
        %v3097 = vmul.f32 1.0, %v3096
        %v3098 = vrcp.pop %v3022
        %v3099 = vmul.f32 1.0, %v3098
        %v3100 = vrcp.pop %v3023
        %v3101 = vmul.f32 1.0, %v3100
        %v3102 = vrcp.pop %v3024
        %v3103 = vmul.f32 1.0, %v3102
        %v3104 = vrcp.pop %v3025
        %v3105 = vmul.f32 1.0, %v3104
        %v3106 = vrcp.pop %v3026
        %v3107 = vmul.f32 1.0, %v3106
        %v3108 = vrcp.pop %v3027
        %v3109 = vmul.f32 1.0, %v3108
        %v3110 = vrcp.pop %v3028
        %v3111 = vmul.f32 1.0, %v3110
        %v3112 = vrcp.pop %v3029
        %v3113 = vmul.f32 1.0, %v3112
        %v3114 = vrcp.pop %v3030
        %v3115 = vmul.f32 1.0, %v3114
        %v3116 = vrcp.pop %v3031
        %v3117 = vmul.f32 1.0, %v3116
        %v3118 = vrcp.pop %v3032
        %v3119 = vmul.f32 1.0, %v3118
        %v3120 = vrcp.pop %v3033
        %v3121 = vmul.f32 1.0, %v3120
        %v3122 = vrcp.pop %v3034
        %v3123 = vmul.f32 1.0, %v3122
        %v3124 = vrcp.pop %v3035
        %v3125 = vmul.f32 1.0, %v3124
        %v3126 = vrcp.pop %v3036
        %v3127 = vmul.f32 1.0, %v3126
        %v3128 = vrcp.pop %v3037
        %v3129 = vmul.f32 1.0, %v3128
        %v3130 = vrcp.pop %v3038
        %v3131 = vmul.f32 1.0, %v3130
        %v3132 = vrcp.pop %v3039
        %v3133 = vmul.f32 1.0, %v3132
        %v3134 = vrcp.pop %v3040
        %v3135 = vmul.f32 1.0, %v3134
        %v3136 = vrcp.pop %v3041
        %v3137 = vmul.f32 1.0, %v3136
        %v3138 = vrcp.pop %v3042
        %v3139 = vmul.f32 1.0, %v3138
        %v3140 = vrcp.pop %v3043
        %v3141 = vmul.f32 1.0, %v3140
        %v3142 = vrcp.pop %v3044
        %v3143 = vmul.f32 1.0, %v3142
        %v3144 = vrcp.pop %v3045
        %v3145 = vmul.f32 1.0, %v3144
        %v3146 = vrcp.pop %v3046
        %v3147 = vmul.f32 1.0, %v3146
        %v3148 = vrcp.pop %v3047
        %v3149 = vmul.f32 1.0, %v3148
        %v3150 = vrcp.pop %v3048
        %v3151 = vmul.f32 1.0, %v3150
        %v3152 = vrcp.pop %v3049
        %v3153 = vmul.f32 1.0, %v3152
        %v3154 = vrcp.pop %v3050
        %v3155 = vmul.f32 1.0, %v3154
        %v3156 = vrcp.pop %v3051
        %v3157 = vmul.f32 1.0, %v3156
        %v3158 = vrcp.pop %v3052
        %v3159 = vmul.f32 1.0, %v3158
        %v3160 = vrcp.pop %v3053
        %v3161 = vmul.f32 1.0, %v3160
        %v3162 = vsel %vm2811, 1, 0
        %v3163 = vsel %vm2812, 1, 0
        %v3164 = vsel %vm2813, 1, 0
        %v3165 = vsel %vm2814, 1, 0
        %v3166 = vsel %vm2815, 1, 0
        %v3167 = vsel %vm2816, 1, 0
        %v3168 = vsel %vm2817, 1, 0
        %v3169 = vsel %vm2818, 1, 0
        %v3170 = vsel %vm2819, 1, 0
        %v3171 = vsel %vm2820, 1, 0
        %v3172 = vsel %vm2821, 1, 0
        %v3173 = vsel %vm2822, 1, 0
        %v3174 = vsel %vm2823, 1, 0
        %v3175 = vsel %vm2824, 1, 0
        %v3176 = vsel %vm2825, 1, 0
        %v3177 = vsel %vm2826, 1, 0
        %v3178 = vsel %vm2827, 1, 0
        %v3179 = vsel %vm2828, 1, 0
        %v3180 = vsel %vm2829, 1, 0
        %v3181 = vsel %vm2830, 1, 0
        %v3182 = vsel %vm2831, 1, 0
        %v3183 = vsel %vm2832, 1, 0
        %v3184 = vsel %vm2833, 1, 0
        %v3185 = vsel %vm2834, 1, 0
        %v3186 = vsel %vm2835, 1, 0
        %v3187 = vsel %vm2836, 1, 0
        %v3188 = vsel %vm2837, 1, 0
        %vm3189 = vcmp.eq.s32.totalorder %v3162, 1
        %vm3190 = vcmp.eq.s32.totalorder %v3163, 1
        %vm3191 = vcmp.eq.s32.totalorder %v3164, 1
        %vm3192 = vcmp.eq.s32.totalorder %v3165, 1
        %vm3193 = vcmp.eq.s32.totalorder %v3166, 1
        %vm3194 = vcmp.eq.s32.totalorder %v3167, 1
        %vm3195 = vcmp.eq.s32.totalorder %v3168, 1
        %vm3196 = vcmp.eq.s32.totalorder %v3169, 1
        %vm3197 = vcmp.eq.s32.totalorder %v3170, 1
        %vm3198 = vcmp.eq.s32.totalorder %v3171, 1
        %vm3199 = vcmp.eq.s32.totalorder %v3172, 1
        %vm3200 = vcmp.eq.s32.totalorder %v3173, 1
        %vm3201 = vcmp.eq.s32.totalorder %v3174, 1
        %vm3202 = vcmp.eq.s32.totalorder %v3175, 1
        %vm3203 = vcmp.eq.s32.totalorder %v3176, 1
        %vm3204 = vcmp.eq.s32.totalorder %v3177, 1
        %vm3205 = vcmp.eq.s32.totalorder %v3178, 1
        %vm3206 = vcmp.eq.s32.totalorder %v3179, 1
        %vm3207 = vcmp.eq.s32.totalorder %v3180, 1
        %vm3208 = vcmp.eq.s32.totalorder %v3181, 1
        %vm3209 = vcmp.eq.s32.totalorder %v3182, 1
        %vm3210 = vcmp.eq.s32.totalorder %v3183, 1
        %vm3211 = vcmp.eq.s32.totalorder %v3184, 1
        %vm3212 = vcmp.eq.s32.totalorder %v3185, 1
        %vm3213 = vcmp.eq.s32.totalorder %v3186, 1
        %vm3214 = vcmp.eq.s32.totalorder %v3187, 1
        %vm3215 = vcmp.eq.s32.totalorder %v3188, 1
        %v3216 = vsel %vm3189, %v3055, %v2595
        %v3217 = vsel %vm3189, %v3057, %v2597
        %v3218 = vsel %vm3190, %v3059, %v2599
        %v3219 = vsel %vm3190, %v3061, %v2601
        %v3220 = vsel %vm3191, %v3063, %v2605
        %v3221 = vsel %vm3191, %v3065, %v2607
        %v3222 = vsel %vm3192, %v3067, %v2609
        %v3223 = vsel %vm3192, %v3069, %v2611
        %v3224 = vsel %vm3193, %v3071, %v2615
        %v3225 = vsel %vm3193, %v3073, %v2617
        %v3226 = vsel %vm3194, %v3075, %v2619
        %v3227 = vsel %vm3194, %v3077, %v2621
        %v3228 = vsel %vm3195, %v3079, %v2625
        %v3229 = vsel %vm3195, %v3081, %v2627
        %v3230 = vsel %vm3196, %v3083, %v2629
        %v3231 = vsel %vm3196, %v3085, %v2631
        %v3232 = vsel %vm3197, %v3087, %v2635
        %v3233 = vsel %vm3197, %v3089, %v2637
        %v3234 = vsel %vm3198, %v3091, %v2639
        %v3235 = vsel %vm3198, %v3093, %v2641
        %v3236 = vsel %vm3199, %v3095, %v2645
        %v3237 = vsel %vm3199, %v3097, %v2647
        %v3238 = vsel %vm3200, %v3099, %v2649
        %v3239 = vsel %vm3200, %v3101, %v2651
        %v3240 = vsel %vm3201, %v3103, %v2655
        %v3241 = vsel %vm3201, %v3105, %v2657
        %v3242 = vsel %vm3202, %v3107, %v2659
        %v3243 = vsel %vm3202, %v3109, %v2661
        %v3244 = vsel %vm3203, %v3111, %v2665
        %v3245 = vsel %vm3203, %v3113, %v2667
        %v3246 = vsel %vm3204, %v3115, %v2669
        %v3247 = vsel %vm3204, %v3117, %v2671
        %v3248 = vsel %vm3205, %v3119, %v2675
        %v3249 = vsel %vm3205, %v3121, %v2677
        %v3250 = vsel %vm3206, %v3123, %v2679
        %v3251 = vsel %vm3206, %v3125, %v2681
        %v3252 = vsel %vm3207, %v3127, %v2685
        %v3253 = vsel %vm3207, %v3129, %v2687
        %v3254 = vsel %vm3208, %v3131, %v2689
        %v3255 = vsel %vm3208, %v3133, %v2691
        %v3256 = vsel %vm3209, %v3135, %v2695
        %v3257 = vsel %vm3209, %v3137, %v2697
        %v3258 = vsel %vm3210, %v3139, %v2699
        %v3259 = vsel %vm3210, %v3141, %v2701
        %v3260 = vsel %vm3211, %v3143, %v2705
        %v3261 = vsel %vm3211, %v3145, %v2707
        %v3262 = vsel %vm3212, %v3147, %v2709
        %v3263 = vsel %vm3212, %v3149, %v2711
        %v3264 = vsel %vm3213, %v3151, %v2715
        %v3265 = vsel %vm3213, %v3153, %v2717
        %v3266 = vsel %vm3214, %v3155, %v2719
        %v3267 = vsel %vm3214, %v3157, %v2721
        %v3268 = vsel %vm3215, %v3159, %v2725
        %v3269 = vsel %vm3215, %v3161, %v2727
        %3270 = vst [vmem:[%s556] sm:$0xff] %v3216
        %3271 = vst [vmem:[%s556 + $0x8] sm:$0xff] %v3217
        %3272 = vst [vmem:[%s556 + $0x10] sm:$0xff] %v3218
        %3273 = vst [vmem:[%s556 + $0x18] sm:$0xff] %v3219
        %3274 = vst [vmem:[%s556 + $0x20] sm:$0xff] %v3220
        %3275 = vst [vmem:[%s556 + $0x28] sm:$0xff] %v3221
        %3276 = vst [vmem:[%s556 + $0x30] sm:$0xff] %v3222
        %3277 = vst [vmem:[%s556 + $0x38] sm:$0xff] %v3223
        %3278 = vst [vmem:[%s556 + $0x40] sm:$0xff] %v3224
        %3279 = vst [vmem:[%s556 + $0x48] sm:$0xff] %v3225
        %3280 = vst [vmem:[%s556 + $0x50] sm:$0xff] %v3226
        %3281 = vst [vmem:[%s556 + $0x58] sm:$0xff] %v3227
        %3282 = vst [vmem:[%s556 + $0x60] sm:$0xff] %v3228
        %3283 = vst [vmem:[%s556 + $0x68] sm:$0xff] %v3229
        %3284 = vst [vmem:[%s556 + $0x70] sm:$0xff] %v3230
        %3285 = vst [vmem:[%s556 + $0x78] sm:$0xff] %v3231
        %3286 = vst [vmem:[%s556 + $0x80] sm:$0xff] %v3232
        %3287 = vst [vmem:[%s556 + $0x88] sm:$0xff] %v3233
        %3288 = vst [vmem:[%s556 + $0x90] sm:$0xff] %v3234
        %3289 = vst [vmem:[%s556 + $0x98] sm:$0xff] %v3235
        %3290 = vst [vmem:[%s556 + $0xa0] sm:$0xff] %v3236
        %3291 = vst [vmem:[%s556 + $0xa8] sm:$0xff] %v3237
        %3292 = vst [vmem:[%s556 + $0xb0] sm:$0xff] %v3238
        %3293 = vst [vmem:[%s556 + $0xb8] sm:$0xff] %v3239
        %3294 = vst [vmem:[%s556 + $0xc0] sm:$0xff] %v3240
        %3295 = vst [vmem:[%s556 + $0xc8] sm:$0xff] %v3241
        %3296 = vst [vmem:[%s556 + $0xd0] sm:$0xff] %v3242
        %3297 = vst [vmem:[%s556 + $0xd8] sm:$0xff] %v3243
        %3298 = vst [vmem:[%s556 + $0xe0] sm:$0xff] %v3244
        %3299 = vst [vmem:[%s556 + $0xe8] sm:$0xff] %v3245
        %3300 = vst [vmem:[%s556 + $0xf0] sm:$0xff] %v3246
        %3301 = vst [vmem:[%s556 + $0xf8] sm:$0xff] %v3247
        %3302 = vst [vmem:[%s556 + $0x100] sm:$0xff] %v3248
        %3303 = vst [vmem:[%s556 + $0x108] sm:$0xff] %v3249
        %3304 = vst [vmem:[%s556 + $0x110] sm:$0xff] %v3250
        %3305 = vst [vmem:[%s556 + $0x118] sm:$0xff] %v3251
        %3306 = vst [vmem:[%s556 + $0x120] sm:$0xff] %v3252
        %3307 = vst [vmem:[%s556 + $0x128] sm:$0xff] %v3253
        %3308 = vst [vmem:[%s556 + $0x130] sm:$0xff] %v3254
        %3309 = vst [vmem:[%s556 + $0x138] sm:$0xff] %v3255
        %3310 = vst [vmem:[%s556 + $0x140] sm:$0xff] %v3256
        %3311 = vst [vmem:[%s556 + $0x148] sm:$0xff] %v3257
        %3312 = vst [vmem:[%s556 + $0x150] sm:$0xff] %v3258
        %3313 = vst [vmem:[%s556 + $0x158] sm:$0xff] %v3259
        %3314 = vst [vmem:[%s556 + $0x160] sm:$0xff] %v3260
        %3315 = vst [vmem:[%s556 + $0x168] sm:$0xff] %v3261
        %3316 = vst [vmem:[%s556 + $0x170] sm:$0xff] %v3262
        %3317 = vst [vmem:[%s556 + $0x178] sm:$0xff] %v3263
        %3318 = vst [vmem:[%s556 + $0x180] sm:$0xff] %v3264
        %3319 = vst [vmem:[%s556 + $0x188] sm:$0xff] %v3265
        %3320 = vst [vmem:[%s556 + $0x190] sm:$0xff] %v3266
        %3321 = vst [vmem:[%s556 + $0x198] sm:$0xff] %v3267
        %3322 = vst [vmem:[%s556 + $0x1a0] sm:$0xff] %v3268
        %3323 = vst [vmem:[%s556 + $0x1a8] sm:$0xff] %v3269
        %p3324 = scmp.lt.s32.totalorder %s28, 1
        %s3325 = scalar_select %p3324, %s28, 1
        %s3326 = smul.addr %s3325, 8
        %s3327 = smul.addr %s3326, 8
        %s3328 = scalar_lea.vmem %s12, %s3327
        %p3329 = scmp.lt.s32.totalorder %s28, 1
        %s3330 = scalar_select %p3329, %s28, 1
        %s3331 = smul.addr %s3330, 8
        %s3332 = smul.addr %s3331, 8
        %s3333 = scalar_lea.vmem %s13, %s3332
        %p3334 = scmp.lt.s32.totalorder %s28, 1
        %s3335 = scalar_select %p3334, %s28, 1
        %s3336 = smul.addr %s3335, 54
        %s3337 = smul.addr %s3336, 8
        %s3338 = scalar_lea.vmem %s14, %s3337
        // Predicated region
        $region81: #{feature_align_2.2} parent=67 // pred_check
          %p3339 = pneg %p308
        $region82: #{feature_align_2.2} parent=67 // pred_check_branch
          %3341 = sbr.rel (%p3339) target = $region84
        $region83: #{feature_align_2.2} parent=67 // pred_region
          _
        $region84: #{feature_align_2.2} parent=67 // pred_fallthru
          _
        // Predicated region
        $region85: #{feature_align_2.2} parent=67 // pred_check
          %p3342 = pneg %p334
        $region86: #{feature_align_2.2} parent=67 // pred_check_branch
          %3344 = sbr.rel (%p3342) target = $region88
        $region87: #{feature_align_2.2} parent=67 // pred_region
          _
        $region88: #{feature_align_2.2} parent=67 // pred_fallthru
          _
        // Predicated region
        $region89: #{feature_align_2.2} parent=67 // pred_check
          %p3345 = pneg %p360
        $region90: #{feature_align_2.2} parent=67 // pred_check_branch
          %3347 = sbr.rel (%p3345) target = $region92
        $region91: #{feature_align_2.2} parent=67 // pred_region
          _
        $region92: #{feature_align_2.2} parent=67 // pred_fallthru
          _
      $region68: #{feature_align_2.2} parent=5 // pred_fallthru
        _
      %p3348 = scmp.le.s32.totalorder 2, %s23
      // Predicated region
      $region93: #{feature_align_2.2} parent=5 // pred_check
        %p3349 = pneg %p3348
      $region94: #{feature_align_2.2} parent=5 // pred_check_branch
        %3351 = sbr.rel (%p3349) target = $region96
      $region95: #{feature_align_2.2} parent=5 // pred_region
        %s3352 = ssub.s32 %s23, 2
        // Predicated region
        $region97: #{feature_align_2.2} parent=95 // pred_check
          %p3353 = pneg %p314
        $region98: #{feature_align_2.2} parent=95 // pred_check_branch
          %3355 = sbr.rel (%p3353) target = $region100
        $region99: #{feature_align_2.2} parent=95 // pred_region
          %p3356 = scmp.lt.s32.totalorder %s29, 1
          %s3357 = scalar_select %p3356, %s29, 1
          %s3358 = smul.addr %s3357, 8
          %s3359 = smul.addr %s3358, 8
          %s3360 = scalar_lea.vmem %s12, %s3359
        $region100: #{feature_align_2.2} parent=95 // pred_fallthru
          _
        // Predicated region
        $region101: #{feature_align_2.2} parent=95 // pred_check
          %p3361 = pneg %p340
        $region102: #{feature_align_2.2} parent=95 // pred_check_branch
          %3363 = sbr.rel (%p3361) target = $region104
        $region103: #{feature_align_2.2} parent=95 // pred_region
          %p3364 = scmp.lt.s32.totalorder %s29, 1
          %s3365 = scalar_select %p3364, %s29, 1
          %s3366 = smul.addr %s3365, 8
          %s3367 = smul.addr %s3366, 8
          %s3368 = scalar_lea.vmem %s13, %s3367
        $region104: #{feature_align_2.2} parent=95 // pred_fallthru
          _
        // Predicated region
        $region105: #{feature_align_2.2} parent=95 // pred_check
          %p3369 = pneg %p366
        $region106: #{feature_align_2.2} parent=95 // pred_check_branch
          %3371 = sbr.rel (%p3369) target = $region108
        $region107: #{feature_align_2.2} parent=95 // pred_region
          %p3372 = scmp.lt.s32.totalorder %s29, 1
          %s3373 = scalar_select %p3372, %s29, 1
          %s3374 = smul.addr %s3373, 54
          %s3375 = smul.addr %s3374, 8
          %s3376 = scalar_lea.vmem %s14, %s3375
        $region108: #{feature_align_2.2} parent=95 // pred_fallthru
          _
      $region96: #{feature_align_2.2} parent=5 // pred_fallthru
        _
    $region6: #{feature_align_2.2} parent=1 // loop_footer
      %s27 = sadd.s32 1, %s23
    $region7: #{feature_align_2.2} parent=1 // loop_footer_branch
      %22 = sbr.rel target = $region3
    $region8: #{feature_align_2.2} parent=1 // loop_exit
      _
    %3377 = vsyncpa [#allocation3], 1
    %s3378 = scalar_lea.sflag [#allocation3], 1
    %3379 = vsyncpa %s3378, 1
    %3380 = vsyncpa [#allocation5], 1

// kernel: feature_align_2.3
$region0: #{feature_align_2.3}
  #allocation0 [shape = 'u32[]', space=smem, size = 0x4, offset = 0x4, fixed_abs, tag = 'smem constant byte address 0x4 - core index']
  #allocation1 [shape = 'u32[144,128]{1,0:T(1,128)}', space=vmem, size = 0x12000, scoped, tag = 'internal scratch']
  %s0 = inlined_call_operand.vmem [shape: bf16[2,288,256], index: 0, kind: input, shape index: {}]
  %s1 = inlined_call_operand.vmem [shape: f32[2,32,256], index: 1, kind: input, shape index: {}]
  %s2 = inlined_call_operand.vmem [shape: bf16[32,288], index: 2, kind: input, shape index: {}]
  %s3 = inlined_call_operand.vmem [shape: f32[32,1], index: 3, kind: input, shape index: {}]
  %s4 = inlined_call_operand.vmem [shape: f32[2,32,256], index: 4, kind: output, shape index: {}]
  %s5 = sld [smem:[#allocation0]]
  $region49: #{feature_align_2.3} parent=0
    _
  %s7 = ssub.s32 1, %s5
  %s8 = scalar_select 0, %s7, %s5
  loop: start=0, step=1, limit=4
  $region2: #{feature_align_2.3} parent=0 // loop_pre_header
    _
  $region3: #{feature_align_2.3} parent=0 // loop_header
    %s10 = sphi 0, %s14
    %p11 = scmp.ge.s32.totalorder %s10, 4
    %s20 = sphi 0, %s22
    %s23 = sphi 0, %s20
    %s24 = sphi 0, %s23
    %s40 = sphi 0, %s24
    %s46 = sphi 0, %s48
    %s49 = sphi 0, %s46
    %s50 = sphi 0, %s49
    %s66 = sphi 0, %s50
    %s70 = sphi 0, %s70
    %s72 = sphi 0, %s70
    %s73 = sphi 0, %s72
    %s87 = sphi 0, %s73
    %s91 = sphi 0, %s91
    %s93 = sphi 0, %s91
    %s94 = sphi 0, %s93
    %s108 = sphi 0, %s94
    %s114 = sphi 0, %s116
    %s117 = sphi 0, %s114
    %s118 = sphi 0, %s117
    %s134 = sphi 0, %s118
  $region4: #{feature_align_2.3} parent=0 // loop_header_branch
    %13 = sbr.rel (%p11) target = $region8
  $region5: #{feature_align_2.3} parent=0 // loop_body
    %s15 = ssub.s32 %s10, 1
    %s16 = ssub.s32 %s10, 2
    %s17 = sadd.s32 %s10, 1
    %s18 = ssub.s32 %s10, %s17
    %p19 = scmp.eq.s32.totalorder %s18, 0
    %s21 = sadd.s32 %s20, 1
    %s22 = scalar_select %p19, %s20, %s21
    %p25 = pneg %p19
    %p26 = scmp.eq.s32.totalorder %s10, 1
    %p27 = por %p25, %p26
    %p28 = scmp.ne.s32.totalorder %s20, %s23
    %p29 = scmp.eq.s32.totalorder %s10, 0
    %p30 = por %p28, %p29
    %p31 = scmp.ne.s32.totalorder %s20, %s23
    %p32 = scmp.eq.s32.totalorder %s15, 1
    %p33 = por %p31, %p32
    %p34 = scmp.ne.s32.totalorder %s23, %s24
    %p35 = scmp.eq.s32.totalorder %s15, 0
    %p36 = por %p34, %p35
    %p37 = scmp.ne.s32.totalorder %s23, %s24
    %p38 = scmp.eq.s32.totalorder %s16, 1
    %p39 = por %p37, %p38
    %p41 = scmp.ne.s32.totalorder %s24, %s40
    %p42 = scmp.eq.s32.totalorder %s16, 0
    %p43 = por %p41, %p42
    %s44 = ssub.s32 %s10, %s17
    %p45 = scmp.eq.s32.totalorder %s44, 0
    %s47 = sadd.s32 %s46, 1
    %s48 = scalar_select %p45, %s46, %s47
    %p51 = pneg %p45
    %p52 = scmp.eq.s32.totalorder %s10, 1
    %p53 = por %p51, %p52
    %p54 = scmp.ne.s32.totalorder %s46, %s49
    %p55 = scmp.eq.s32.totalorder %s10, 0
    %p56 = por %p54, %p55
    %p57 = scmp.ne.s32.totalorder %s46, %s49
    %p58 = scmp.eq.s32.totalorder %s15, 1
    %p59 = por %p57, %p58
    %p60 = scmp.ne.s32.totalorder %s49, %s50
    %p61 = scmp.eq.s32.totalorder %s15, 0
    %p62 = por %p60, %p61
    %p63 = scmp.ne.s32.totalorder %s49, %s50
    %p64 = scmp.eq.s32.totalorder %s16, 1
    %p65 = por %p63, %p64
    %p67 = scmp.ne.s32.totalorder %s50, %s66
    %p68 = scmp.eq.s32.totalorder %s16, 0
    %p69 = por %p67, %p68
    %s71 = sadd.s32 %s70, 1
    %p74 = scmp.eq.s32.totalorder %s10, 1
    %p75 = scmp.ne.s32.totalorder %s70, %s72
    %p76 = scmp.eq.s32.totalorder %s10, 0
    %p77 = por %p75, %p76
    %p78 = scmp.ne.s32.totalorder %s70, %s72
    %p79 = scmp.eq.s32.totalorder %s15, 1
    %p80 = por %p78, %p79
    %p81 = scmp.ne.s32.totalorder %s72, %s73
    %p82 = scmp.eq.s32.totalorder %s15, 0
    %p83 = por %p81, %p82
    %p84 = scmp.ne.s32.totalorder %s72, %s73
    %p85 = scmp.eq.s32.totalorder %s16, 1
    %p86 = por %p84, %p85
    %p88 = scmp.ne.s32.totalorder %s73, %s87
    %p89 = scmp.eq.s32.totalorder %s16, 0
    %p90 = por %p88, %p89
    %s92 = sadd.s32 %s91, 1
    %p95 = scmp.eq.s32.totalorder %s10, 1
    %p96 = scmp.ne.s32.totalorder %s91, %s93
    %p97 = scmp.eq.s32.totalorder %s10, 0
    %p98 = por %p96, %p97
    %p99 = scmp.ne.s32.totalorder %s91, %s93
    %p100 = scmp.eq.s32.totalorder %s15, 1
    %p101 = por %p99, %p100
    %p102 = scmp.ne.s32.totalorder %s93, %s94
    %p103 = scmp.eq.s32.totalorder %s15, 0
    %p104 = por %p102, %p103
    %p105 = scmp.ne.s32.totalorder %s93, %s94
    %p106 = scmp.eq.s32.totalorder %s16, 1
    %p107 = por %p105, %p106
    %p109 = scmp.ne.s32.totalorder %s94, %s108
    %p110 = scmp.eq.s32.totalorder %s16, 0
    %p111 = por %p109, %p110
    %s112 = ssub.s32 %s10, %s17
    %p113 = scmp.eq.s32.totalorder %s112, 0
    %s115 = sadd.s32 %s114, 1
    %s116 = scalar_select %p113, %s114, %s115
    %p119 = pneg %p113
    %p120 = scmp.eq.s32.totalorder %s10, 1
    %p121 = por %p119, %p120
    %p122 = scmp.ne.s32.totalorder %s114, %s117
    %p123 = scmp.eq.s32.totalorder %s10, 0
    %p124 = por %p122, %p123
    %p125 = scmp.ne.s32.totalorder %s114, %s117
    %p126 = scmp.eq.s32.totalorder %s15, 1
    %p127 = por %p125, %p126
    %p128 = scmp.ne.s32.totalorder %s117, %s118
    %p129 = scmp.eq.s32.totalorder %s15, 0
    %p130 = por %p128, %p129
    %p131 = scmp.ne.s32.totalorder %s117, %s118
    %p132 = scmp.eq.s32.totalorder %s16, 1
    %p133 = por %p131, %p132
    %p135 = scmp.ne.s32.totalorder %s118, %s134
    %p136 = scmp.eq.s32.totalorder %s16, 0
    %p137 = por %p135, %p136
    %p138 = scmp.le.s32.totalorder 1, %s10
    %p139 = scmp.lt.s32.totalorder %s10, 3
    %p140 = pnand %p138, %p139
    %p141 = pneg %p140
    // Predicated region
    $region9: #{feature_align_2.3} parent=5 // pred_check
      _
    $region10: #{feature_align_2.3} parent=5 // pred_check_branch
      %143 = sbr.rel (%p140) target = $region12
    $region11: #{feature_align_2.3} parent=5 // pred_region
      %s144 = ssub.s32 %s10, 1
      // Predicated region
      $region13: #{feature_align_2.3} parent=11 // pred_check
        %p145 = pneg %p83
      $region14: #{feature_align_2.3} parent=11 // pred_check_branch
        %147 = sbr.rel (%p145) target = $region16
      $region15: #{feature_align_2.3} parent=11 // pred_region
        _
      $region16: #{feature_align_2.3} parent=11 // pred_fallthru
        _
      // Predicated region
      $region17: #{feature_align_2.3} parent=11 // pred_check
        %p148 = pneg %p104
      $region18: #{feature_align_2.3} parent=11 // pred_check_branch
        %150 = sbr.rel (%p148) target = $region20
      $region19: #{feature_align_2.3} parent=11 // pred_region
        _
      $region20: #{feature_align_2.3} parent=11 // pred_fallthru
        _
    $region12: #{feature_align_2.3} parent=5 // pred_fallthru
      _
    %p151 = scmp.lt.s32.totalorder %s10, 2
    // Predicated region
    $region21: #{feature_align_2.3} parent=5 // pred_check
      %p152 = pneg %p151
    $region22: #{feature_align_2.3} parent=5 // pred_check_branch
      %154 = sbr.rel (%p152) target = $region24
    $region23: #{feature_align_2.3} parent=5 // pred_region
      // Predicated region
      $region25: #{feature_align_2.3} parent=23 // pred_check
        %p155 = pneg %p30
      $region26: #{feature_align_2.3} parent=23 // pred_check_branch
        %157 = sbr.rel (%p155) target = $region28
      $region27: #{feature_align_2.3} parent=23 // pred_region
        %p158 = scmp.lt.s32.totalorder %s10, 1
        %s159 = scalar_select %p158, %s10, 1
        %s160 = smul.addr %s159, 72
        %s161 = smul.addr %s160, 4
        %s162 = scalar_lea.vmem %s0, %s161
      $region28: #{feature_align_2.3} parent=23 // pred_fallthru
        _
      // Predicated region
      $region29: #{feature_align_2.3} parent=23 // pred_check
        %p163 = pneg %p56
      $region30: #{feature_align_2.3} parent=23 // pred_check_branch
        %165 = sbr.rel (%p163) target = $region32
      $region31: #{feature_align_2.3} parent=23 // pred_region
        %p166 = scmp.lt.s32.totalorder %s10, 1
        %s167 = scalar_select %p166, %s10, 1
        %s168 = smul.addr %s167, 8
        %s169 = smul.addr %s168, 8
        %s170 = scalar_lea.vmem %s1, %s169
      $region32: #{feature_align_2.3} parent=23 // pred_fallthru
        _
    $region24: #{feature_align_2.3} parent=5 // pred_fallthru
      _
    %p171 = scmp.le.s32.totalorder 1, %s10
    %p172 = scmp.lt.s32.totalorder %s10, 3
    %p173 = pnand %p171, %p172
    %p174 = pneg %p173
    // Predicated region
    $region33: #{feature_align_2.3} parent=5 // pred_check
      _
    $region34: #{feature_align_2.3} parent=5 // pred_check_branch
      %176 = sbr.rel (%p173) target = $region36
    $region35: #{feature_align_2.3} parent=5 // pred_region
      %s177 = ssub.s32 %s10, 1
      %p178 = scmp.lt.s32.totalorder %s15, 1
      %s179 = scalar_select %p178, %s15, 1
      %s180 = smul.addr %s179, 72
      %s181 = smul.addr %s180, 4
      %s182 = scalar_lea.vmem %s0, %s181
      %p183 = pneg %p36
      %p184 = pneg %p33
      %p185 = scmp.lt.s32.totalorder %s15, 1
      %s186 = scalar_select %p185, %s15, 1
      %s187 = smul.addr %s186, 8
      %s188 = smul.addr %s187, 8
      %s189 = scalar_lea.vmem %s1, %s188
      %p190 = pneg %p62
      %p191 = pneg %p59
      %p192 = pneg %p83
      %p193 = pneg %p80
      %p194 = pneg %p104
      %p195 = pneg %p101
      %p196 = pneg %p130
      %p197 = pneg %p127
      %p198 = scmp.lt.s32.totalorder %s15, 1
      %s199 = scalar_select %p198, %s15, 1
      %s200 = smul.addr %s199, 8
      %s201 = smul.addr %s200, 8
      %s202 = scalar_lea.vmem %s4, %s201
      %p203 = scmp.lt.s32.totalorder %s15, 1
      %s204 = scalar_select %p203, %s15, 1
      %s205 = smul.addr %s204, 72
      %s206 = smul.addr %s205, 4
      %s207 = scalar_lea.vmem %s0, %s206
      %p208 = scmp.lt.s32.totalorder %s15, 1
      %s209 = scalar_select %p208, %s15, 1
      %s210 = smul.addr %s209, 8
      %s211 = smul.addr %s210, 8
      %s212 = scalar_lea.vmem %s1, %s211
      %p213 = scmp.lt.s32.totalorder %s15, 1
      %s214 = scalar_select %p213, %s15, 1
      %s215 = smul.addr %s214, 8
      %s216 = smul.addr %s215, 8
      %s217 = scalar_lea.vmem %s4, %s216
      %v219 = vld [vmem:[%s2] sm:$0xff]
      %v220 = vld [vmem:[%s2 + $0x8] sm:$0xf]
      %v221 = vld [vmem:[%s2 + $0xc] sm:$0xff]
      %v222 = vld [vmem:[%s2 + $0x14] sm:$0xf]
      %v223 = vld [vmem:[%s2 + $0x18] sm:$0xff]
      %v224 = vld [vmem:[%s2 + $0x20] sm:$0xf]
      %v225 = vld [vmem:[%s2 + $0x24] sm:$0xff]
      %v226 = vld [vmem:[%s2 + $0x2c] sm:$0xf]
      %v227 = vld [vmem:[%s207] sm:$0xff]
      %v228 = vld [vmem:[%s207 + $0x8] sm:$0xff]
      %v229 = vld [vmem:[%s207 + $0x10] sm:$0xff]
      %v230 = vld [vmem:[%s207 + $0x18] sm:$0xff]
      %v231 = vld [vmem:[%s207 + $0x20] sm:$0xff]
      %v232 = vld [vmem:[%s207 + $0x28] sm:$0xff]
      %v233 = vld [vmem:[%s207 + $0x30] sm:$0xff]
      %v234 = vld [vmem:[%s207 + $0x38] sm:$0xff]
      %v235 = vld [vmem:[%s207 + $0x40] sm:$0xff]
      %v236 = vld [vmem:[%s207 + $0x48] sm:$0xff]
      %v237 = vld [vmem:[%s207 + $0x50] sm:$0xff]
      %v238 = vld [vmem:[%s207 + $0x58] sm:$0xff]
      %v239 = vld [vmem:[%s207 + $0x60] sm:$0xff]
      %v240 = vld [vmem:[%s207 + $0x68] sm:$0xff]
      %v241 = vld [vmem:[%s207 + $0x70] sm:$0xff]
      %v242 = vld [vmem:[%s207 + $0x78] sm:$0xff]
      %v243 = vld [vmem:[%s207 + $0x80] sm:$0xff]
      %v244 = vld [vmem:[%s207 + $0x88] sm:$0xff]
      %v245 = vld [vmem:[%s207 + $0x90] sm:$0xff]
      %v246 = vld [vmem:[%s207 + $0x98] sm:$0xff]
      %v247 = vld [vmem:[%s207 + $0xa0] sm:$0xff]
      %v248 = vld [vmem:[%s207 + $0xa8] sm:$0xff]
      %v249 = vld [vmem:[%s207 + $0xb0] sm:$0xff]
      %v250 = vld [vmem:[%s207 + $0xb8] sm:$0xff]
      %v251 = vld [vmem:[%s207 + $0xc0] sm:$0xff]
      %v252 = vld [vmem:[%s207 + $0xc8] sm:$0xff]
      %v253 = vld [vmem:[%s207 + $0xd0] sm:$0xff]
      %v254 = vld [vmem:[%s207 + $0xd8] sm:$0xff]
      %v255 = vld [vmem:[%s207 + $0xe0] sm:$0xff]
      %v256 = vld [vmem:[%s207 + $0xe8] sm:$0xff]
      %v257 = vld [vmem:[%s207 + $0xf0] sm:$0xff]
      %v258 = vld [vmem:[%s207 + $0xf8] sm:$0xff]
      %v259 = vld [vmem:[%s207 + $0x100] sm:$0xff]
      %v260 = vld [vmem:[%s207 + $0x108] sm:$0xff]
      %v261 = vld [vmem:[%s207 + $0x110] sm:$0xff]
      %v262 = vld [vmem:[%s207 + $0x118] sm:$0xff]
      %v263 = vld [vmem:[%s3] sm:$0xff]
      %v264 = vld [vmem:[%s3 + $0x8] sm:$0xff]
      %v265 = vld [vmem:[%s3 + $0x10] sm:$0xff]
      %v266 = vld [vmem:[%s3 + $0x18] sm:$0xff]
      %268 = vset.pattern.permute.xlu0 0
      %269 = vperm.xlu0 %268, %v263
      %v270 = vpop.permute.xlu0 %269
      %273 = vset.pattern.permute.xlu0 0
      %274 = vperm.xlu0 %273, %v264
      %v275 = vpop.permute.xlu0 %274
      %278 = vset.pattern.permute.xlu0 0
      %279 = vperm.xlu0 %278, %v265
      %v280 = vpop.permute.xlu0 %279
      %283 = vset.pattern.permute.xlu0 0
      %284 = vperm.xlu0 %283, %v266
      %v285 = vpop.permute.xlu0 %284
      %v295 = vunpack.c.l.b16 %v219
      %v296 = vunpack.c.h.b16 %v219
      %v297 = vunpack.c.l.b16 %v220
      %v298 = vunpack.c.l.b16 %v221
      %v299 = vunpack.c.h.b16 %v221
      %v300 = vunpack.c.l.b16 %v222
      %v301 = vunpack.c.l.b16 %v223
      %v302 = vunpack.c.h.b16 %v223
      %v303 = vunpack.c.l.b16 %v224
      %v304 = vunpack.c.l.b16 %v225
      %v305 = vunpack.c.h.b16 %v225
      %v306 = vunpack.c.l.b16 %v226
      %v307 = vpack.c.b16 %v298, %v295
      %v308 = vpack.c.b16 %v299, %v296
      %v309 = vpack.c.b16 %v300, %v297
      %v310 = vpack.c.b16 %v304, %v301
      %v311 = vpack.c.b16 %v305, %v302
      %v312 = vpack.c.b16 %v306, %v303
      %v353 = vunpack.c.l.b16 %v227
      %v354 = vunpack.c.h.b16 %v227
      %v355 = vunpack.c.l.b16 %v228
      %v356 = vunpack.c.h.b16 %v228
      %v357 = vunpack.c.l.b16 %v229
      %v358 = vunpack.c.h.b16 %v229
      %v359 = vunpack.c.l.b16 %v230
      %v360 = vunpack.c.h.b16 %v230
      %v361 = vunpack.c.l.b16 %v231
      %v362 = vunpack.c.h.b16 %v231
      %v363 = vunpack.c.l.b16 %v232
      %v364 = vunpack.c.h.b16 %v232
      %v365 = vunpack.c.l.b16 %v233
      %v366 = vunpack.c.h.b16 %v233
      %v367 = vunpack.c.l.b16 %v234
      %v368 = vunpack.c.h.b16 %v234
      %v369 = vunpack.c.l.b16 %v235
      %v370 = vunpack.c.h.b16 %v235
      %v371 = vunpack.c.l.b16 %v236
      %v372 = vunpack.c.h.b16 %v236
      %v373 = vunpack.c.l.b16 %v237
      %v374 = vunpack.c.h.b16 %v237
      %v375 = vunpack.c.l.b16 %v238
      %v376 = vunpack.c.h.b16 %v238
      %v377 = vunpack.c.l.b16 %v239
      %v378 = vunpack.c.h.b16 %v239
      %v379 = vunpack.c.l.b16 %v240
      %v380 = vunpack.c.h.b16 %v240
      %v381 = vunpack.c.l.b16 %v241
      %v382 = vunpack.c.h.b16 %v241
      %v383 = vunpack.c.l.b16 %v242
      %v384 = vunpack.c.h.b16 %v242
      %v385 = vunpack.c.l.b16 %v243
      %v386 = vunpack.c.h.b16 %v243
      %v387 = vunpack.c.l.b16 %v244
      %v388 = vunpack.c.h.b16 %v244
      %v389 = vunpack.c.l.b16 %v245
      %v390 = vunpack.c.h.b16 %v245
      %v391 = vunpack.c.l.b16 %v246
      %v392 = vunpack.c.h.b16 %v246
      %v393 = vunpack.c.l.b16 %v247
      %v394 = vunpack.c.h.b16 %v247
      %v395 = vunpack.c.l.b16 %v248
      %v396 = vunpack.c.h.b16 %v248
      %v397 = vunpack.c.l.b16 %v249
      %v398 = vunpack.c.h.b16 %v249
      %v399 = vunpack.c.l.b16 %v250
      %v400 = vunpack.c.h.b16 %v250
      %v401 = vunpack.c.l.b16 %v251
      %v402 = vunpack.c.h.b16 %v251
      %v403 = vunpack.c.l.b16 %v252
      %v404 = vunpack.c.h.b16 %v252
      %v405 = vunpack.c.l.b16 %v253
      %v406 = vunpack.c.h.b16 %v253
      %v407 = vunpack.c.l.b16 %v254
      %v408 = vunpack.c.h.b16 %v254
      %v409 = vunpack.c.l.b16 %v255
      %v410 = vunpack.c.h.b16 %v255
      %v411 = vunpack.c.l.b16 %v256
      %v412 = vunpack.c.h.b16 %v256
      %v413 = vunpack.c.l.b16 %v257
      %v414 = vunpack.c.h.b16 %v257
      %v415 = vunpack.c.l.b16 %v258
      %v416 = vunpack.c.h.b16 %v258
      %v417 = vunpack.c.l.b16 %v259
      %v418 = vunpack.c.h.b16 %v259
      %v419 = vunpack.c.l.b16 %v260
      %v420 = vunpack.c.h.b16 %v260
      %v421 = vunpack.c.l.b16 %v261
      %v422 = vunpack.c.h.b16 %v261
      %v423 = vunpack.c.l.b16 %v262
      %v424 = vunpack.c.h.b16 %v262
      %v425 = vpack.c.b16 %v355, %v353
      %v426 = vpack.c.b16 %v356, %v354
      %v427 = vpack.c.b16 %v359, %v357
      %v428 = vpack.c.b16 %v360, %v358
      %v429 = vpack.c.b16 %v363, %v361
      %v430 = vpack.c.b16 %v364, %v362
      %v431 = vpack.c.b16 %v367, %v365
      %v432 = vpack.c.b16 %v368, %v366
      %v433 = vpack.c.b16 %v371, %v369
      %v434 = vpack.c.b16 %v372, %v370
      %v435 = vpack.c.b16 %v375, %v373
      %v436 = vpack.c.b16 %v376, %v374
      %v437 = vpack.c.b16 %v379, %v377
      %v438 = vpack.c.b16 %v380, %v378
      %v439 = vpack.c.b16 %v383, %v381
      %v440 = vpack.c.b16 %v384, %v382
      %v441 = vpack.c.b16 %v387, %v385
      %v442 = vpack.c.b16 %v388, %v386
      %v443 = vpack.c.b16 %v391, %v389
      %v444 = vpack.c.b16 %v392, %v390
      %v445 = vpack.c.b16 %v395, %v393
      %v446 = vpack.c.b16 %v396, %v394
      %v447 = vpack.c.b16 %v399, %v397
      %v448 = vpack.c.b16 %v400, %v398
      %v449 = vpack.c.b16 %v403, %v401
      %v450 = vpack.c.b16 %v404, %v402
      %v451 = vpack.c.b16 %v407, %v405
      %v452 = vpack.c.b16 %v408, %v406
      %v453 = vpack.c.b16 %v411, %v409
      %v454 = vpack.c.b16 %v412, %v410
      %v455 = vpack.c.b16 %v415, %v413
      %v456 = vpack.c.b16 %v416, %v414
      %v457 = vpack.c.b16 %v419, %v417
      %v458 = vpack.c.b16 %v420, %v418
      %v459 = vpack.c.b16 %v423, %v421
      %v460 = vpack.c.b16 %v424, %v422
      %vm497 = vcmask 261120
      %v499 = vsel %vm497, %v309, 0
      %v502 = vsel %vm497, %v312, 0
      %504 = vmatprep.subr.bf16.mxu0 %v426
      %505 = vmatpush1.bf16.msra.mxu0 %v425
      %506 = vmatprep.subr.bf16.mxu0 %v428
      %507 = vmatpush1.bf16.msra.mxu0 %v427
      %508 = vmatprep.subr.bf16.mxu0 %v430
      %509 = vmatpush1.bf16.msra.mxu0 %v429
      %510 = vmatprep.subr.bf16.mxu0 %v432
      %511 = vmatpush1.bf16.msra.mxu0 %v431
      %512 = vmatprep.subr.bf16.mxu0 %v434
      %513 = vmatpush1.bf16.msra.mxu0 %v433
      %514 = vmatprep.subr.bf16.mxu0 %v436
      %515 = vmatpush1.bf16.msra.mxu0 %v435
      %516 = vmatprep.subr.bf16.mxu0 %v438
      %517 = vmatpush1.bf16.msra.mxu0 %v437
      %518 = vmatprep.subr.bf16.mxu0 %v440
      %519 = vmatpush1.bf16.msra.mxu0 %v439
      %520 = vmatprep.subr.bf16.mxu0 %v442
      %521 = vmatpush1.bf16.msra.mxu0 %v441
      %522 = vmatprep.subr.bf16.mxu0 %v444
      %523 = vmatpush1.bf16.msra.mxu0 %v443
      %524 = vmatprep.subr.bf16.mxu0 %v446
      %525 = vmatpush1.bf16.msra.mxu0 %v445
      %526 = vmatprep.subr.bf16.mxu0 %v448
      %527 = vmatpush1.bf16.msra.mxu0 %v447
      %528 = vmatprep.subr.bf16.mxu0 %v450
      %529 = vmatpush1.bf16.msra.mxu0 %v449
      %530 = vmatprep.subr.bf16.mxu0 %v452
      %531 = vmatpush1.bf16.msra.mxu0 %v451
      %532 = vmatprep.subr.bf16.mxu0 %v454
      %533 = vmatpush1.bf16.msra.mxu0 %v453
      %534 = vmatprep.subr.bf16.mxu0 %v456
      %535 = vmatpush1.bf16.msra.mxu0 %v455
      %536 = vmatprep.mubr.bf16.mxu0 %v308
      %537 = vmatmul.mubr.bf16.gmra.mrb[0].mxu0 %v307
      %v538 = vpop.f32.mrb[0].mxu0
      %v539 = vadd.f32 %v270, %v538
      %v540 = vpop.f32.mrb[0].mxu0
      %v541 = vadd.f32 %v270, %v540
      %v542 = vpop.f32.mrb[0].mxu0
      %v543 = vadd.f32 %v275, %v542
      %v544 = vpop.f32.mrb[0].mxu0
      %v545 = vadd.f32 %v275, %v544
      %546 = vmatprep.mubr.bf16.mxu0 %v311
      %547 = vmatmul.mubr.bf16.gmra.mrb[0].mxu0 %v310
      %v548 = vpop.f32.mrb[0].mxu0
      %v549 = vadd.f32 %v280, %v548
      %v550 = vpop.f32.mrb[0].mxu0
      %v551 = vadd.f32 %v280, %v550
      %v552 = vpop.f32.mrb[0].mxu0
      %v553 = vadd.f32 %v285, %v552
      %v554 = vpop.f32.mrb[0].mxu0
      %v555 = vadd.f32 %v285, %v554
      %556 = vdwg.mxu0
      %557 = vmatprep.subr.bf16.mxu0 %v458
      %558 = vmatpush1.bf16.msra.mxu0 %v457
      %559 = vmatprep.subr.bf16.mxu0 %v460
      %560 = vmatpush1.bf16.msra.mxu0 %v459
      %561 = vmatprep.subr.bf16.mxu0 0
      %562 = vmatpush1.bf16.msra.mxu0 0
      %563 = vmatprep.subr.bf16.mxu0 0
      %564 = vmatpush1.bf16.msra.mxu0 0
      %565 = vmatprep.subr.bf16.mxu0 0
      %566 = vmatpush1.bf16.msra.mxu0 0
      %567 = vmatprep.subr.bf16.mxu0 0
      %568 = vmatpush1.bf16.msra.mxu0 0
      %569 = vmatprep.subr.bf16.mxu0 0
      %570 = vmatpush1.bf16.msra.mxu0 0
      %571 = vmatprep.subr.bf16.mxu0 0
      %572 = vmatpush1.bf16.msra.mxu0 0
      %573 = vmatprep.subr.bf16.mxu0 0
      %574 = vmatpush1.bf16.msra.mxu0 0
      %575 = vmatprep.subr.bf16.mxu0 0
      %576 = vmatpush1.bf16.msra.mxu0 0
      %577 = vmatprep.subr.bf16.mxu0 0
      %578 = vmatpush1.bf16.msra.mxu0 0
      %579 = vmatprep.subr.bf16.mxu0 0
      %580 = vmatpush1.bf16.msra.mxu0 0
      %581 = vmatprep.subr.bf16.mxu0 0
      %582 = vmatpush1.bf16.msra.mxu0 0
      %583 = vmatprep.subr.bf16.mxu0 0
      %584 = vmatpush1.bf16.msra.mxu0 0
      %585 = vmatprep.subr.bf16.mxu0 0
      %586 = vmatpush1.bf16.msra.mxu0 0
      %587 = vmatprep.subr.bf16.mxu0 0
      %588 = vmatpush1.bf16.msra.mxu0 0
      %589 = vmatprep.mubr.bf16.mxu0 0
      %590 = vmatmul.mubr.bf16.gmra.mrb[0].mxu0 %v499
      %v591 = vpop.f32.mrb[0].mxu0
      %v592 = vadd.f32 %v539, %v591
      %v593 = vpop.f32.mrb[0].mxu0
      %v594 = vadd.f32 %v541, %v593
      %v595 = vpop.f32.mrb[0].mxu0
      %v596 = vadd.f32 %v543, %v595
      %v597 = vpop.f32.mrb[0].mxu0
      %v598 = vadd.f32 %v545, %v597
      %599 = vmatprep.mubr.bf16.mxu0 0
      %600 = vmatmul.mubr.bf16.gmra.mrb[0].mxu0 %v502
      %v601 = vpop.f32.mrb[0].mxu0
      %v602 = vadd.f32 %v549, %v601
      %v603 = vpop.f32.mrb[0].mxu0
      %v604 = vadd.f32 %v551, %v603
      %v605 = vpop.f32.mrb[0].mxu0
      %v606 = vadd.f32 %v553, %v605
      %v607 = vpop.f32.mrb[0].mxu0
      %v608 = vadd.f32 %v555, %v607
      %609 = vdwg.mxu0
      %v610 = vmax.f32 %v592, 0.0
      %v611 = vmax.f32 %v594, 0.0
      %v612 = vmax.f32 %v596, 0.0
      %v613 = vmax.f32 %v598, 0.0
      %v614 = vmax.f32 %v602, 0.0
      %v615 = vmax.f32 %v604, 0.0
      %v616 = vmax.f32 %v606, 0.0
      %v617 = vmax.f32 %v608, 0.0
      %v618 = vld [vmem:[%s212] sm:$0xff]
      %v619 = vld [vmem:[%s212 + $0x8] sm:$0xff]
      %v620 = vld [vmem:[%s212 + $0x10] sm:$0xff]
      %v621 = vld [vmem:[%s212 + $0x18] sm:$0xff]
      %v622 = vld [vmem:[%s212 + $0x20] sm:$0xff]
      %v623 = vld [vmem:[%s212 + $0x28] sm:$0xff]
      %v624 = vld [vmem:[%s212 + $0x30] sm:$0xff]
      %v625 = vld [vmem:[%s212 + $0x38] sm:$0xff]
      %v626 = vadd.f32 %v610, %v618
      %v627 = vadd.f32 %v611, %v619
      %v628 = vadd.f32 %v612, %v620
      %v629 = vadd.f32 %v613, %v621
      %v630 = vadd.f32 %v614, %v622
      %v631 = vadd.f32 %v615, %v623
      %v632 = vadd.f32 %v616, %v624
      %v633 = vadd.f32 %v617, %v625
      %634 = vst [vmem:[%s217] sm:$0xff] %v626
      %635 = vst [vmem:[%s217 + $0x8] sm:$0xff] %v627
      %636 = vst [vmem:[%s217 + $0x10] sm:$0xff] %v628
      %637 = vst [vmem:[%s217 + $0x18] sm:$0xff] %v629
      %638 = vst [vmem:[%s217 + $0x20] sm:$0xff] %v630
      %639 = vst [vmem:[%s217 + $0x28] sm:$0xff] %v631
      %640 = vst [vmem:[%s217 + $0x30] sm:$0xff] %v632
      %641 = vst [vmem:[%s217 + $0x38] sm:$0xff] %v633
      %p642 = scmp.lt.s32.totalorder %s15, 1
      %s643 = scalar_select %p642, %s15, 1
      %s644 = smul.addr %s643, 8
      %s645 = smul.addr %s644, 8
      %s646 = scalar_lea.vmem %s4, %s645
      // Predicated region
      $region37: #{feature_align_2.3} parent=35 // pred_check
        %p647 = pneg %p127
      $region38: #{feature_align_2.3} parent=35 // pred_check_branch
        %649 = sbr.rel (%p647) target = $region40
      $region39: #{feature_align_2.3} parent=35 // pred_region
        _
      $region40: #{feature_align_2.3} parent=35 // pred_fallthru
        _
    $region36: #{feature_align_2.3} parent=5 // pred_fallthru
      _
    %p650 = scmp.le.s32.totalorder 2, %s10
    // Predicated region
    $region41: #{feature_align_2.3} parent=5 // pred_check
      %p651 = pneg %p650
    $region42: #{feature_align_2.3} parent=5 // pred_check_branch
      %653 = sbr.rel (%p651) target = $region44
    $region43: #{feature_align_2.3} parent=5 // pred_region
      %s654 = ssub.s32 %s10, 2
      // Predicated region
      $region45: #{feature_align_2.3} parent=43 // pred_check
        %p655 = pneg %p133
      $region46: #{feature_align_2.3} parent=43 // pred_check_branch
        %657 = sbr.rel (%p655) target = $region48
      $region47: #{feature_align_2.3} parent=43 // pred_region
        %p658 = scmp.lt.s32.totalorder %s16, 1
        %s659 = scalar_select %p658, %s16, 1
        %s660 = smul.addr %s659, 8
        %s661 = smul.addr %s660, 8
        %s662 = scalar_lea.vmem %s4, %s661
      $region48: #{feature_align_2.3} parent=43 // pred_fallthru
        _
    $region44: #{feature_align_2.3} parent=5 // pred_fallthru
      _
  $region6: #{feature_align_2.3} parent=0 // loop_footer
    %s14 = sadd.s32 1, %s10
  $region7: #{feature_align_2.3} parent=0 // loop_footer_branch
    %9 = sbr.rel target = $region3
  $region8: #{feature_align_2.3} parent=0 // loop_exit
    _

</llo_original>
